<compile_context>
chip_gen: v7x
topology: tpu7x:2x2x1
jax: 0.10.0
libtpu: 0.0.40
codegen_flags: <defaults>
</compile_context>

<pallas_src>
import functools

import jax
import jax.numpy as jnp
from jax.experimental import pallas as pl
from jax.experimental.pallas import tpu as pltpu


# ----------------------------------------------------------------------------
# In-kernel helpers (traced inline into the fused kernel body)
# ----------------------------------------------------------------------------
def _gn_silu(v, gamma, beta, cpg, eps, gmat):
    """Two-pass GroupNorm + affine + SiLU on a (rows, C) f32 block (one sample).

    gmat is a pre-scaled same-group (C, C) matrix (entry = 1/(rows*cpg) if the two channels
    share a group, else 0), or None when cpg == 1 (each channel is its own group).
    """
    rows, _ = v.shape
    inv_cnt = 1.0 / float(rows * cpg)

    s = jnp.sum(v, axis=0, keepdims=True)                      # (1, C)
    if cpg > 1:
        mean_c = jnp.dot(s, gmat, preferred_element_type=jnp.float32)
    else:
        mean_c = s * inv_cnt
    d = v - mean_c
    s2 = jnp.sum(d * d, axis=0, keepdims=True)                 # centered second moment sums
    if cpg > 1:
        var_c = jnp.dot(s2, gmat, preferred_element_type=jnp.float32)
    else:
        var_c = s2 * inv_cnt
    y = d * jax.lax.rsqrt(var_c + eps) * gamma + beta
    return y * jax.nn.sigmoid(y)                               # SiLU


def _conv3x3_big_k(halo_ref, slab_ref, w_ref, c, mask_l, mask_r, hw, hwe, width, base):
    """3x3 'same' conv as 3 big-K bf16 MXU dots over a zero-haloed flat (rows, c) buffer.

    Slab column block dy holds halo rows [base + dy*width, base + dy*width + hwe); the dot
    for tap column dx then reads the contiguous slab row-slice [dx, dx + hw) across all
    3*c columns against weights ordered (dx, dy, cin). mask_l / mask_r zero the flat-layout
    wrap-around of the dx=0 / dx=2 taps at columns 0 / width-1 (applied post-dot, per dx).
    """
    for dy in range(3):
        slab_ref[:, dy * c:(dy + 1) * c] = halo_ref[pl.ds(base + dy * width, hwe), :]
    acc = None
    for dx in range(3):
        part = jnp.dot(slab_ref[pl.ds(dx, hw), :],
                       w_ref[pl.ds(dx * 3 * c, 3 * c), :],
                       preferred_element_type=jnp.float32)     # bf16 x bf16 -> f32
        if dx == 0:
            part = part * mask_l
        elif dx == 2:
            part = part * mask_r
        acc = part if acc is None else acc + part
    return acc


# ----------------------------------------------------------------------------
# ResBlock forward: one fused pallas_call, grid = (N,)
# ----------------------------------------------------------------------------
def res_block_forward(x_nchw, emb, params, *, groups=32, eps=1e-5):
    N, Cin, H, W = x_nchw.shape
    Cout = params["conv1_w"].shape[-1]
    EMB = emb.shape[-1]
    HW = H * W
    assert Cin % groups == 0 and Cout % groups == 0
    cpg1, cpg2 = Cin // groups, Cout // groups
    has_skip = Cin != Cout

    # Flat, H-only zero halo for the in-kernel 3x3 convs (16-row aligned for bf16 tiles).
    PAD = ((W + 1 + 15) // 16) * 16      # top halo rows
    BASE = PAD - W - 1                   # tap slice base offset
    HWE = ((HW + 2 + 15) // 16) * 16     # rows copied per slab column block (>= HW + 2)
    BUF = PAD + HWE + W                  # top halo + image + bottom halo (all reads in-bounds)

    x_flat = jnp.transpose(x_nchw, (0, 2, 3, 1)).reshape(N, HW, Cin).astype(jnp.float32)

    # emb_layers hoisted to XLA: SiLU(emb) @ W + b, one batched matmul for all N.
    e = emb.astype(jnp.float32)
    e = e * jax.nn.sigmoid(e)
    emb_proj = (e @ params["emb_w"].reshape(EMB, Cout)
                + params["emb_b"].reshape(1, Cout)).reshape(N, 1, Cout)

    g1 = params["gamma1"].reshape(1, Cin).astype(jnp.float32)
    b1 = params["beta1"].reshape(1, Cin).astype(jnp.float32)
    # Conv weights (dy, dx, cin, cout) -> (dx, dy, cin, cout) -> (9*cin, cout), bf16 operands.
    w1 = jnp.transpose(params["conv1_w"], (1, 0, 2, 3)).reshape(9 * Cin, Cout).astype(jnp.bfloat16)
    c1b = params["conv1_b"].reshape(1, Cout).astype(jnp.float32)
    g2 = params["gamma2"].reshape(1, Cout).astype(jnp.float32)
    b2 = params["beta2"].reshape(1, Cout).astype(jnp.float32)
    w2 = jnp.transpose(params["conv2_w"], (1, 0, 2, 3)).reshape(9 * Cout, Cout).astype(jnp.bfloat16)
    c2b = params["conv2_b"].reshape(1, Cout).astype(jnp.float32)

    def group_mat(C, cpg):
        gi = jnp.arange(C, dtype=jnp.int32) // cpg
        return (gi[:, None] == gi[None, :]).astype(jnp.float32) / float(HW * cpg)

    gmat1 = group_mat(Cin, cpg1) if cpg1 > 1 else None
    gmat2 = group_mat(Cout, cpg2) if cpg2 > 1 else None
    if has_skip:
        skw = params["skip_w"].reshape(Cin, Cout).astype(jnp.bfloat16)
        skb = params["skip_b"].reshape(1, Cout).astype(jnp.float32)

    def kernel(*refs):
        it = iter(refs)
        x_ref, emb_ref = next(it), next(it)
        g1_ref, b1_ref, w1_ref, c1b_ref = next(it), next(it), next(it), next(it)
        g2_ref, b2_ref, w2_ref, c2b_ref = next(it), next(it), next(it), next(it)
        gmat1_ref = next(it) if cpg1 > 1 else None
        gmat2_ref = next(it) if cpg2 > 1 else None
        skw_ref = next(it) if has_skip else None
        skb_ref = next(it) if has_skip else None
        out_ref = next(it)
        hp1_ref, hp2_ref, slab1_ref, slab2_ref = next(it), next(it), next(it), next(it)

        # Zero only the halo rows. Scratch persists across grid steps and the interior is
        # fully overwritten each step; zeroing every step keeps the "parallel" batch axis
        # safe on multi-TensorCore parts (each core's scratch starts uninitialized).
        hp1_ref[pl.ds(0, PAD), :] = jnp.zeros((PAD, Cin), jnp.bfloat16)
        hp1_ref[pl.ds(PAD + HW, BUF - PAD - HW), :] = jnp.zeros((BUF - PAD - HW, Cin), jnp.bfloat16)
        hp2_ref[pl.ds(0, PAD), :] = jnp.zeros((PAD, Cout), jnp.bfloat16)
        hp2_ref[pl.ds(PAD + HW, BUF - PAD - HW), :] = jnp.zeros((BUF - PAD - HW, Cout), jnp.bfloat16)

        x = x_ref[0]                                             # (HW, Cin) f32

        # W-boundary wrap masks, built in-kernel (no HBM mask streams).
        col = jax.lax.broadcasted_iota(jnp.int32, (HW, 1), 0) % W
        mask_l = (col != 0).astype(jnp.float32)                  # kills dx=0 wrap at column 0
        mask_r = (col != W - 1).astype(jnp.float32)              # kills dx=2 wrap at column W-1

        # ---- in_layers: GroupNorm -> SiLU -> Conv3x3 (3 big-K bf16 MXU dots) ----
        y1 = _gn_silu(x, g1_ref[...], b1_ref[...], cpg1, eps,
                      gmat1_ref[...] if gmat1_ref is not None else None)
        hp1_ref[pl.ds(PAD, HW), :] = y1.astype(jnp.bfloat16)
        h = _conv3x3_big_k(hp1_ref, slab1_ref, w1_ref, Cin, mask_l, mask_r,
                           HW, HWE, W, BASE) + c1b_ref[...]

        # ---- emb_layers: projection precomputed in the wrapper, broadcast over spatial ----
        h = h + emb_ref[0]

        # ---- out_layers: GroupNorm -> SiLU -> Dropout -> Conv3x3 ----
        # TODO(synk): nn.Dropout treated as eval-mode identity (p=0.0 in this config).
        y2 = _gn_silu(h, g2_ref[...], b2_ref[...], cpg2, eps,
                      gmat2_ref[...] if gmat2_ref is not None else None)
        hp2_ref[pl.ds(PAD, HW), :] = y2.astype(jnp.bfloat16)
        h = _conv3x3_big_k(hp2_ref, slab2_ref, w2_ref, Cout, mask_l, mask_r,
                           HW, HWE, W, BASE) + c2b_ref[...]

        # ---- skip connection (1x1 conv when Cin != Cout) + residual add ----
        if has_skip:
            skip = jnp.dot(x.astype(jnp.bfloat16), skw_ref[...],
                           preferred_element_type=jnp.float32) + skb_ref[...]
        else:
            skip = x
        out_ref[0] = (skip + h).astype(out_ref.dtype)            # single HBM store

    def cspec(a):  # grid-invariant, full-array block (all such operands are 2D)
        return pl.BlockSpec(a.shape, lambda n: (0, 0))

    operands = [
        (x_flat, pl.BlockSpec((1, HW, Cin), lambda n: (n, 0, 0))),
        (emb_proj, pl.BlockSpec((1, 1, Cout), lambda n: (n, 0, 0))),
        (g1, cspec(g1)), (b1, cspec(b1)), (w1, cspec(w1)), (c1b, cspec(c1b)),
        (g2, cspec(g2)), (b2, cspec(b2)), (w2, cspec(w2)), (c2b, cspec(c2b)),
    ]
    if cpg1 > 1:
        operands.append((gmat1, cspec(gmat1)))
    if cpg2 > 1:
        operands.append((gmat2, cspec(gmat2)))
    if has_skip:
        operands += [(skw, cspec(skw)), (skb, cspec(skb))]
    arrays, in_specs = zip(*operands)

    # Explicit scoped-VMEM limit (v5e default is ~16 MiB); capped at 64 MiB so it is valid
    # on v7x. Raise further on v5e/v6e (128 MiB physical) for large H*W, or band-tile.
    vmem_est = (2 * HW * (Cin + Cout) * 4                       # double-buffered in/out blocks
                + BUF * (Cin + Cout) * 2                        # haloed bf16 scratch
                + HWE * 3 * (Cin + Cout) * 2                    # bf16 slabs
                + (9 * Cin + 9 * Cout + Cin) * Cout * 2         # bf16 weights
                + 6 * HW * Cout * 4)                            # f32 temporaries headroom
    vmem_limit = int(min(max(32 * 1024 * 1024, 2 * vmem_est), 64 * 1024 * 1024))

    out = pl.pallas_call(
        kernel,
        grid=(N,),
        in_specs=list(in_specs),
        out_specs=pl.BlockSpec((1, HW, Cout), lambda n: (n, 0, 0)),
        out_shape=jax.ShapeDtypeStruct((N, HW, Cout), jnp.float32),
        scratch_shapes=[pltpu.VMEM((BUF, Cin), jnp.bfloat16),
                        pltpu.VMEM((BUF, Cout), jnp.bfloat16),
                        pltpu.VMEM((HWE, 3 * Cin), jnp.bfloat16),
                        pltpu.VMEM((HWE, 3 * Cout), jnp.bfloat16)],
        compiler_params=pltpu.CompilerParams(dimension_semantics=("parallel",),
                                             vmem_limit_bytes=vmem_limit),
    )(*arrays)

    return jnp.transpose(out.reshape(N, H, W, Cout), (0, 3, 1, 2))   # NHWC -> NCHW


# ----------------------------------------------------------------------------
# Parameters and a pure-JAX reference (bf16-operand convs, so the check stays tight)
# ----------------------------------------------------------------------------
def make_params(key, cin, cout, emb_ch):
    ks = jax.random.split(key, 10)
    scale = 0.1
    return {
        "gamma1": 1.0 + scale * jax.random.normal(ks[0], (1, cin), jnp.float32),
        "beta1": scale * jax.random.normal(ks[1], (1, cin), jnp.float32),
        "conv1_w": scale * jax.random.normal(ks[2], (3, 3, cin, cout), jnp.float32),
        "conv1_b": scale * jax.random.normal(ks[3], (cout,), jnp.float32),
        "emb_w": scale * jax.random.normal(ks[4], (emb_ch, cout), jnp.float32),
        "emb_b": scale * jax.random.normal(ks[5], (cout,), jnp.float32),
        "gamma2": 1.0 + scale * jax.random.normal(ks[6], (1, cout), jnp.float32),
        "beta2": scale * jax.random.normal(ks[7], (1, cout), jnp.float32),
        # NOTE: PyTorch zero-inits this conv (zero_module); random values here so the
        # compute path is actually exercised (benchmark, not a parity check).
        "conv2_w": scale * jax.random.normal(ks[8], (3, 3, cout, cout), jnp.float32),
        "conv2_b": jnp.zeros((cout,), jnp.float32),
        "skip_w": scale * jax.random.normal(ks[9], (cin, cout), jnp.float32),
        "skip_b": jnp.zeros((cout,), jnp.float32),
    }


def _reference(x_nchw, emb, params, groups=32, eps=1e-5):
    N, Cin, H, W = x_nchw.shape
    Cout = params["conv1_w"].shape[-1]
    x = jnp.transpose(x_nchw, (0, 2, 3, 1))

    def gn_silu(v, gamma, beta):
        n, h, w, c = v.shape
        vr = v.reshape(n, h * w, groups, c // groups)
        mean = jnp.mean(vr, axis=(1, 3), keepdims=True)
        var = jnp.mean((vr - mean) ** 2, axis=(1, 3), keepdims=True)
        vn = ((vr - mean) / jnp.sqrt(var + eps)).reshape(n, h, w, c)
        y = vn * gamma.reshape(1, 1, 1, c) + beta.reshape(1, 1, 1, c)
        return y * jax.nn.sigmoid(y)

    def conv3(v, w, b):   # bf16 operands, f32 accumulation — matches the kernel's MXU dtype
        out = jax.lax.conv_general_dilated(
            v.astype(jnp.bfloat16), w.astype(jnp.bfloat16),
            window_strides=(1, 1), padding="SAME",
            dimension_numbers=("NHWC", "HWIO", "NHWC"),
            preferred_element_type=jnp.float32)
        return out + b.reshape(1, 1, 1, -1)

    h = conv3(gn_silu(x, params["gamma1"], params["beta1"]),
              params["conv1_w"], params["conv1_b"])
    e = emb * jax.nn.sigmoid(emb)
    h = h + (e @ params["emb_w"] + params["emb_b"])[:, None, None, :]
    h = conv3(gn_silu(h, params["gamma2"], params["beta2"]),
              params["conv2_w"], params["conv2_b"])
    if Cin == Cout:
        skip = x
    else:
        skip = jnp.einsum("nhwc,cd->nhwd", x.astype(jnp.bfloat16),
                          params["skip_w"].reshape(Cin, Cout).astype(jnp.bfloat16),
                          preferred_element_type=jnp.float32) \
               + params["skip_b"].reshape(1, 1, 1, Cout)
    return jnp.transpose(skip + h, (0, 3, 1, 2))


if __name__ == "__main__":
    N, Cin, H, W = 2, 32, 16, 16
    Cout, EMB = 64, 16

    key = jax.random.PRNGKey(0)
    kx, ke, kp = jax.random.split(key, 3)
    x = jax.random.normal(kx, (N, Cin, H, W), jnp.float32)      # NCHW like PyTorch
    emb = jax.random.normal(ke, (N, EMB), jnp.float32)
    params = make_params(kp, Cin, Cout, EMB)

    fwd = jax.jit(functools.partial(res_block_forward, groups=32))
    out = jax.block_until_ready(fwd(x, emb, params))
    assert out.shape == (N, Cout, H, W) and out.dtype == jnp.float32

    # Baseline for bf16 MXU operands with f32 accumulation (reference uses the same operand
    # dtype, so the remaining delta is summation order / tie-breaking rounding only).
    ref = _reference(x, emb, params, groups=32)
    err = float(jnp.max(jnp.abs(out - ref)))
    scale = float(jnp.max(jnp.abs(ref)))
    assert err <= 1e-2 + 1e-2 * scale, \
        f"kernel/reference mismatch: max abs err = {err} (ref max = {scale})"
    print("KERNEL_OK")
</pallas_src>

<mosaic_0001>
module attributes {stable_mosaic.version = 11 : i64} {
  func.func @kernel(%arg0: i32, %arg1: memref<1x256x32xf32, #tpu.memory_space<vmem>>, %arg2: memref<1x1x64xf32, #tpu.memory_space<vmem>>, %arg3: memref<1x32xf32, #tpu.memory_space<vmem>>, %arg4: memref<1x32xf32, #tpu.memory_space<vmem>>, %arg5: memref<288x64xbf16, #tpu.memory_space<vmem>>, %arg6: memref<1x64xf32, #tpu.memory_space<vmem>>, %arg7: memref<1x64xf32, #tpu.memory_space<vmem>>, %arg8: memref<1x64xf32, #tpu.memory_space<vmem>>, %arg9: memref<576x64xbf16, #tpu.memory_space<vmem>>, %arg10: memref<1x64xf32, #tpu.memory_space<vmem>>, %arg11: memref<64x64xf32, #tpu.memory_space<vmem>>, %arg12: memref<32x64xbf16, #tpu.memory_space<vmem>>, %arg13: memref<1x64xf32, #tpu.memory_space<vmem>>, %arg14: memref<1x256x64xf32, #tpu.memory_space<vmem>>, %arg15: memref<320x32xbf16, #tpu.memory_space<vmem>>, %arg16: memref<320x64xbf16, #tpu.memory_space<vmem>>, %arg17: memref<272x96xbf16, #tpu.memory_space<vmem>>, %arg18: memref<272x192xbf16, #tpu.memory_space<vmem>>) attributes {dimension_semantics = [#tpu.dimension_semantics<parallel>], iteration_bounds = array<i64: 2>, scalar_prefetch = 0 : i64, scratch_operands = 4 : i64, tpu.core_type = #tpu.core_type<tc>, window_params = [{transform_indices = @transform_0, window_bounds = array<i64: 1, 256, 32>}, {transform_indices = @transform_1, window_bounds = array<i64: 1, 1, 64>}, {pipeline_mode = #tpu.pipeline_mode<synchronous>, transform_indices = @transform_2, window_bounds = array<i64: 1, 32>}, {pipeline_mode = #tpu.pipeline_mode<synchronous>, transform_indices = @transform_3, window_bounds = array<i64: 1, 32>}, {pipeline_mode = #tpu.pipeline_mode<synchronous>, transform_indices = @transform_4, window_bounds = array<i64: 288, 64>}, {pipeline_mode = #tpu.pipeline_mode<synchronous>, transform_indices = @transform_5, window_bounds = array<i64: 1, 64>}, {pipeline_mode = #tpu.pipeline_mode<synchronous>, transform_indices = @transform_6, window_bounds = array<i64: 1, 64>}, {pipeline_mode = #tpu.pipeline_mode<synchronous>, transform_indices = @transform_7, window_bounds = array<i64: 1, 64>}, {pipeline_mode = #tpu.pipeline_mode<synchronous>, transform_indices = @transform_8, window_bounds = array<i64: 576, 64>}, {pipeline_mode = #tpu.pipeline_mode<synchronous>, transform_indices = @transform_9, window_bounds = array<i64: 1, 64>}, {pipeline_mode = #tpu.pipeline_mode<synchronous>, transform_indices = @transform_10, window_bounds = array<i64: 64, 64>}, {pipeline_mode = #tpu.pipeline_mode<synchronous>, transform_indices = @transform_11, window_bounds = array<i64: 32, 64>}, {pipeline_mode = #tpu.pipeline_mode<synchronous>, transform_indices = @transform_12, window_bounds = array<i64: 1, 64>}, {transform_indices = @transform_13, window_bounds = array<i64: 1, 256, 64>}]} {
    %cst = arith.constant 0.000000e+00 : bf16
    %0 = vector.broadcast %cst : bf16 to vector<32x32xbf16>
    %c0 = arith.constant 0 : index
    %c0_0 = arith.constant 0 : index
    %1 = vector.load %arg15[%c0, %c0_0] : memref<320x32xbf16, #tpu.memory_space<vmem>>, vector<32x32xbf16>
    tpu.vector_store %arg15[%c0, %c0_0], %0 {strides = array<i32>} : memref<320x32xbf16, #tpu.memory_space<vmem>>, vector<32x32xbf16>,
    %cst_1 = arith.constant 0.000000e+00 : bf16
    %2 = vector.broadcast %cst_1 : bf16 to vector<32x32xbf16>
    %c288 = arith.constant 288 : index
    %c0_2 = arith.constant 0 : index
    %3 = vector.load %arg15[%c288, %c0_2] : memref<320x32xbf16, #tpu.memory_space<vmem>>, vector<32x32xbf16>
    tpu.vector_store %arg15[%c288, %c0_2], %2 {strides = array<i32>} : memref<320x32xbf16, #tpu.memory_space<vmem>>, vector<32x32xbf16>,
    %cst_3 = arith.constant 0.000000e+00 : bf16
    %4 = vector.broadcast %cst_3 : bf16 to vector<32x64xbf16>
    %c0_4 = arith.constant 0 : index
    %c0_5 = arith.constant 0 : index
    %5 = vector.load %arg16[%c0_4, %c0_5] : memref<320x64xbf16, #tpu.memory_space<vmem>>, vector<32x64xbf16>
    tpu.vector_store %arg16[%c0_4, %c0_5], %4 {strides = array<i32>} : memref<320x64xbf16, #tpu.memory_space<vmem>>, vector<32x64xbf16>,
    %cst_6 = arith.constant 0.000000e+00 : bf16
    %6 = vector.broadcast %cst_6 : bf16 to vector<32x64xbf16>
    %c288_7 = arith.constant 288 : index
    %c0_8 = arith.constant 0 : index
    %7 = vector.load %arg16[%c288_7, %c0_8] : memref<320x64xbf16, #tpu.memory_space<vmem>>, vector<32x64xbf16>
    tpu.vector_store %arg16[%c288_7, %c0_8], %6 {strides = array<i32>} : memref<320x64xbf16, #tpu.memory_space<vmem>>, vector<32x64xbf16>,
    %c0_9 = arith.constant 0 : index
    %c0_10 = arith.constant 0 : index
    %c0_11 = arith.constant 0 : index
    %8 = vector.load %arg1[%c0_9, %c0_10, %c0_11] : memref<1x256x32xf32, #tpu.memory_space<vmem>>, vector<1x256x32xf32>
    %9 = vector.shape_cast %8 : vector<1x256x32xf32> to vector<256x32xf32>
    %10 = tpu.iota {dimensions = array<i32: 0>} : vector<256x1xi32>
    %c16_i32 = arith.constant 16 : i32
    %c0_i32 = arith.constant 0 : i32
    %11 = arith.cmpi eq, %c16_i32, %c0_i32 : i32
    %c1_i32 = arith.constant 1 : i32
    %12 = arith.select %11, %c1_i32, %c16_i32 : i32
    %13 = vector.broadcast %12 : i32 to vector<256x1xi32>
    %14 = arith.remsi %10, %13 : vector<256x1xi32>
    %c0_i32_12 = arith.constant 0 : i32
    %15 = vector.broadcast %c0_i32_12 : i32 to vector<256x1xi32>
    %16 = arith.cmpi ne, %14, %15 : vector<256x1xi32>
    %c0_i32_13 = arith.constant 0 : i32
    %17 = vector.broadcast %c0_i32_13 : i32 to vector<256x1xi32>
    %18 = arith.cmpi slt, %14, %17 : vector<256x1xi32>
    %c0_i32_14 = arith.constant 0 : i32
    %19 = arith.cmpi slt, %12, %c0_i32_14 : i32
    %20 = vector.broadcast %19 : i1 to vector<256x1xi1>
    %21 = vector.broadcast %20 : vector<256x1xi1> to vector<256x1xi1>
    %22 = arith.xori %18, %21 : vector<256x1xi1>
    %23 = arith.andi %22, %16 : vector<256x1xi1>
    %24 = vector.broadcast %12 : i32 to vector<256x1xi32>
    %25 = arith.addi %14, %24 : vector<256x1xi32>
    %26 = arith.select %23, %25, %14 : vector<256x1xi1>, vector<256x1xi32>
    %c0_i32_15 = arith.constant 0 : i32
    %27 = vector.broadcast %c0_i32_15 : i32 to vector<256x1xi32>
    %28 = arith.cmpi ne, %26, %27 : vector<256x1xi32>
    %29 = arith.extui %28 : vector<256x1xi1> to vector<256x1xi32>
    %30 = arith.sitofp %29 : vector<256x1xi32> to vector<256x1xf32>
    %c15_i32 = arith.constant 15 : i32
    %31 = vector.broadcast %c15_i32 : i32 to vector<256x1xi32>
    %32 = arith.cmpi ne, %26, %31 : vector<256x1xi32>
    %33 = arith.extui %32 : vector<256x1xi1> to vector<256x1xi32>
    %34 = arith.sitofp %33 : vector<256x1xi32> to vector<256x1xf32>
    %c0_16 = arith.constant 0 : index
    %c0_17 = arith.constant 0 : index
    %35 = vector.load %arg3[%c0_16, %c0_17] : memref<1x32xf32, #tpu.memory_space<vmem>>, vector<1x32xf32>
    %c0_18 = arith.constant 0 : index
    %c0_19 = arith.constant 0 : index
    %36 = vector.load %arg4[%c0_18, %c0_19] : memref<1x32xf32, #tpu.memory_space<vmem>>, vector<1x32xf32>
    %cst_20 = arith.constant dense<0.000000e+00> : vector<32xf32>
    %37 = vector.multi_reduction <add>, %9, %cst_20 [0] : vector<256x32xf32> to vector<32xf32>
    %38 = vector.shape_cast %37 : vector<32xf32> to vector<1x32xf32>
    %cst_21 = arith.constant 3.906250e-03 : f32
    %39 = vector.broadcast %cst_21 : f32 to vector<1x32xf32>
    %40 = arith.mulf %38, %39 : vector<1x32xf32>
    %41 = vector.broadcast %40 : vector<1x32xf32> to vector<256x32xf32>
    %42 = arith.subf %9, %41 : vector<256x32xf32>
    %43 = arith.mulf %42, %42 : vector<256x32xf32>
    %cst_22 = arith.constant dense<0.000000e+00> : vector<32xf32>
    %44 = vector.multi_reduction <add>, %43, %cst_22 [0] : vector<256x32xf32> to vector<32xf32>
    %45 = vector.shape_cast %44 : vector<32xf32> to vector<1x32xf32>
    %cst_23 = arith.constant 3.906250e-03 : f32
    %46 = vector.broadcast %cst_23 : f32 to vector<1x32xf32>
    %47 = arith.mulf %45, %46 : vector<1x32xf32>
    %cst_24 = arith.constant 9.99999974E-6 : f32
    %48 = vector.broadcast %cst_24 : f32 to vector<1x32xf32>
    %49 = arith.addf %47, %48 : vector<1x32xf32>
    %50 = math.rsqrt %49 : vector<1x32xf32>
    %51 = vector.broadcast %50 : vector<1x32xf32> to vector<256x32xf32>
    %52 = arith.mulf %42, %51 : vector<256x32xf32>
    %53 = vector.broadcast %35 : vector<1x32xf32> to vector<256x32xf32>
    %54 = arith.mulf %52, %53 : vector<256x32xf32>
    %55 = vector.broadcast %36 : vector<1x32xf32> to vector<256x32xf32>
    %56 = arith.addf %54, %55 : vector<256x32xf32>
    %57 = arith.negf %56 : vector<256x32xf32>
    %58 = math.exp %57 : vector<256x32xf32>
    %cst_25 = arith.constant 1.000000e+00 : f32
    %59 = vector.broadcast %cst_25 : f32 to vector<256x32xf32>
    %60 = arith.addf %59, %58 : vector<256x32xf32>
    %61 = arith.divf %59, %60 : vector<256x32xf32>
    %62 = arith.mulf %56, %61 : vector<256x32xf32>
    %63 = arith.truncf %62 : vector<256x32xf32> to vector<256x32xbf16>
    %c32 = arith.constant 32 : index
    %c0_26 = arith.constant 0 : index
    %64 = vector.load %arg15[%c32, %c0_26] : memref<320x32xbf16, #tpu.memory_space<vmem>>, vector<256x32xbf16>
    tpu.vector_store %arg15[%c32, %c0_26], %63 {strides = array<i32>} : memref<320x32xbf16, #tpu.memory_space<vmem>>, vector<256x32xbf16>,
    %c15 = arith.constant 15 : index
    %c0_27 = arith.constant 0 : index
    %65 = vector.load %arg15[%c15, %c0_27] : memref<320x32xbf16, #tpu.memory_space<vmem>>, vector<272x32xbf16>
    %c0_28 = arith.constant 0 : index
    %c0_29 = arith.constant 0 : index
    %66 = vector.load %arg17[%c0_28, %c0_29] : memref<272x96xbf16, #tpu.memory_space<vmem>>, vector<272x32xbf16>
    tpu.vector_store %arg17[%c0_28, %c0_29], %65 {strides = array<i32>} : memref<272x96xbf16, #tpu.memory_space<vmem>>, vector<272x32xbf16>,
    %c31 = arith.constant 31 : index
    %c0_30 = arith.constant 0 : index
    %67 = vector.load %arg15[%c31, %c0_30] : memref<320x32xbf16, #tpu.memory_space<vmem>>, vector<272x32xbf16>
    %c0_31 = arith.constant 0 : index
    %c32_32 = arith.constant 32 : index
    %68 = vector.load %arg17[%c0_31, %c32_32] : memref<272x96xbf16, #tpu.memory_space<vmem>>, vector<272x32xbf16>
    tpu.vector_store %arg17[%c0_31, %c32_32], %67 {strides = array<i32>} : memref<272x96xbf16, #tpu.memory_space<vmem>>, vector<272x32xbf16>,
    %c47 = arith.constant 47 : index
    %c0_33 = arith.constant 0 : index
    %69 = vector.load %arg15[%c47, %c0_33] : memref<320x32xbf16, #tpu.memory_space<vmem>>, vector<272x32xbf16>
    %c0_34 = arith.constant 0 : index
    %c64 = arith.constant 64 : index
    %70 = vector.load %arg17[%c0_34, %c64] : memref<272x96xbf16, #tpu.memory_space<vmem>>, vector<272x32xbf16>
    tpu.vector_store %arg17[%c0_34, %c64], %69 {strides = array<i32>} : memref<272x96xbf16, #tpu.memory_space<vmem>>, vector<272x32xbf16>,
    %c0_35 = arith.constant 0 : index
    %c0_36 = arith.constant 0 : index
    %71 = vector.load %arg17[%c0_35, %c0_36] : memref<272x96xbf16, #tpu.memory_space<vmem>>, vector<256x96xbf16>
    %c0_37 = arith.constant 0 : index
    %c0_38 = arith.constant 0 : index
    %72 = vector.load %arg5[%c0_37, %c0_38] : memref<288x64xbf16, #tpu.memory_space<vmem>>, vector<96x64xbf16>
    %cst_39 = arith.constant dense<0.000000e+00> : vector<256x64xf32>
    %73 = tpu.matmul %71, %72, %cst_39 {dimension_numbers = #tpu.dot_dimension_numbers<[1], [0], [0], [1], [0, 0, 1, 1], [], []>} : vector<256x96xbf16>, vector<96x64xbf16>, vector<256x64xf32> -> vector<256x64xf32>
    %74 = vector.broadcast %30 : vector<256x1xf32> to vector<256x64xf32>
    %75 = arith.mulf %73, %74 : vector<256x64xf32>
    %c1 = arith.constant 1 : index
    %c0_40 = arith.constant 0 : index
    %76 = vector.load %arg17[%c1, %c0_40] : memref<272x96xbf16, #tpu.memory_space<vmem>>, vector<256x96xbf16>
    %c96 = arith.constant 96 : index
    %c0_41 = arith.constant 0 : index
    %77 = vector.load %arg5[%c96, %c0_41] : memref<288x64xbf16, #tpu.memory_space<vmem>>, vector<96x64xbf16>
    %cst_42 = arith.constant dense<0.000000e+00> : vector<256x64xf32>
    %78 = tpu.matmul %76, %77, %cst_42 {dimension_numbers = #tpu.dot_dimension_numbers<[1], [0], [0], [1], [0, 0, 1, 1], [], []>} : vector<256x96xbf16>, vector<96x64xbf16>, vector<256x64xf32> -> vector<256x64xf32>
    %79 = arith.addf %75, %78 : vector<256x64xf32>
    %c2 = arith.constant 2 : index
    %c0_43 = arith.constant 0 : index
    %80 = vector.load %arg17[%c2, %c0_43] : memref<272x96xbf16, #tpu.memory_space<vmem>>, vector<256x96xbf16>
    %c192 = arith.constant 192 : index
    %c0_44 = arith.constant 0 : index
    %81 = vector.load %arg5[%c192, %c0_44] : memref<288x64xbf16, #tpu.memory_space<vmem>>, vector<96x64xbf16>
    %cst_45 = arith.constant dense<0.000000e+00> : vector<256x64xf32>
    %82 = tpu.matmul %80, %81, %cst_45 {dimension_numbers = #tpu.dot_dimension_numbers<[1], [0], [0], [1], [0, 0, 1, 1], [], []>} : vector<256x96xbf16>, vector<96x64xbf16>, vector<256x64xf32> -> vector<256x64xf32>
    %83 = vector.broadcast %34 : vector<256x1xf32> to vector<256x64xf32>
    %84 = arith.mulf %82, %83 : vector<256x64xf32>
    %85 = arith.addf %79, %84 : vector<256x64xf32>
    %c0_46 = arith.constant 0 : index
    %c0_47 = arith.constant 0 : index
    %86 = vector.load %arg6[%c0_46, %c0_47] : memref<1x64xf32, #tpu.memory_space<vmem>>, vector<1x64xf32>
    %87 = vector.broadcast %86 : vector<1x64xf32> to vector<256x64xf32>
    %88 = arith.addf %85, %87 : vector<256x64xf32>
    %c0_48 = arith.constant 0 : index
    %c0_49 = arith.constant 0 : index
    %c0_50 = arith.constant 0 : index
    %89 = vector.load %arg2[%c0_48, %c0_49, %c0_50] : memref<1x1x64xf32, #tpu.memory_space<vmem>>, vector<1x1x64xf32>
    %90 = vector.shape_cast %89 : vector<1x1x64xf32> to vector<1x64xf32>
    %91 = vector.broadcast %90 : vector<1x64xf32> to vector<256x64xf32>
    %92 = arith.addf %88, %91 : vector<256x64xf32>
    %c0_51 = arith.constant 0 : index
    %c0_52 = arith.constant 0 : index
    %93 = vector.load %arg7[%c0_51, %c0_52] : memref<1x64xf32, #tpu.memory_space<vmem>>, vector<1x64xf32>
    %c0_53 = arith.constant 0 : index
    %c0_54 = arith.constant 0 : index
    %94 = vector.load %arg8[%c0_53, %c0_54] : memref<1x64xf32, #tpu.memory_space<vmem>>, vector<1x64xf32>
    %c0_55 = arith.constant 0 : index
    %c0_56 = arith.constant 0 : index
    %95 = vector.load %arg11[%c0_55, %c0_56] : memref<64x64xf32, #tpu.memory_space<vmem>>, vector<64x64xf32>
    %cst_57 = arith.constant dense<0.000000e+00> : vector<64xf32>
    %96 = vector.multi_reduction <add>, %92, %cst_57 [0] : vector<256x64xf32> to vector<64xf32>
    %97 = vector.shape_cast %96 : vector<64xf32> to vector<1x64xf32>
    %cst_58 = arith.constant dense<0.000000e+00> : vector<1x64xf32>
    %98 = tpu.matmul %97, %95, %cst_58 {dimension_numbers = #tpu.dot_dimension_numbers<[1], [0], [0], [1], [0, 0, 1, 1], [], []>} : vector<1x64xf32>, vector<64x64xf32>, vector<1x64xf32> -> vector<1x64xf32>
    %99 = vector.broadcast %98 : vector<1x64xf32> to vector<256x64xf32>
    %100 = arith.subf %92, %99 : vector<256x64xf32>
    %101 = arith.mulf %100, %100 : vector<256x64xf32>
    %cst_59 = arith.constant dense<0.000000e+00> : vector<64xf32>
    %102 = vector.multi_reduction <add>, %101, %cst_59 [0] : vector<256x64xf32> to vector<64xf32>
    %103 = vector.shape_cast %102 : vector<64xf32> to vector<1x64xf32>
    %cst_60 = arith.constant dense<0.000000e+00> : vector<1x64xf32>
    %104 = tpu.matmul %103, %95, %cst_60 {dimension_numbers = #tpu.dot_dimension_numbers<[1], [0], [0], [1], [0, 0, 1, 1], [], []>} : vector<1x64xf32>, vector<64x64xf32>, vector<1x64xf32> -> vector<1x64xf32>
    %cst_61 = arith.constant 9.99999974E-6 : f32
    %105 = vector.broadcast %cst_61 : f32 to vector<1x64xf32>
    %106 = arith.addf %104, %105 : vector<1x64xf32>
    %107 = math.rsqrt %106 : vector<1x64xf32>
    %108 = vector.broadcast %107 : vector<1x64xf32> to vector<256x64xf32>
    %109 = arith.mulf %100, %108 : vector<256x64xf32>
    %110 = vector.broadcast %93 : vector<1x64xf32> to vector<256x64xf32>
    %111 = arith.mulf %109, %110 : vector<256x64xf32>
    %112 = vector.broadcast %94 : vector<1x64xf32> to vector<256x64xf32>
    %113 = arith.addf %111, %112 : vector<256x64xf32>
    %114 = arith.negf %113 : vector<256x64xf32>
    %115 = math.exp %114 : vector<256x64xf32>
    %cst_62 = arith.constant 1.000000e+00 : f32
    %116 = vector.broadcast %cst_62 : f32 to vector<256x64xf32>
    %117 = arith.addf %116, %115 : vector<256x64xf32>
    %118 = arith.divf %116, %117 : vector<256x64xf32>
    %119 = arith.mulf %113, %118 : vector<256x64xf32>
    %120 = arith.truncf %119 : vector<256x64xf32> to vector<256x64xbf16>
    %c32_63 = arith.constant 32 : index
    %c0_64 = arith.constant 0 : index
    %121 = vector.load %arg16[%c32_63, %c0_64] : memref<320x64xbf16, #tpu.memory_space<vmem>>, vector<256x64xbf16>
    tpu.vector_store %arg16[%c32_63, %c0_64], %120 {strides = array<i32>} : memref<320x64xbf16, #tpu.memory_space<vmem>>, vector<256x64xbf16>,
    %c15_65 = arith.constant 15 : index
    %c0_66 = arith.constant 0 : index
    %122 = vector.load %arg16[%c15_65, %c0_66] : memref<320x64xbf16, #tpu.memory_space<vmem>>, vector<272x64xbf16>
    %c0_67 = arith.constant 0 : index
    %c0_68 = arith.constant 0 : index
    %123 = vector.load %arg18[%c0_67, %c0_68] : memref<272x192xbf16, #tpu.memory_space<vmem>>, vector<272x64xbf16>
    tpu.vector_store %arg18[%c0_67, %c0_68], %122 {strides = array<i32>} : memref<272x192xbf16, #tpu.memory_space<vmem>>, vector<272x64xbf16>,
    %c31_69 = arith.constant 31 : index
    %c0_70 = arith.constant 0 : index
    %124 = vector.load %arg16[%c31_69, %c0_70] : memref<320x64xbf16, #tpu.memory_space<vmem>>, vector<272x64xbf16>
    %c0_71 = arith.constant 0 : index
    %c64_72 = arith.constant 64 : index
    %125 = vector.load %arg18[%c0_71, %c64_72] : memref<272x192xbf16, #tpu.memory_space<vmem>>, vector<272x64xbf16>
    tpu.vector_store %arg18[%c0_71, %c64_72], %124 {strides = array<i32>} : memref<272x192xbf16, #tpu.memory_space<vmem>>, vector<272x64xbf16>,
    %c47_73 = arith.constant 47 : index
    %c0_74 = arith.constant 0 : index
    %126 = vector.load %arg16[%c47_73, %c0_74] : memref<320x64xbf16, #tpu.memory_space<vmem>>, vector<272x64xbf16>
    %c0_75 = arith.constant 0 : index
    %c128 = arith.constant 128 : index
    %127 = vector.load %arg18[%c0_75, %c128] : memref<272x192xbf16, #tpu.memory_space<vmem>>, vector<272x64xbf16>
    tpu.vector_store %arg18[%c0_75, %c128], %126 {strides = array<i32>} : memref<272x192xbf16, #tpu.memory_space<vmem>>, vector<272x64xbf16>,
    %c0_76 = arith.constant 0 : index
    %c0_77 = arith.constant 0 : index
    %128 = vector.load %arg18[%c0_76, %c0_77] : memref<272x192xbf16, #tpu.memory_space<vmem>>, vector<256x192xbf16>
    %c0_78 = arith.constant 0 : index
    %c0_79 = arith.constant 0 : index
    %129 = vector.load %arg9[%c0_78, %c0_79] : memref<576x64xbf16, #tpu.memory_space<vmem>>, vector<192x64xbf16>
    %cst_80 = arith.constant dense<0.000000e+00> : vector<256x64xf32>
    %130 = tpu.matmul %128, %129, %cst_80 {dimension_numbers = #tpu.dot_dimension_numbers<[1], [0], [0], [1], [0, 0, 1, 1], [], []>} : vector<256x192xbf16>, vector<192x64xbf16>, vector<256x64xf32> -> vector<256x64xf32>
    %131 = vector.broadcast %30 : vector<256x1xf32> to vector<256x64xf32>
    %132 = arith.mulf %130, %131 : vector<256x64xf32>
    %c1_81 = arith.constant 1 : index
    %c0_82 = arith.constant 0 : index
    %133 = vector.load %arg18[%c1_81, %c0_82] : memref<272x192xbf16, #tpu.memory_space<vmem>>, vector<256x192xbf16>
    %c192_83 = arith.constant 192 : index
    %c0_84 = arith.constant 0 : index
    %134 = vector.load %arg9[%c192_83, %c0_84] : memref<576x64xbf16, #tpu.memory_space<vmem>>, vector<192x64xbf16>
    %cst_85 = arith.constant dense<0.000000e+00> : vector<256x64xf32>
    %135 = tpu.matmul %133, %134, %cst_85 {dimension_numbers = #tpu.dot_dimension_numbers<[1], [0], [0], [1], [0, 0, 1, 1], [], []>} : vector<256x192xbf16>, vector<192x64xbf16>, vector<256x64xf32> -> vector<256x64xf32>
    %136 = arith.addf %132, %135 : vector<256x64xf32>
    %c2_86 = arith.constant 2 : index
    %c0_87 = arith.constant 0 : index
    %137 = vector.load %arg18[%c2_86, %c0_87] : memref<272x192xbf16, #tpu.memory_space<vmem>>, vector<256x192xbf16>
    %c384 = arith.constant 384 : index
    %c0_88 = arith.constant 0 : index
    %138 = vector.load %arg9[%c384, %c0_88] : memref<576x64xbf16, #tpu.memory_space<vmem>>, vector<192x64xbf16>
    %cst_89 = arith.constant dense<0.000000e+00> : vector<256x64xf32>
    %139 = tpu.matmul %137, %138, %cst_89 {dimension_numbers = #tpu.dot_dimension_numbers<[1], [0], [0], [1], [0, 0, 1, 1], [], []>} : vector<256x192xbf16>, vector<192x64xbf16>, vector<256x64xf32> -> vector<256x64xf32>
    %140 = vector.broadcast %34 : vector<256x1xf32> to vector<256x64xf32>
    %141 = arith.mulf %139, %140 : vector<256x64xf32>
    %142 = arith.addf %136, %141 : vector<256x64xf32>
    %c0_90 = arith.constant 0 : index
    %c0_91 = arith.constant 0 : index
    %143 = vector.load %arg10[%c0_90, %c0_91] : memref<1x64xf32, #tpu.memory_space<vmem>>, vector<1x64xf32>
    %144 = vector.broadcast %143 : vector<1x64xf32> to vector<256x64xf32>
    %145 = arith.addf %142, %144 : vector<256x64xf32>
    %146 = arith.truncf %9 : vector<256x32xf32> to vector<256x32xbf16>
    %c0_92 = arith.constant 0 : index
    %c0_93 = arith.constant 0 : index
    %147 = vector.load %arg12[%c0_92, %c0_93] : memref<32x64xbf16, #tpu.memory_space<vmem>>, vector<32x64xbf16>
    %cst_94 = arith.constant dense<0.000000e+00> : vector<256x64xf32>
    %148 = tpu.matmul %146, %147, %cst_94 {dimension_numbers = #tpu.dot_dimension_numbers<[1], [0], [0], [1], [0, 0, 1, 1], [], []>} : vector<256x32xbf16>, vector<32x64xbf16>, vector<256x64xf32> -> vector<256x64xf32>
    %c0_95 = arith.constant 0 : index
    %c0_96 = arith.constant 0 : index
    %149 = vector.load %arg13[%c0_95, %c0_96] : memref<1x64xf32, #tpu.memory_space<vmem>>, vector<1x64xf32>
    %150 = vector.broadcast %149 : vector<1x64xf32> to vector<256x64xf32>
    %151 = arith.addf %148, %150 : vector<256x64xf32>
    %152 = arith.addf %151, %145 : vector<256x64xf32>
    %c0_97 = arith.constant 0 : index
    %c0_98 = arith.constant 0 : index
    %c0_99 = arith.constant 0 : index
    %153 = vector.load %arg14[%c0_97, %c0_98, %c0_99] : memref<1x256x64xf32, #tpu.memory_space<vmem>>, vector<1x256x64xf32>
    %154 = vector.shape_cast %153 : vector<1x256x64xf32> to vector<256x64xf32>
    %155 = vector.shape_cast %152 : vector<256x64xf32> to vector<1x256x64xf32>
    tpu.vector_store %arg14[%c0_97, %c0_98, %c0_99], %155 {strides = array<i32>} : memref<1x256x64xf32, #tpu.memory_space<vmem>>, vector<1x256x64xf32>,
    return
  }
  func.func @transform_0(%arg0: i32) -> (i32, i32, i32) {
    %c0_i32 = arith.constant 0 : i32
    %c0_i32_0 = arith.constant 0 : i32
    %c0_i32_1 = arith.constant 0 : i32
    return %arg0, %c0_i32, %c0_i32_0 : i32, i32, i32
  }
  func.func @transform_1(%arg0: i32) -> (i32, i32, i32) {
    %c0_i32 = arith.constant 0 : i32
    %c0_i32_0 = arith.constant 0 : i32
    %c0_i32_1 = arith.constant 0 : i32
    return %arg0, %c0_i32, %c0_i32_0 : i32, i32, i32
  }
  func.func @transform_2(%arg0: i32) -> (i32, i32) {
    %c0_i32 = arith.constant 0 : i32
    %c0_i32_0 = arith.constant 0 : i32
    %c0_i32_1 = arith.constant 0 : i32
    return %c0_i32, %c0_i32_0 : i32, i32
  }
  func.func @transform_3(%arg0: i32) -> (i32, i32) {
    %c0_i32 = arith.constant 0 : i32
    %c0_i32_0 = arith.constant 0 : i32
    %c0_i32_1 = arith.constant 0 : i32
    return %c0_i32, %c0_i32_0 : i32, i32
  }
  func.func @transform_4(%arg0: i32) -> (i32, i32) {
    %c0_i32 = arith.constant 0 : i32
    %c0_i32_0 = arith.constant 0 : i32
    %c0_i32_1 = arith.constant 0 : i32
    return %c0_i32, %c0_i32_0 : i32, i32
  }
  func.func @transform_5(%arg0: i32) -> (i32, i32) {
    %c0_i32 = arith.constant 0 : i32
    %c0_i32_0 = arith.constant 0 : i32
    %c0_i32_1 = arith.constant 0 : i32
    return %c0_i32, %c0_i32_0 : i32, i32
  }
  func.func @transform_6(%arg0: i32) -> (i32, i32) {
    %c0_i32 = arith.constant 0 : i32
    %c0_i32_0 = arith.constant 0 : i32
    %c0_i32_1 = arith.constant 0 : i32
    return %c0_i32, %c0_i32_0 : i32, i32
  }
  func.func @transform_7(%arg0: i32) -> (i32, i32) {
    %c0_i32 = arith.constant 0 : i32
    %c0_i32_0 = arith.constant 0 : i32
    %c0_i32_1 = arith.constant 0 : i32
    return %c0_i32, %c0_i32_0 : i32, i32
  }
  func.func @transform_8(%arg0: i32) -> (i32, i32) {
    %c0_i32 = arith.constant 0 : i32
    %c0_i32_0 = arith.constant 0 : i32
    %c0_i32_1 = arith.constant 0 : i32
    return %c0_i32, %c0_i32_0 : i32, i32
  }
  func.func @transform_9(%arg0: i32) -> (i32, i32) {
    %c0_i32 = arith.constant 0 : i32
    %c0_i32_0 = arith.constant 0 : i32
    %c0_i32_1 = arith.constant 0 : i32
    return %c0_i32, %c0_i32_0 : i32, i32
  }
  func.func @transform_10(%arg0: i32) -> (i32, i32) {
    %c0_i32 = arith.constant 0 : i32
    %c0_i32_0 = arith.constant 0 : i32
    %c0_i32_1 = arith.constant 0 : i32
    return %c0_i32, %c0_i32_0 : i32, i32
  }
  func.func @transform_11(%arg0: i32) -> (i32, i32) {
    %c0_i32 = arith.constant 0 : i32
    %c0_i32_0 = arith.constant 0 : i32
    %c0_i32_1 = arith.constant 0 : i32
    return %c0_i32, %c0_i32_0 : i32, i32
  }
  func.func @transform_12(%arg0: i32) -> (i32, i32) {
    %c0_i32 = arith.constant 0 : i32
    %c0_i32_0 = arith.constant 0 : i32
    %c0_i32_1 = arith.constant 0 : i32
    return %c0_i32, %c0_i32_0 : i32, i32
  }
  func.func @transform_13(%arg0: i32) -> (i32, i32, i32) {
    %c0_i32 = arith.constant 0 : i32
    %c0_i32_0 = arith.constant 0 : i32
    %c0_i32_1 = arith.constant 0 : i32
    return %arg0, %c0_i32, %c0_i32_0 : i32, i32, i32
  }
}

</mosaic_0001>

<llo_original>
// kernel: res_block_forward.1
$region0: #{res_block_forward.1}
  #allocation0 [shape = 'u32[]', space=smem, size = 0x4, offset = 0x4, fixed_abs, tag = 'smem constant byte address 0x4 - core index']
  #allocation1 [shape = 'u32[144,128]{1,0:T(1,128)}', space=vmem, size = 0x12000, scoped, tag = 'internal scratch']
  #allocation2 [shape = 'bf16[320,32]{1,0:T(16,128)(2,1)}', space=vmem, size = 0x14000, scoped, tag = 'scratch operand']
  #allocation3 [shape = 'bf16[320,64]{1,0:T(16,128)(2,1)}', space=vmem, size = 0x14000, scoped, tag = 'scratch operand']
  #allocation4 [shape = 'bf16[272,96]{1,0:T(16,128)(2,1)}', space=vmem, size = 0x11000, scoped, tag = 'scratch operand']
  #allocation5 [shape = 'bf16[272,192]{1,0:T(16,128)(2,1)}', space=vmem, size = 0x22000, scoped, tag = 'scratch operand']
  %s0 = inlined_call_operand.vmem [shape: f32[2,256,32], index: 0, kind: input, shape index: {}]
  %s1 = inlined_call_operand.vmem [shape: f32[2,1,64], index: 1, kind: input, shape index: {}]
  %s2 = inlined_call_operand.vmem [shape: f32[1,32], index: 2, kind: input, shape index: {}]
  %s3 = inlined_call_operand.vmem [shape: f32[1,32], index: 3, kind: input, shape index: {}]
  %s4 = inlined_call_operand.vmem [shape: bf16[288,64], index: 4, kind: input, shape index: {}]
  %s5 = inlined_call_operand.vmem [shape: f32[1,64], index: 5, kind: input, shape index: {}]
  %s6 = inlined_call_operand.vmem [shape: f32[1,64], index: 6, kind: input, shape index: {}]
  %s7 = inlined_call_operand.vmem [shape: f32[1,64], index: 7, kind: input, shape index: {}]
  %s8 = inlined_call_operand.vmem [shape: bf16[576,64], index: 8, kind: input, shape index: {}]
  %s9 = inlined_call_operand.vmem [shape: f32[1,64], index: 9, kind: input, shape index: {}]
  %s10 = inlined_call_operand.vmem [shape: f32[64,64], index: 10, kind: input, shape index: {}]
  %s11 = inlined_call_operand.vmem [shape: bf16[32,64], index: 11, kind: input, shape index: {}]
  %s12 = inlined_call_operand.vmem [shape: f32[1,64], index: 12, kind: input, shape index: {}]
  %s13 = inlined_call_operand.hbm [shape: f32[2,256,64], index: 13, kind: output, shape index: {}]
  %s14 = sld [smem:[#allocation0]]
  $region85: #{res_block_forward.1} parent=0
    _
  %s16 = ssub.s32 1, %s14
  %s17 = scalar_select 0, %s16, %s14
  $region1: #{res_block_forward.1} parent=0
    #allocation6 [shape = 'u8[262144]{0}', space=vmem, size = 0x40000, scoped, tag = 'output window, operand 0']
    #allocation7 [shape = 's32[2]{0}', space=sflag, size = 0x8, scoped, tag = 'scoped memory for res_block_forward.1']
    %18 = vsyncpa [#allocation7], 0
    %s19 = scalar_lea.sflag [#allocation7], 1
    %20 = vsyncpa %s19, 0
    loop: start=0, step=1, limit=4
    $region2: #{res_block_forward.1} parent=1 // loop_pre_header
      _
    $region3: #{res_block_forward.1} parent=1 // loop_header
      %s22 = sphi 0, %s26
      %p23 = scmp.ge.s32.totalorder %s22, 4
      %s32 = sphi 0, %s34
      %s35 = sphi 0, %s32
      %s36 = sphi 0, %s35
      %s52 = sphi 0, %s36
      %s58 = sphi 0, %s60
      %s61 = sphi 0, %s58
      %s62 = sphi 0, %s61
      %s78 = sphi 0, %s62
      %s82 = sphi 0, %s82
      %s84 = sphi 0, %s82
      %s85 = sphi 0, %s84
      %s99 = sphi 0, %s85
      %s103 = sphi 0, %s103
      %s105 = sphi 0, %s103
      %s106 = sphi 0, %s105
      %s120 = sphi 0, %s106
      %s124 = sphi 0, %s124
      %s126 = sphi 0, %s124
      %s127 = sphi 0, %s126
      %s141 = sphi 0, %s127
      %s145 = sphi 0, %s145
      %s147 = sphi 0, %s145
      %s148 = sphi 0, %s147
      %s162 = sphi 0, %s148
      %s166 = sphi 0, %s166
      %s168 = sphi 0, %s166
      %s169 = sphi 0, %s168
      %s183 = sphi 0, %s169
      %s187 = sphi 0, %s187
      %s189 = sphi 0, %s187
      %s190 = sphi 0, %s189
      %s204 = sphi 0, %s190
      %s208 = sphi 0, %s208
      %s210 = sphi 0, %s208
      %s211 = sphi 0, %s210
      %s225 = sphi 0, %s211
      %s229 = sphi 0, %s229
      %s231 = sphi 0, %s229
      %s232 = sphi 0, %s231
      %s246 = sphi 0, %s232
      %s250 = sphi 0, %s250
      %s252 = sphi 0, %s250
      %s253 = sphi 0, %s252
      %s267 = sphi 0, %s253
      %s271 = sphi 0, %s271
      %s273 = sphi 0, %s271
      %s274 = sphi 0, %s273
      %s288 = sphi 0, %s274
      %s292 = sphi 0, %s292
      %s294 = sphi 0, %s292
      %s295 = sphi 0, %s294
      %s309 = sphi 0, %s295
      %s315 = sphi 0, %s317
      %s318 = sphi 0, %s315
      %s319 = sphi 0, %s318
      %s335 = sphi 0, %s319
    $region4: #{res_block_forward.1} parent=1 // loop_header_branch
      %25 = sbr.rel (%p23) target = $region8
    $region5: #{res_block_forward.1} parent=1 // loop_body
      %s27 = ssub.s32 %s22, 1
      %s28 = ssub.s32 %s22, 2
      %s29 = sadd.s32 %s22, 1
      %s30 = ssub.s32 %s22, %s29
      %p31 = scmp.eq.s32.totalorder %s30, 0
      %s33 = sadd.s32 %s32, 1
      %s34 = scalar_select %p31, %s32, %s33
      %p37 = pneg %p31
      %p38 = scmp.eq.s32.totalorder %s22, 1
      %p39 = por %p37, %p38
      %p40 = scmp.ne.s32.totalorder %s32, %s35
      %p41 = scmp.eq.s32.totalorder %s22, 0
      %p42 = por %p40, %p41
      %p43 = scmp.ne.s32.totalorder %s32, %s35
      %p44 = scmp.eq.s32.totalorder %s27, 1
      %p45 = por %p43, %p44
      %p46 = scmp.ne.s32.totalorder %s35, %s36
      %p47 = scmp.eq.s32.totalorder %s27, 0
      %p48 = por %p46, %p47
      %p49 = scmp.ne.s32.totalorder %s35, %s36
      %p50 = scmp.eq.s32.totalorder %s28, 1
      %p51 = por %p49, %p50
      %p53 = scmp.ne.s32.totalorder %s36, %s52
      %p54 = scmp.eq.s32.totalorder %s28, 0
      %p55 = por %p53, %p54
      %s56 = ssub.s32 %s22, %s29
      %p57 = scmp.eq.s32.totalorder %s56, 0
      %s59 = sadd.s32 %s58, 1
      %s60 = scalar_select %p57, %s58, %s59
      %p63 = pneg %p57
      %p64 = scmp.eq.s32.totalorder %s22, 1
      %p65 = por %p63, %p64
      %p66 = scmp.ne.s32.totalorder %s58, %s61
      %p67 = scmp.eq.s32.totalorder %s22, 0
      %p68 = por %p66, %p67
      %p69 = scmp.ne.s32.totalorder %s58, %s61
      %p70 = scmp.eq.s32.totalorder %s27, 1
      %p71 = por %p69, %p70
      %p72 = scmp.ne.s32.totalorder %s61, %s62
      %p73 = scmp.eq.s32.totalorder %s27, 0
      %p74 = por %p72, %p73
      %p75 = scmp.ne.s32.totalorder %s61, %s62
      %p76 = scmp.eq.s32.totalorder %s28, 1
      %p77 = por %p75, %p76
      %p79 = scmp.ne.s32.totalorder %s62, %s78
      %p80 = scmp.eq.s32.totalorder %s28, 0
      %p81 = por %p79, %p80
      %s83 = sadd.s32 %s82, 1
      %p86 = scmp.eq.s32.totalorder %s22, 1
      %p87 = scmp.ne.s32.totalorder %s82, %s84
      %p88 = scmp.eq.s32.totalorder %s22, 0
      %p89 = por %p87, %p88
      %p90 = scmp.ne.s32.totalorder %s82, %s84
      %p91 = scmp.eq.s32.totalorder %s27, 1
      %p92 = por %p90, %p91
      %p93 = scmp.ne.s32.totalorder %s84, %s85
      %p94 = scmp.eq.s32.totalorder %s27, 0
      %p95 = por %p93, %p94
      %p96 = scmp.ne.s32.totalorder %s84, %s85
      %p97 = scmp.eq.s32.totalorder %s28, 1
      %p98 = por %p96, %p97
      %p100 = scmp.ne.s32.totalorder %s85, %s99
      %p101 = scmp.eq.s32.totalorder %s28, 0
      %p102 = por %p100, %p101
      %s104 = sadd.s32 %s103, 1
      %p107 = scmp.eq.s32.totalorder %s22, 1
      %p108 = scmp.ne.s32.totalorder %s103, %s105
      %p109 = scmp.eq.s32.totalorder %s22, 0
      %p110 = por %p108, %p109
      %p111 = scmp.ne.s32.totalorder %s103, %s105
      %p112 = scmp.eq.s32.totalorder %s27, 1
      %p113 = por %p111, %p112
      %p114 = scmp.ne.s32.totalorder %s105, %s106
      %p115 = scmp.eq.s32.totalorder %s27, 0
      %p116 = por %p114, %p115
      %p117 = scmp.ne.s32.totalorder %s105, %s106
      %p118 = scmp.eq.s32.totalorder %s28, 1
      %p119 = por %p117, %p118
      %p121 = scmp.ne.s32.totalorder %s106, %s120
      %p122 = scmp.eq.s32.totalorder %s28, 0
      %p123 = por %p121, %p122
      %s125 = sadd.s32 %s124, 1
      %p128 = scmp.eq.s32.totalorder %s22, 1
      %p129 = scmp.ne.s32.totalorder %s124, %s126
      %p130 = scmp.eq.s32.totalorder %s22, 0
      %p131 = por %p129, %p130
      %p132 = scmp.ne.s32.totalorder %s124, %s126
      %p133 = scmp.eq.s32.totalorder %s27, 1
      %p134 = por %p132, %p133
      %p135 = scmp.ne.s32.totalorder %s126, %s127
      %p136 = scmp.eq.s32.totalorder %s27, 0
      %p137 = por %p135, %p136
      %p138 = scmp.ne.s32.totalorder %s126, %s127
      %p139 = scmp.eq.s32.totalorder %s28, 1
      %p140 = por %p138, %p139
      %p142 = scmp.ne.s32.totalorder %s127, %s141
      %p143 = scmp.eq.s32.totalorder %s28, 0
      %p144 = por %p142, %p143
      %s146 = sadd.s32 %s145, 1
      %p149 = scmp.eq.s32.totalorder %s22, 1
      %p150 = scmp.ne.s32.totalorder %s145, %s147
      %p151 = scmp.eq.s32.totalorder %s22, 0
      %p152 = por %p150, %p151
      %p153 = scmp.ne.s32.totalorder %s145, %s147
      %p154 = scmp.eq.s32.totalorder %s27, 1
      %p155 = por %p153, %p154
      %p156 = scmp.ne.s32.totalorder %s147, %s148
      %p157 = scmp.eq.s32.totalorder %s27, 0
      %p158 = por %p156, %p157
      %p159 = scmp.ne.s32.totalorder %s147, %s148
      %p160 = scmp.eq.s32.totalorder %s28, 1
      %p161 = por %p159, %p160
      %p163 = scmp.ne.s32.totalorder %s148, %s162
      %p164 = scmp.eq.s32.totalorder %s28, 0
      %p165 = por %p163, %p164
      %s167 = sadd.s32 %s166, 1
      %p170 = scmp.eq.s32.totalorder %s22, 1
      %p171 = scmp.ne.s32.totalorder %s166, %s168
      %p172 = scmp.eq.s32.totalorder %s22, 0
      %p173 = por %p171, %p172
      %p174 = scmp.ne.s32.totalorder %s166, %s168
      %p175 = scmp.eq.s32.totalorder %s27, 1
      %p176 = por %p174, %p175
      %p177 = scmp.ne.s32.totalorder %s168, %s169
      %p178 = scmp.eq.s32.totalorder %s27, 0
      %p179 = por %p177, %p178
      %p180 = scmp.ne.s32.totalorder %s168, %s169
      %p181 = scmp.eq.s32.totalorder %s28, 1
      %p182 = por %p180, %p181
      %p184 = scmp.ne.s32.totalorder %s169, %s183
      %p185 = scmp.eq.s32.totalorder %s28, 0
      %p186 = por %p184, %p185
      %s188 = sadd.s32 %s187, 1
      %p191 = scmp.eq.s32.totalorder %s22, 1
      %p192 = scmp.ne.s32.totalorder %s187, %s189
      %p193 = scmp.eq.s32.totalorder %s22, 0
      %p194 = por %p192, %p193
      %p195 = scmp.ne.s32.totalorder %s187, %s189
      %p196 = scmp.eq.s32.totalorder %s27, 1
      %p197 = por %p195, %p196
      %p198 = scmp.ne.s32.totalorder %s189, %s190
      %p199 = scmp.eq.s32.totalorder %s27, 0
      %p200 = por %p198, %p199
      %p201 = scmp.ne.s32.totalorder %s189, %s190
      %p202 = scmp.eq.s32.totalorder %s28, 1
      %p203 = por %p201, %p202
      %p205 = scmp.ne.s32.totalorder %s190, %s204
      %p206 = scmp.eq.s32.totalorder %s28, 0
      %p207 = por %p205, %p206
      %s209 = sadd.s32 %s208, 1
      %p212 = scmp.eq.s32.totalorder %s22, 1
      %p213 = scmp.ne.s32.totalorder %s208, %s210
      %p214 = scmp.eq.s32.totalorder %s22, 0
      %p215 = por %p213, %p214
      %p216 = scmp.ne.s32.totalorder %s208, %s210
      %p217 = scmp.eq.s32.totalorder %s27, 1
      %p218 = por %p216, %p217
      %p219 = scmp.ne.s32.totalorder %s210, %s211
      %p220 = scmp.eq.s32.totalorder %s27, 0
      %p221 = por %p219, %p220
      %p222 = scmp.ne.s32.totalorder %s210, %s211
      %p223 = scmp.eq.s32.totalorder %s28, 1
      %p224 = por %p222, %p223
      %p226 = scmp.ne.s32.totalorder %s211, %s225
      %p227 = scmp.eq.s32.totalorder %s28, 0
      %p228 = por %p226, %p227
      %s230 = sadd.s32 %s229, 1
      %p233 = scmp.eq.s32.totalorder %s22, 1
      %p234 = scmp.ne.s32.totalorder %s229, %s231
      %p235 = scmp.eq.s32.totalorder %s22, 0
      %p236 = por %p234, %p235
      %p237 = scmp.ne.s32.totalorder %s229, %s231
      %p238 = scmp.eq.s32.totalorder %s27, 1
      %p239 = por %p237, %p238
      %p240 = scmp.ne.s32.totalorder %s231, %s232
      %p241 = scmp.eq.s32.totalorder %s27, 0
      %p242 = por %p240, %p241
      %p243 = scmp.ne.s32.totalorder %s231, %s232
      %p244 = scmp.eq.s32.totalorder %s28, 1
      %p245 = por %p243, %p244
      %p247 = scmp.ne.s32.totalorder %s232, %s246
      %p248 = scmp.eq.s32.totalorder %s28, 0
      %p249 = por %p247, %p248
      %s251 = sadd.s32 %s250, 1
      %p254 = scmp.eq.s32.totalorder %s22, 1
      %p255 = scmp.ne.s32.totalorder %s250, %s252
      %p256 = scmp.eq.s32.totalorder %s22, 0
      %p257 = por %p255, %p256
      %p258 = scmp.ne.s32.totalorder %s250, %s252
      %p259 = scmp.eq.s32.totalorder %s27, 1
      %p260 = por %p258, %p259
      %p261 = scmp.ne.s32.totalorder %s252, %s253
      %p262 = scmp.eq.s32.totalorder %s27, 0
      %p263 = por %p261, %p262
      %p264 = scmp.ne.s32.totalorder %s252, %s253
      %p265 = scmp.eq.s32.totalorder %s28, 1
      %p266 = por %p264, %p265
      %p268 = scmp.ne.s32.totalorder %s253, %s267
      %p269 = scmp.eq.s32.totalorder %s28, 0
      %p270 = por %p268, %p269
      %s272 = sadd.s32 %s271, 1
      %p275 = scmp.eq.s32.totalorder %s22, 1
      %p276 = scmp.ne.s32.totalorder %s271, %s273
      %p277 = scmp.eq.s32.totalorder %s22, 0
      %p278 = por %p276, %p277
      %p279 = scmp.ne.s32.totalorder %s271, %s273
      %p280 = scmp.eq.s32.totalorder %s27, 1
      %p281 = por %p279, %p280
      %p282 = scmp.ne.s32.totalorder %s273, %s274
      %p283 = scmp.eq.s32.totalorder %s27, 0
      %p284 = por %p282, %p283
      %p285 = scmp.ne.s32.totalorder %s273, %s274
      %p286 = scmp.eq.s32.totalorder %s28, 1
      %p287 = por %p285, %p286
      %p289 = scmp.ne.s32.totalorder %s274, %s288
      %p290 = scmp.eq.s32.totalorder %s28, 0
      %p291 = por %p289, %p290
      %s293 = sadd.s32 %s292, 1
      %p296 = scmp.eq.s32.totalorder %s22, 1
      %p297 = scmp.ne.s32.totalorder %s292, %s294
      %p298 = scmp.eq.s32.totalorder %s22, 0
      %p299 = por %p297, %p298
      %p300 = scmp.ne.s32.totalorder %s292, %s294
      %p301 = scmp.eq.s32.totalorder %s27, 1
      %p302 = por %p300, %p301
      %p303 = scmp.ne.s32.totalorder %s294, %s295
      %p304 = scmp.eq.s32.totalorder %s27, 0
      %p305 = por %p303, %p304
      %p306 = scmp.ne.s32.totalorder %s294, %s295
      %p307 = scmp.eq.s32.totalorder %s28, 1
      %p308 = por %p306, %p307
      %p310 = scmp.ne.s32.totalorder %s295, %s309
      %p311 = scmp.eq.s32.totalorder %s28, 0
      %p312 = por %p310, %p311
      %s313 = ssub.s32 %s22, %s29
      %p314 = scmp.eq.s32.totalorder %s313, 0
      %s316 = sadd.s32 %s315, 1
      %s317 = scalar_select %p314, %s315, %s316
      %p320 = pneg %p314
      %p321 = scmp.eq.s32.totalorder %s22, 1
      %p322 = por %p320, %p321
      %p323 = scmp.ne.s32.totalorder %s315, %s318
      %p324 = scmp.eq.s32.totalorder %s22, 0
      %p325 = por %p323, %p324
      %p326 = scmp.ne.s32.totalorder %s315, %s318
      %p327 = scmp.eq.s32.totalorder %s27, 1
      %p328 = por %p326, %p327
      %p329 = scmp.ne.s32.totalorder %s318, %s319
      %p330 = scmp.eq.s32.totalorder %s27, 0
      %p331 = por %p329, %p330
      %p332 = scmp.ne.s32.totalorder %s318, %s319
      %p333 = scmp.eq.s32.totalorder %s28, 1
      %p334 = por %p332, %p333
      %p336 = scmp.ne.s32.totalorder %s319, %s335
      %p337 = scmp.eq.s32.totalorder %s28, 0
      %p338 = por %p336, %p337
      %p339 = scmp.le.s32.totalorder 1, %s22
      %p340 = scmp.lt.s32.totalorder %s22, 3
      %p341 = pnand %p339, %p340
      %p342 = pneg %p341
      // Predicated region
      $region9: #{res_block_forward.1} parent=5 // pred_check
        _
      $region10: #{res_block_forward.1} parent=5 // pred_check_branch
        %344 = sbr.rel (%p341) target = $region12
      $region11: #{res_block_forward.1} parent=5 // pred_region
        %s345 = ssub.s32 %s22, 1
        // Predicated region
        $region13: #{res_block_forward.1} parent=11 // pred_check
          %p346 = pneg %p95
        $region14: #{res_block_forward.1} parent=11 // pred_check_branch
          %348 = sbr.rel (%p346) target = $region16
        $region15: #{res_block_forward.1} parent=11 // pred_region
          _
        $region16: #{res_block_forward.1} parent=11 // pred_fallthru
          _
        // Predicated region
        $region17: #{res_block_forward.1} parent=11 // pred_check
          %p349 = pneg %p116
        $region18: #{res_block_forward.1} parent=11 // pred_check_branch
          %351 = sbr.rel (%p349) target = $region20
        $region19: #{res_block_forward.1} parent=11 // pred_region
          _
        $region20: #{res_block_forward.1} parent=11 // pred_fallthru
          _
        // Predicated region
        $region21: #{res_block_forward.1} parent=11 // pred_check
          %p352 = pneg %p137
        $region22: #{res_block_forward.1} parent=11 // pred_check_branch
          %354 = sbr.rel (%p352) target = $region24
        $region23: #{res_block_forward.1} parent=11 // pred_region
          _
        $region24: #{res_block_forward.1} parent=11 // pred_fallthru
          _
        // Predicated region
        $region25: #{res_block_forward.1} parent=11 // pred_check
          %p355 = pneg %p158
        $region26: #{res_block_forward.1} parent=11 // pred_check_branch
          %357 = sbr.rel (%p355) target = $region28
        $region27: #{res_block_forward.1} parent=11 // pred_region
          _
        $region28: #{res_block_forward.1} parent=11 // pred_fallthru
          _
        // Predicated region
        $region29: #{res_block_forward.1} parent=11 // pred_check
          %p358 = pneg %p179
        $region30: #{res_block_forward.1} parent=11 // pred_check_branch
          %360 = sbr.rel (%p358) target = $region32
        $region31: #{res_block_forward.1} parent=11 // pred_region
          _
        $region32: #{res_block_forward.1} parent=11 // pred_fallthru
          _
        // Predicated region
        $region33: #{res_block_forward.1} parent=11 // pred_check
          %p361 = pneg %p200
        $region34: #{res_block_forward.1} parent=11 // pred_check_branch
          %363 = sbr.rel (%p361) target = $region36
        $region35: #{res_block_forward.1} parent=11 // pred_region
          _
        $region36: #{res_block_forward.1} parent=11 // pred_fallthru
          _
        // Predicated region
        $region37: #{res_block_forward.1} parent=11 // pred_check
          %p364 = pneg %p221
        $region38: #{res_block_forward.1} parent=11 // pred_check_branch
          %366 = sbr.rel (%p364) target = $region40
        $region39: #{res_block_forward.1} parent=11 // pred_region
          _
        $region40: #{res_block_forward.1} parent=11 // pred_fallthru
          _
        // Predicated region
        $region41: #{res_block_forward.1} parent=11 // pred_check
          %p367 = pneg %p242
        $region42: #{res_block_forward.1} parent=11 // pred_check_branch
          %369 = sbr.rel (%p367) target = $region44
        $region43: #{res_block_forward.1} parent=11 // pred_region
          _
        $region44: #{res_block_forward.1} parent=11 // pred_fallthru
          _
        // Predicated region
        $region45: #{res_block_forward.1} parent=11 // pred_check
          %p370 = pneg %p263
        $region46: #{res_block_forward.1} parent=11 // pred_check_branch
          %372 = sbr.rel (%p370) target = $region48
        $region47: #{res_block_forward.1} parent=11 // pred_region
          _
        $region48: #{res_block_forward.1} parent=11 // pred_fallthru
          _
        // Predicated region
        $region49: #{res_block_forward.1} parent=11 // pred_check
          %p373 = pneg %p284
        $region50: #{res_block_forward.1} parent=11 // pred_check_branch
          %375 = sbr.rel (%p373) target = $region52
        $region51: #{res_block_forward.1} parent=11 // pred_region
          _
        $region52: #{res_block_forward.1} parent=11 // pred_fallthru
          _
        // Predicated region
        $region53: #{res_block_forward.1} parent=11 // pred_check
          %p376 = pneg %p305
        $region54: #{res_block_forward.1} parent=11 // pred_check_branch
          %378 = sbr.rel (%p376) target = $region56
        $region55: #{res_block_forward.1} parent=11 // pred_region
          _
        $region56: #{res_block_forward.1} parent=11 // pred_fallthru
          _
      $region12: #{res_block_forward.1} parent=5 // pred_fallthru
        _
      %p379 = scmp.lt.s32.totalorder %s22, 2
      // Predicated region
      $region57: #{res_block_forward.1} parent=5 // pred_check
        %p380 = pneg %p379
      $region58: #{res_block_forward.1} parent=5 // pred_check_branch
        %382 = sbr.rel (%p380) target = $region60
      $region59: #{res_block_forward.1} parent=5 // pred_region
        // Predicated region
        $region61: #{res_block_forward.1} parent=59 // pred_check
          %p383 = pneg %p42
        $region62: #{res_block_forward.1} parent=59 // pred_check_branch
          %385 = sbr.rel (%p383) target = $region64
        $region63: #{res_block_forward.1} parent=59 // pred_region
          %p386 = scmp.lt.s32.totalorder %s22, 1
          %s387 = scalar_select %p386, %s22, 1
          %s388 = smul.addr %s387, 32
          %s389 = smul.addr %s388, 8
          %s390 = scalar_lea.vmem %s0, %s389
        $region64: #{res_block_forward.1} parent=59 // pred_fallthru
          _
        // Predicated region
        $region65: #{res_block_forward.1} parent=59 // pred_check
          %p391 = pneg %p68
        $region66: #{res_block_forward.1} parent=59 // pred_check_branch
          %393 = sbr.rel (%p391) target = $region68
        $region67: #{res_block_forward.1} parent=59 // pred_region
          %p394 = scmp.lt.s32.totalorder %s22, 1
          %s395 = scalar_select %p394, %s22, 1
          %s396 = scalar_lea.vmem %s1, %s395
        $region68: #{res_block_forward.1} parent=59 // pred_fallthru
          _
      $region60: #{res_block_forward.1} parent=5 // pred_fallthru
        _
      %p397 = scmp.le.s32.totalorder 1, %s22
      %p398 = scmp.lt.s32.totalorder %s22, 3
      %p399 = pnand %p397, %p398
      %p400 = pneg %p399
      // Predicated region
      $region69: #{res_block_forward.1} parent=5 // pred_check
        _
      $region70: #{res_block_forward.1} parent=5 // pred_check_branch
        %402 = sbr.rel (%p399) target = $region72
      $region71: #{res_block_forward.1} parent=5 // pred_region
        %s403 = ssub.s32 %s22, 1
        %p404 = scmp.lt.s32.totalorder %s27, 1
        %s405 = scalar_select %p404, %s27, 1
        %s406 = smul.addr %s405, 32
        %s407 = smul.addr %s406, 8
        %s408 = scalar_lea.vmem %s0, %s407
        %p409 = pneg %p48
        %p410 = pneg %p45
        %p411 = scmp.lt.s32.totalorder %s27, 1
        %s412 = scalar_select %p411, %s27, 1
        %s413 = scalar_lea.vmem %s1, %s412
        %p414 = pneg %p74
        %p415 = pneg %p71
        %p416 = pneg %p95
        %p417 = pneg %p92
        %p418 = pneg %p116
        %p419 = pneg %p113
        %p420 = pneg %p137
        %p421 = pneg %p134
        %p422 = pneg %p158
        %p423 = pneg %p155
        %p424 = pneg %p179
        %p425 = pneg %p176
        %p426 = pneg %p200
        %p427 = pneg %p197
        %p428 = pneg %p221
        %p429 = pneg %p218
        %p430 = pneg %p242
        %p431 = pneg %p239
        %p432 = pneg %p263
        %p433 = pneg %p260
        %p434 = pneg %p284
        %p435 = pneg %p281
        %p436 = pneg %p305
        %p437 = pneg %p302
        %p438 = pneg %p331
        %p439 = pneg %p328
        %s440 = sand.u32 %s318, 1
        %s441 = scalar_lea.sflag [#allocation7], %s440
        %s442 = sand.u32 %s318, 1
        %s443 = smul.addr %s442, 256
        %s444 = scalar_lea.vmem [#allocation6], %s443
        %p445 = scmp.lt.s32.totalorder %s27, 1
        %s446 = scalar_select %p445, %s27, 1
        %s447 = smul.addr %s446, 32
        %s448 = smul.addr %s447, 8
        %s449 = scalar_lea.vmem %s0, %s448
        %p450 = scmp.lt.s32.totalorder %s27, 1
        %s451 = scalar_select %p450, %s27, 1
        %s452 = scalar_lea.vmem %s1, %s451
        %vm454 = vcmask 261120
        %455 = vst.msk [vmem:[#allocation2] sm:$0xff] %vm454, 0
        %456 = vst.msk [vmem:[#allocation2 + $0x8] sm:$0xff] %vm454, 0
        %457 = vst.msk [vmem:[#allocation2 + $0x90] sm:$0xff] %vm454, 0
        %458 = vst.msk [vmem:[#allocation2 + $0x98] sm:$0xff] %vm454, 0
        %vm459 = vcmask 523264
        %460 = vst.msk [vmem:[#allocation3] sm:$0xff] %vm459, 0
        %461 = vst.msk [vmem:[#allocation3 + $0x8] sm:$0xff] %vm459, 0
        %462 = vst.msk [vmem:[#allocation3 + $0x90] sm:$0xff] %vm459, 0
        %463 = vst.msk [vmem:[#allocation3 + $0x98] sm:$0xff] %vm459, 0
        %v464 = vld [vmem:[%s449] sm:$0xff]
        %v465 = vld [vmem:[%s449 + $0x8] sm:$0xff]
        %v466 = vld [vmem:[%s449 + $0x10] sm:$0xff]
        %v467 = vld [vmem:[%s449 + $0x18] sm:$0xff]
        %v468 = vld [vmem:[%s449 + $0x20] sm:$0xff]
        %v469 = vld [vmem:[%s449 + $0x28] sm:$0xff]
        %v470 = vld [vmem:[%s449 + $0x30] sm:$0xff]
        %v471 = vld [vmem:[%s449 + $0x38] sm:$0xff]
        %v472 = vld [vmem:[%s449 + $0x40] sm:$0xff]
        %v473 = vld [vmem:[%s449 + $0x48] sm:$0xff]
        %v474 = vld [vmem:[%s449 + $0x50] sm:$0xff]
        %v475 = vld [vmem:[%s449 + $0x58] sm:$0xff]
        %v476 = vld [vmem:[%s449 + $0x60] sm:$0xff]
        %v477 = vld [vmem:[%s449 + $0x68] sm:$0xff]
        %v478 = vld [vmem:[%s449 + $0x70] sm:$0xff]
        %v479 = vld [vmem:[%s449 + $0x78] sm:$0xff]
        %v480 = vld [vmem:[%s449 + $0x80] sm:$0xff]
        %v481 = vld [vmem:[%s449 + $0x88] sm:$0xff]
        %v482 = vld [vmem:[%s449 + $0x90] sm:$0xff]
        %v483 = vld [vmem:[%s449 + $0x98] sm:$0xff]
        %v484 = vld [vmem:[%s449 + $0xa0] sm:$0xff]
        %v485 = vld [vmem:[%s449 + $0xa8] sm:$0xff]
        %v486 = vld [vmem:[%s449 + $0xb0] sm:$0xff]
        %v487 = vld [vmem:[%s449 + $0xb8] sm:$0xff]
        %v488 = vld [vmem:[%s449 + $0xc0] sm:$0xff]
        %v489 = vld [vmem:[%s449 + $0xc8] sm:$0xff]
        %v490 = vld [vmem:[%s449 + $0xd0] sm:$0xff]
        %v491 = vld [vmem:[%s449 + $0xd8] sm:$0xff]
        %v492 = vld [vmem:[%s449 + $0xe0] sm:$0xff]
        %v493 = vld [vmem:[%s449 + $0xe8] sm:$0xff]
        %v494 = vld [vmem:[%s449 + $0xf0] sm:$0xff]
        %v495 = vld [vmem:[%s449 + $0xf8] sm:$0xff]
        %v496 = vlaneseq
        %v497 = vshrl.u32 %v496, 7
        %v498 = vadd.s32 %v497, 8
        %v499 = vadd.s32 %v497, 16
        %v500 = vadd.s32 %v497, 24
        %v501 = vadd.s32 %v497, 32
        %v502 = vadd.s32 %v497, 40
        %v503 = vadd.s32 %v497, 48
        %v504 = vadd.s32 %v497, 56
        %v505 = vadd.s32 %v497, 64
        %v506 = vadd.s32 %v497, 72
        %v507 = vadd.s32 %v497, 80
        %v508 = vadd.s32 %v497, 88
        %v509 = vadd.s32 %v497, 96
        %v510 = vadd.s32 %v497, 104
        %v511 = vadd.s32 %v497, 112
        %v512 = vadd.s32 %v497, 120
        %v513 = vadd.s32 %v497, 128
        %v514 = vadd.s32 %v497, 136
        %v515 = vadd.s32 %v497, 144
        %v516 = vadd.s32 %v497, 152
        %v517 = vadd.s32 %v497, 160
        %v518 = vadd.s32 %v497, 168
        %v519 = vadd.s32 %v497, 176
        %v520 = vadd.s32 %v497, 184
        %v521 = vadd.s32 %v497, 192
        %v522 = vadd.s32 %v497, 200
        %v523 = vadd.s32 %v497, 208
        %v524 = vadd.s32 %v497, 216
        %v525 = vadd.s32 %v497, 224
        %v526 = vadd.s32 %v497, 232
        %v527 = vadd.s32 %v497, 240
        %v528 = vadd.s32 %v497, 248
        %vm529 = vcmp.lt.s32.totalorder %v497, 0
        %v530 = vsub.s32 0, %v497
        %v531 = vsel %vm529, %v530, %v497
        %v532 = vshrl.u32 %v531, 4
        %v533 = vand.u32 %v531, 15
        %v534 = vsub.s32 0, %v533
        %v535 = vsel %vm529, %v534, %v533
        %vm536 = vcmp.lt.s32.totalorder %v498, 0
        %v537 = vsub.s32 0, %v498
        %v538 = vsel %vm536, %v537, %v498
        %v539 = vshrl.u32 %v538, 4
        %v540 = vand.u32 %v538, 15
        %v541 = vsub.s32 0, %v540
        %v542 = vsel %vm536, %v541, %v540
        %vm543 = vcmp.lt.s32.totalorder %v499, 0
        %v544 = vsub.s32 0, %v499
        %v545 = vsel %vm543, %v544, %v499
        %v546 = vshrl.u32 %v545, 4
        %v547 = vand.u32 %v545, 15
        %v548 = vsub.s32 0, %v547
        %v549 = vsel %vm543, %v548, %v547
        %vm550 = vcmp.lt.s32.totalorder %v500, 0
        %v551 = vsub.s32 0, %v500
        %v552 = vsel %vm550, %v551, %v500
        %v553 = vshrl.u32 %v552, 4
        %v554 = vand.u32 %v552, 15
        %v555 = vsub.s32 0, %v554
        %v556 = vsel %vm550, %v555, %v554
        %vm557 = vcmp.lt.s32.totalorder %v501, 0
        %v558 = vsub.s32 0, %v501
        %v559 = vsel %vm557, %v558, %v501
        %v560 = vshrl.u32 %v559, 4
        %v561 = vand.u32 %v559, 15
        %v562 = vsub.s32 0, %v561
        %v563 = vsel %vm557, %v562, %v561
        %vm564 = vcmp.lt.s32.totalorder %v502, 0
        %v565 = vsub.s32 0, %v502
        %v566 = vsel %vm564, %v565, %v502
        %v567 = vshrl.u32 %v566, 4
        %v568 = vand.u32 %v566, 15
        %v569 = vsub.s32 0, %v568
        %v570 = vsel %vm564, %v569, %v568
        %vm571 = vcmp.lt.s32.totalorder %v503, 0
        %v572 = vsub.s32 0, %v503
        %v573 = vsel %vm571, %v572, %v503
        %v574 = vshrl.u32 %v573, 4
        %v575 = vand.u32 %v573, 15
        %v576 = vsub.s32 0, %v575
        %v577 = vsel %vm571, %v576, %v575
        %vm578 = vcmp.lt.s32.totalorder %v504, 0
        %v579 = vsub.s32 0, %v504
        %v580 = vsel %vm578, %v579, %v504
        %v581 = vshrl.u32 %v580, 4
        %v582 = vand.u32 %v580, 15
        %v583 = vsub.s32 0, %v582
        %v584 = vsel %vm578, %v583, %v582
        %vm585 = vcmp.lt.s32.totalorder %v505, 0
        %v586 = vsub.s32 0, %v505
        %v587 = vsel %vm585, %v586, %v505
        %v588 = vshrl.u32 %v587, 4
        %v589 = vand.u32 %v587, 15
        %v590 = vsub.s32 0, %v589
        %v591 = vsel %vm585, %v590, %v589
        %vm592 = vcmp.lt.s32.totalorder %v506, 0
        %v593 = vsub.s32 0, %v506
        %v594 = vsel %vm592, %v593, %v506
        %v595 = vshrl.u32 %v594, 4
        %v596 = vand.u32 %v594, 15
        %v597 = vsub.s32 0, %v596
        %v598 = vsel %vm592, %v597, %v596
        %vm599 = vcmp.lt.s32.totalorder %v507, 0
        %v600 = vsub.s32 0, %v507
        %v601 = vsel %vm599, %v600, %v507
        %v602 = vshrl.u32 %v601, 4
        %v603 = vand.u32 %v601, 15
        %v604 = vsub.s32 0, %v603
        %v605 = vsel %vm599, %v604, %v603
        %vm606 = vcmp.lt.s32.totalorder %v508, 0
        %v607 = vsub.s32 0, %v508
        %v608 = vsel %vm606, %v607, %v508
        %v609 = vshrl.u32 %v608, 4
        %v610 = vand.u32 %v608, 15
        %v611 = vsub.s32 0, %v610
        %v612 = vsel %vm606, %v611, %v610
        %vm613 = vcmp.lt.s32.totalorder %v509, 0
        %v614 = vsub.s32 0, %v509
        %v615 = vsel %vm613, %v614, %v509
        %v616 = vshrl.u32 %v615, 4
        %v617 = vand.u32 %v615, 15
        %v618 = vsub.s32 0, %v617
        %v619 = vsel %vm613, %v618, %v617
        %vm620 = vcmp.lt.s32.totalorder %v510, 0
        %v621 = vsub.s32 0, %v510
        %v622 = vsel %vm620, %v621, %v510
        %v623 = vshrl.u32 %v622, 4
        %v624 = vand.u32 %v622, 15
        %v625 = vsub.s32 0, %v624
        %v626 = vsel %vm620, %v625, %v624
        %vm627 = vcmp.lt.s32.totalorder %v511, 0
        %v628 = vsub.s32 0, %v511
        %v629 = vsel %vm627, %v628, %v511
        %v630 = vshrl.u32 %v629, 4
        %v631 = vand.u32 %v629, 15
        %v632 = vsub.s32 0, %v631
        %v633 = vsel %vm627, %v632, %v631
        %vm634 = vcmp.lt.s32.totalorder %v512, 0
        %v635 = vsub.s32 0, %v512
        %v636 = vsel %vm634, %v635, %v512
        %v637 = vshrl.u32 %v636, 4
        %v638 = vand.u32 %v636, 15
        %v639 = vsub.s32 0, %v638
        %v640 = vsel %vm634, %v639, %v638
        %vm641 = vcmp.lt.s32.totalorder %v513, 0
        %v642 = vsub.s32 0, %v513
        %v643 = vsel %vm641, %v642, %v513
        %v644 = vshrl.u32 %v643, 4
        %v645 = vand.u32 %v643, 15
        %v646 = vsub.s32 0, %v645
        %v647 = vsel %vm641, %v646, %v645
        %vm648 = vcmp.lt.s32.totalorder %v514, 0
        %v649 = vsub.s32 0, %v514
        %v650 = vsel %vm648, %v649, %v514
        %v651 = vshrl.u32 %v650, 4
        %v652 = vand.u32 %v650, 15
        %v653 = vsub.s32 0, %v652
        %v654 = vsel %vm648, %v653, %v652
        %vm655 = vcmp.lt.s32.totalorder %v515, 0
        %v656 = vsub.s32 0, %v515
        %v657 = vsel %vm655, %v656, %v515
        %v658 = vshrl.u32 %v657, 4
        %v659 = vand.u32 %v657, 15
        %v660 = vsub.s32 0, %v659
        %v661 = vsel %vm655, %v660, %v659
        %vm662 = vcmp.lt.s32.totalorder %v516, 0
        %v663 = vsub.s32 0, %v516
        %v664 = vsel %vm662, %v663, %v516
        %v665 = vshrl.u32 %v664, 4
        %v666 = vand.u32 %v664, 15
        %v667 = vsub.s32 0, %v666
        %v668 = vsel %vm662, %v667, %v666
        %vm669 = vcmp.lt.s32.totalorder %v517, 0
        %v670 = vsub.s32 0, %v517
        %v671 = vsel %vm669, %v670, %v517
        %v672 = vshrl.u32 %v671, 4
        %v673 = vand.u32 %v671, 15
        %v674 = vsub.s32 0, %v673
        %v675 = vsel %vm669, %v674, %v673
        %vm676 = vcmp.lt.s32.totalorder %v518, 0
        %v677 = vsub.s32 0, %v518
        %v678 = vsel %vm676, %v677, %v518
        %v679 = vshrl.u32 %v678, 4
        %v680 = vand.u32 %v678, 15
        %v681 = vsub.s32 0, %v680
        %v682 = vsel %vm676, %v681, %v680
        %vm683 = vcmp.lt.s32.totalorder %v519, 0
        %v684 = vsub.s32 0, %v519
        %v685 = vsel %vm683, %v684, %v519
        %v686 = vshrl.u32 %v685, 4
        %v687 = vand.u32 %v685, 15
        %v688 = vsub.s32 0, %v687
        %v689 = vsel %vm683, %v688, %v687
        %vm690 = vcmp.lt.s32.totalorder %v520, 0
        %v691 = vsub.s32 0, %v520
        %v692 = vsel %vm690, %v691, %v520
        %v693 = vshrl.u32 %v692, 4
        %v694 = vand.u32 %v692, 15
        %v695 = vsub.s32 0, %v694
        %v696 = vsel %vm690, %v695, %v694
        %vm697 = vcmp.lt.s32.totalorder %v521, 0
        %v698 = vsub.s32 0, %v521
        %v699 = vsel %vm697, %v698, %v521
        %v700 = vshrl.u32 %v699, 4
        %v701 = vand.u32 %v699, 15
        %v702 = vsub.s32 0, %v701
        %v703 = vsel %vm697, %v702, %v701
        %vm704 = vcmp.lt.s32.totalorder %v522, 0
        %v705 = vsub.s32 0, %v522
        %v706 = vsel %vm704, %v705, %v522
        %v707 = vshrl.u32 %v706, 4
        %v708 = vand.u32 %v706, 15
        %v709 = vsub.s32 0, %v708
        %v710 = vsel %vm704, %v709, %v708
        %vm711 = vcmp.lt.s32.totalorder %v523, 0
        %v712 = vsub.s32 0, %v523
        %v713 = vsel %vm711, %v712, %v523
        %v714 = vshrl.u32 %v713, 4
        %v715 = vand.u32 %v713, 15
        %v716 = vsub.s32 0, %v715
        %v717 = vsel %vm711, %v716, %v715
        %vm718 = vcmp.lt.s32.totalorder %v524, 0
        %v719 = vsub.s32 0, %v524
        %v720 = vsel %vm718, %v719, %v524
        %v721 = vshrl.u32 %v720, 4
        %v722 = vand.u32 %v720, 15
        %v723 = vsub.s32 0, %v722
        %v724 = vsel %vm718, %v723, %v722
        %vm725 = vcmp.lt.s32.totalorder %v525, 0
        %v726 = vsub.s32 0, %v525
        %v727 = vsel %vm725, %v726, %v525
        %v728 = vshrl.u32 %v727, 4
        %v729 = vand.u32 %v727, 15
        %v730 = vsub.s32 0, %v729
        %v731 = vsel %vm725, %v730, %v729
        %vm732 = vcmp.lt.s32.totalorder %v526, 0
        %v733 = vsub.s32 0, %v526
        %v734 = vsel %vm732, %v733, %v526
        %v735 = vshrl.u32 %v734, 4
        %v736 = vand.u32 %v734, 15
        %v737 = vsub.s32 0, %v736
        %v738 = vsel %vm732, %v737, %v736
        %vm739 = vcmp.lt.s32.totalorder %v527, 0
        %v740 = vsub.s32 0, %v527
        %v741 = vsel %vm739, %v740, %v527
        %v742 = vshrl.u32 %v741, 4
        %v743 = vand.u32 %v741, 15
        %v744 = vsub.s32 0, %v743
        %v745 = vsel %vm739, %v744, %v743
        %vm746 = vcmp.lt.s32.totalorder %v528, 0
        %v747 = vsub.s32 0, %v528
        %v748 = vsel %vm746, %v747, %v528
        %v749 = vshrl.u32 %v748, 4
        %v750 = vand.u32 %v748, 15
        %v751 = vsub.s32 0, %v750
        %v752 = vsel %vm746, %v751, %v750
        %vm753 = vcmp.ne.s32.totalorder %v535, 0
        %vm754 = vcmp.ne.s32.totalorder %v542, 0
        %vm755 = vcmp.ne.s32.totalorder %v549, 0
        %vm756 = vcmp.ne.s32.totalorder %v556, 0
        %vm757 = vcmp.ne.s32.totalorder %v563, 0
        %vm758 = vcmp.ne.s32.totalorder %v570, 0
        %vm759 = vcmp.ne.s32.totalorder %v577, 0
        %vm760 = vcmp.ne.s32.totalorder %v584, 0
        %vm761 = vcmp.ne.s32.totalorder %v591, 0
        %vm762 = vcmp.ne.s32.totalorder %v598, 0
        %vm763 = vcmp.ne.s32.totalorder %v605, 0
        %vm764 = vcmp.ne.s32.totalorder %v612, 0
        %vm765 = vcmp.ne.s32.totalorder %v619, 0
        %vm766 = vcmp.ne.s32.totalorder %v626, 0
        %vm767 = vcmp.ne.s32.totalorder %v633, 0
        %vm768 = vcmp.ne.s32.totalorder %v640, 0
        %vm769 = vcmp.ne.s32.totalorder %v647, 0
        %vm770 = vcmp.ne.s32.totalorder %v654, 0
        %vm771 = vcmp.ne.s32.totalorder %v661, 0
        %vm772 = vcmp.ne.s32.totalorder %v668, 0
        %vm773 = vcmp.ne.s32.totalorder %v675, 0
        %vm774 = vcmp.ne.s32.totalorder %v682, 0
        %vm775 = vcmp.ne.s32.totalorder %v689, 0
        %vm776 = vcmp.ne.s32.totalorder %v696, 0
        %vm777 = vcmp.ne.s32.totalorder %v703, 0
        %vm778 = vcmp.ne.s32.totalorder %v710, 0
        %vm779 = vcmp.ne.s32.totalorder %v717, 0
        %vm780 = vcmp.ne.s32.totalorder %v724, 0
        %vm781 = vcmp.ne.s32.totalorder %v731, 0
        %vm782 = vcmp.ne.s32.totalorder %v738, 0
        %vm783 = vcmp.ne.s32.totalorder %v745, 0
        %vm784 = vcmp.ne.s32.totalorder %v752, 0
        %vm785 = vcmp.lt.s32.totalorder %v535, 0
        %vm786 = vcmp.lt.s32.totalorder %v542, 0
        %vm787 = vcmp.lt.s32.totalorder %v549, 0
        %vm788 = vcmp.lt.s32.totalorder %v556, 0
        %vm789 = vcmp.lt.s32.totalorder %v563, 0
        %vm790 = vcmp.lt.s32.totalorder %v570, 0
        %vm791 = vcmp.lt.s32.totalorder %v577, 0
        %vm792 = vcmp.lt.s32.totalorder %v584, 0
        %vm793 = vcmp.lt.s32.totalorder %v591, 0
        %vm794 = vcmp.lt.s32.totalorder %v598, 0
        %vm795 = vcmp.lt.s32.totalorder %v605, 0
        %vm796 = vcmp.lt.s32.totalorder %v612, 0
        %vm797 = vcmp.lt.s32.totalorder %v619, 0
        %vm798 = vcmp.lt.s32.totalorder %v626, 0
        %vm799 = vcmp.lt.s32.totalorder %v633, 0
        %vm800 = vcmp.lt.s32.totalorder %v640, 0
        %vm801 = vcmp.lt.s32.totalorder %v647, 0
        %vm802 = vcmp.lt.s32.totalorder %v654, 0
        %vm803 = vcmp.lt.s32.totalorder %v661, 0
        %vm804 = vcmp.lt.s32.totalorder %v668, 0
        %vm805 = vcmp.lt.s32.totalorder %v675, 0
        %vm806 = vcmp.lt.s32.totalorder %v682, 0
        %vm807 = vcmp.lt.s32.totalorder %v689, 0
        %vm808 = vcmp.lt.s32.totalorder %v696, 0
        %vm809 = vcmp.lt.s32.totalorder %v703, 0
        %vm810 = vcmp.lt.s32.totalorder %v710, 0
        %vm811 = vcmp.lt.s32.totalorder %v717, 0
        %vm812 = vcmp.lt.s32.totalorder %v724, 0
        %vm813 = vcmp.lt.s32.totalorder %v731, 0
        %vm814 = vcmp.lt.s32.totalorder %v738, 0
        %vm815 = vcmp.lt.s32.totalorder %v745, 0
        %vm816 = vcmp.lt.s32.totalorder %v752, 0
        %vm817 = vmand %vm785, %vm753
        %vm818 = vmand %vm786, %vm754
        %vm819 = vmand %vm787, %vm755
        %vm820 = vmand %vm788, %vm756
        %vm821 = vmand %vm789, %vm757
        %vm822 = vmand %vm790, %vm758
        %vm823 = vmand %vm791, %vm759
        %vm824 = vmand %vm792, %vm760
        %vm825 = vmand %vm793, %vm761
        %vm826 = vmand %vm794, %vm762
        %vm827 = vmand %vm795, %vm763
        %vm828 = vmand %vm796, %vm764
        %vm829 = vmand %vm797, %vm765
        %vm830 = vmand %vm798, %vm766
        %vm831 = vmand %vm799, %vm767
        %vm832 = vmand %vm800, %vm768
        %vm833 = vmand %vm801, %vm769
        %vm834 = vmand %vm802, %vm770
        %vm835 = vmand %vm803, %vm771
        %vm836 = vmand %vm804, %vm772
        %vm837 = vmand %vm805, %vm773
        %vm838 = vmand %vm806, %vm774
        %vm839 = vmand %vm807, %vm775
        %vm840 = vmand %vm808, %vm776
        %vm841 = vmand %vm809, %vm777
        %vm842 = vmand %vm810, %vm778
        %vm843 = vmand %vm811, %vm779
        %vm844 = vmand %vm812, %vm780
        %vm845 = vmand %vm813, %vm781
        %vm846 = vmand %vm814, %vm782
        %vm847 = vmand %vm815, %vm783
        %vm848 = vmand %vm816, %vm784
        %v849 = vadd.s32 %v535, 16
        %v850 = vadd.s32 %v542, 16
        %v851 = vadd.s32 %v549, 16
        %v852 = vadd.s32 %v556, 16
        %v853 = vadd.s32 %v563, 16
        %v854 = vadd.s32 %v570, 16
        %v855 = vadd.s32 %v577, 16
        %v856 = vadd.s32 %v584, 16
        %v857 = vadd.s32 %v591, 16
        %v858 = vadd.s32 %v598, 16
        %v859 = vadd.s32 %v605, 16
        %v860 = vadd.s32 %v612, 16
        %v861 = vadd.s32 %v619, 16
        %v862 = vadd.s32 %v626, 16
        %v863 = vadd.s32 %v633, 16
        %v864 = vadd.s32 %v640, 16
        %v865 = vadd.s32 %v647, 16
        %v866 = vadd.s32 %v654, 16
        %v867 = vadd.s32 %v661, 16
        %v868 = vadd.s32 %v668, 16
        %v869 = vadd.s32 %v675, 16
        %v870 = vadd.s32 %v682, 16
        %v871 = vadd.s32 %v689, 16
        %v872 = vadd.s32 %v696, 16
        %v873 = vadd.s32 %v703, 16
        %v874 = vadd.s32 %v710, 16
        %v875 = vadd.s32 %v717, 16
        %v876 = vadd.s32 %v724, 16
        %v877 = vadd.s32 %v731, 16
        %v878 = vadd.s32 %v738, 16
        %v879 = vadd.s32 %v745, 16
        %v880 = vadd.s32 %v752, 16
        %v881 = vsel %vm817, %v849, %v535
        %v882 = vsel %vm818, %v850, %v542
        %v883 = vsel %vm819, %v851, %v549
        %v884 = vsel %vm820, %v852, %v556
        %v885 = vsel %vm821, %v853, %v563
        %v886 = vsel %vm822, %v854, %v570
        %v887 = vsel %vm823, %v855, %v577
        %v888 = vsel %vm824, %v856, %v584
        %v889 = vsel %vm825, %v857, %v591
        %v890 = vsel %vm826, %v858, %v598
        %v891 = vsel %vm827, %v859, %v605
        %v892 = vsel %vm828, %v860, %v612
        %v893 = vsel %vm829, %v861, %v619
        %v894 = vsel %vm830, %v862, %v626
        %v895 = vsel %vm831, %v863, %v633
        %v896 = vsel %vm832, %v864, %v640
        %v897 = vsel %vm833, %v865, %v647
        %v898 = vsel %vm834, %v866, %v654
        %v899 = vsel %vm835, %v867, %v661
        %v900 = vsel %vm836, %v868, %v668
        %v901 = vsel %vm837, %v869, %v675
        %v902 = vsel %vm838, %v870, %v682
        %v903 = vsel %vm839, %v871, %v689
        %v904 = vsel %vm840, %v872, %v696
        %v905 = vsel %vm841, %v873, %v703
        %v906 = vsel %vm842, %v874, %v710
        %v907 = vsel %vm843, %v875, %v717
        %v908 = vsel %vm844, %v876, %v724
        %v909 = vsel %vm845, %v877, %v731
        %v910 = vsel %vm846, %v878, %v738
        %v911 = vsel %vm847, %v879, %v745
        %v912 = vsel %vm848, %v880, %v752
        %vm913 = vcmp.ne.s32.totalorder %v881, 0
        %vm914 = vcmp.ne.s32.totalorder %v882, 0
        %vm915 = vcmp.ne.s32.totalorder %v883, 0
        %vm916 = vcmp.ne.s32.totalorder %v884, 0
        %vm917 = vcmp.ne.s32.totalorder %v885, 0
        %vm918 = vcmp.ne.s32.totalorder %v886, 0
        %vm919 = vcmp.ne.s32.totalorder %v887, 0
        %vm920 = vcmp.ne.s32.totalorder %v888, 0
        %vm921 = vcmp.ne.s32.totalorder %v889, 0
        %vm922 = vcmp.ne.s32.totalorder %v890, 0
        %vm923 = vcmp.ne.s32.totalorder %v891, 0
        %vm924 = vcmp.ne.s32.totalorder %v892, 0
        %vm925 = vcmp.ne.s32.totalorder %v893, 0
        %vm926 = vcmp.ne.s32.totalorder %v894, 0
        %vm927 = vcmp.ne.s32.totalorder %v895, 0
        %vm928 = vcmp.ne.s32.totalorder %v896, 0
        %vm929 = vcmp.ne.s32.totalorder %v897, 0
        %vm930 = vcmp.ne.s32.totalorder %v898, 0
        %vm931 = vcmp.ne.s32.totalorder %v899, 0
        %vm932 = vcmp.ne.s32.totalorder %v900, 0
        %vm933 = vcmp.ne.s32.totalorder %v901, 0
        %vm934 = vcmp.ne.s32.totalorder %v902, 0
        %vm935 = vcmp.ne.s32.totalorder %v903, 0
        %vm936 = vcmp.ne.s32.totalorder %v904, 0
        %vm937 = vcmp.ne.s32.totalorder %v905, 0
        %vm938 = vcmp.ne.s32.totalorder %v906, 0
        %vm939 = vcmp.ne.s32.totalorder %v907, 0
        %vm940 = vcmp.ne.s32.totalorder %v908, 0
        %vm941 = vcmp.ne.s32.totalorder %v909, 0
        %vm942 = vcmp.ne.s32.totalorder %v910, 0
        %vm943 = vcmp.ne.s32.totalorder %v911, 0
        %vm944 = vcmp.ne.s32.totalorder %v912, 0
        %v945 = vsel %vm913, 1, 0
        %v946 = vsel %vm914, 1, 0
        %v947 = vsel %vm915, 1, 0
        %v948 = vsel %vm916, 1, 0
        %v949 = vsel %vm917, 1, 0
        %v950 = vsel %vm918, 1, 0
        %v951 = vsel %vm919, 1, 0
        %v952 = vsel %vm920, 1, 0
        %v953 = vsel %vm921, 1, 0
        %v954 = vsel %vm922, 1, 0
        %v955 = vsel %vm923, 1, 0
        %v956 = vsel %vm924, 1, 0
        %v957 = vsel %vm925, 1, 0
        %v958 = vsel %vm926, 1, 0
        %v959 = vsel %vm927, 1, 0
        %v960 = vsel %vm928, 1, 0
        %v961 = vsel %vm929, 1, 0
        %v962 = vsel %vm930, 1, 0
        %v963 = vsel %vm931, 1, 0
        %v964 = vsel %vm932, 1, 0
        %v965 = vsel %vm933, 1, 0
        %v966 = vsel %vm934, 1, 0
        %v967 = vsel %vm935, 1, 0
        %v968 = vsel %vm936, 1, 0
        %v969 = vsel %vm937, 1, 0
        %v970 = vsel %vm938, 1, 0
        %v971 = vsel %vm939, 1, 0
        %v972 = vsel %vm940, 1, 0
        %v973 = vsel %vm941, 1, 0
        %v974 = vsel %vm942, 1, 0
        %v975 = vsel %vm943, 1, 0
        %v976 = vsel %vm944, 1, 0
        %v977 = vcvt.s32.f32 %v945
        %v978 = vcvt.s32.f32 %v946
        %v979 = vcvt.s32.f32 %v947
        %v980 = vcvt.s32.f32 %v948
        %v981 = vcvt.s32.f32 %v949
        %v982 = vcvt.s32.f32 %v950
        %v983 = vcvt.s32.f32 %v951
        %v984 = vcvt.s32.f32 %v952
        %v985 = vcvt.s32.f32 %v953
        %v986 = vcvt.s32.f32 %v954
        %v987 = vcvt.s32.f32 %v955
        %v988 = vcvt.s32.f32 %v956
        %v989 = vcvt.s32.f32 %v957
        %v990 = vcvt.s32.f32 %v958
        %v991 = vcvt.s32.f32 %v959
        %v992 = vcvt.s32.f32 %v960
        %v993 = vcvt.s32.f32 %v961
        %v994 = vcvt.s32.f32 %v962
        %v995 = vcvt.s32.f32 %v963
        %v996 = vcvt.s32.f32 %v964
        %v997 = vcvt.s32.f32 %v965
        %v998 = vcvt.s32.f32 %v966
        %v999 = vcvt.s32.f32 %v967
        %v1000 = vcvt.s32.f32 %v968
        %v1001 = vcvt.s32.f32 %v969
        %v1002 = vcvt.s32.f32 %v970
        %v1003 = vcvt.s32.f32 %v971
        %v1004 = vcvt.s32.f32 %v972
        %v1005 = vcvt.s32.f32 %v973
        %v1006 = vcvt.s32.f32 %v974
        %v1007 = vcvt.s32.f32 %v975
        %v1008 = vcvt.s32.f32 %v976
        %vm1009 = vcmp.ne.s32.totalorder %v881, 15
        %vm1010 = vcmp.ne.s32.totalorder %v882, 15
        %vm1011 = vcmp.ne.s32.totalorder %v883, 15
        %vm1012 = vcmp.ne.s32.totalorder %v884, 15
        %vm1013 = vcmp.ne.s32.totalorder %v885, 15
        %vm1014 = vcmp.ne.s32.totalorder %v886, 15
        %vm1015 = vcmp.ne.s32.totalorder %v887, 15
        %vm1016 = vcmp.ne.s32.totalorder %v888, 15
        %vm1017 = vcmp.ne.s32.totalorder %v889, 15
        %vm1018 = vcmp.ne.s32.totalorder %v890, 15
        %vm1019 = vcmp.ne.s32.totalorder %v891, 15
        %vm1020 = vcmp.ne.s32.totalorder %v892, 15
        %vm1021 = vcmp.ne.s32.totalorder %v893, 15
        %vm1022 = vcmp.ne.s32.totalorder %v894, 15
        %vm1023 = vcmp.ne.s32.totalorder %v895, 15
        %vm1024 = vcmp.ne.s32.totalorder %v896, 15
        %vm1025 = vcmp.ne.s32.totalorder %v897, 15
        %vm1026 = vcmp.ne.s32.totalorder %v898, 15
        %vm1027 = vcmp.ne.s32.totalorder %v899, 15
        %vm1028 = vcmp.ne.s32.totalorder %v900, 15
        %vm1029 = vcmp.ne.s32.totalorder %v901, 15
        %vm1030 = vcmp.ne.s32.totalorder %v902, 15
        %vm1031 = vcmp.ne.s32.totalorder %v903, 15
        %vm1032 = vcmp.ne.s32.totalorder %v904, 15
        %vm1033 = vcmp.ne.s32.totalorder %v905, 15
        %vm1034 = vcmp.ne.s32.totalorder %v906, 15
        %vm1035 = vcmp.ne.s32.totalorder %v907, 15
        %vm1036 = vcmp.ne.s32.totalorder %v908, 15
        %vm1037 = vcmp.ne.s32.totalorder %v909, 15
        %vm1038 = vcmp.ne.s32.totalorder %v910, 15
        %vm1039 = vcmp.ne.s32.totalorder %v911, 15
        %vm1040 = vcmp.ne.s32.totalorder %v912, 15
        %v1041 = vsel %vm1009, 1, 0
        %v1042 = vsel %vm1010, 1, 0
        %v1043 = vsel %vm1011, 1, 0
        %v1044 = vsel %vm1012, 1, 0
        %v1045 = vsel %vm1013, 1, 0
        %v1046 = vsel %vm1014, 1, 0
        %v1047 = vsel %vm1015, 1, 0
        %v1048 = vsel %vm1016, 1, 0
        %v1049 = vsel %vm1017, 1, 0
        %v1050 = vsel %vm1018, 1, 0
        %v1051 = vsel %vm1019, 1, 0
        %v1052 = vsel %vm1020, 1, 0
        %v1053 = vsel %vm1021, 1, 0
        %v1054 = vsel %vm1022, 1, 0
        %v1055 = vsel %vm1023, 1, 0
        %v1056 = vsel %vm1024, 1, 0
        %v1057 = vsel %vm1025, 1, 0
        %v1058 = vsel %vm1026, 1, 0
        %v1059 = vsel %vm1027, 1, 0
        %v1060 = vsel %vm1028, 1, 0
        %v1061 = vsel %vm1029, 1, 0
        %v1062 = vsel %vm1030, 1, 0
        %v1063 = vsel %vm1031, 1, 0
        %v1064 = vsel %vm1032, 1, 0
        %v1065 = vsel %vm1033, 1, 0
        %v1066 = vsel %vm1034, 1, 0
        %v1067 = vsel %vm1035, 1, 0
        %v1068 = vsel %vm1036, 1, 0
        %v1069 = vsel %vm1037, 1, 0
        %v1070 = vsel %vm1038, 1, 0
        %v1071 = vsel %vm1039, 1, 0
        %v1072 = vsel %vm1040, 1, 0
        %v1073 = vcvt.s32.f32 %v1041
        %v1074 = vcvt.s32.f32 %v1042
        %v1075 = vcvt.s32.f32 %v1043
        %v1076 = vcvt.s32.f32 %v1044
        %v1077 = vcvt.s32.f32 %v1045
        %v1078 = vcvt.s32.f32 %v1046
        %v1079 = vcvt.s32.f32 %v1047
        %v1080 = vcvt.s32.f32 %v1048
        %v1081 = vcvt.s32.f32 %v1049
        %v1082 = vcvt.s32.f32 %v1050
        %v1083 = vcvt.s32.f32 %v1051
        %v1084 = vcvt.s32.f32 %v1052
        %v1085 = vcvt.s32.f32 %v1053
        %v1086 = vcvt.s32.f32 %v1054
        %v1087 = vcvt.s32.f32 %v1055
        %v1088 = vcvt.s32.f32 %v1056
        %v1089 = vcvt.s32.f32 %v1057
        %v1090 = vcvt.s32.f32 %v1058
        %v1091 = vcvt.s32.f32 %v1059
        %v1092 = vcvt.s32.f32 %v1060
        %v1093 = vcvt.s32.f32 %v1061
        %v1094 = vcvt.s32.f32 %v1062
        %v1095 = vcvt.s32.f32 %v1063
        %v1096 = vcvt.s32.f32 %v1064
        %v1097 = vcvt.s32.f32 %v1065
        %v1098 = vcvt.s32.f32 %v1066
        %v1099 = vcvt.s32.f32 %v1067
        %v1100 = vcvt.s32.f32 %v1068
        %v1101 = vcvt.s32.f32 %v1069
        %v1102 = vcvt.s32.f32 %v1070
        %v1103 = vcvt.s32.f32 %v1071
        %v1104 = vcvt.s32.f32 %v1072
        %v1105 = vld [vmem:[%s2] sm:$0x1]
        %v1106 = vld [vmem:[%s3] sm:$0x1]
        %v1107 = vsel %vm454, %v464, 0.0
        %v1108 = vsel %vm454, %v465, 0.0
        %v1109 = vadd.f32 %v1107, %v1108
        %v1110 = vsel %vm454, %v466, 0.0
        %v1111 = vadd.f32 %v1109, %v1110
        %v1112 = vsel %vm454, %v467, 0.0
        %v1113 = vadd.f32 %v1111, %v1112
        %v1114 = vsel %vm454, %v468, 0.0
        %v1115 = vadd.f32 %v1113, %v1114
        %v1116 = vsel %vm454, %v469, 0.0
        %v1117 = vadd.f32 %v1115, %v1116
        %v1118 = vsel %vm454, %v470, 0.0
        %v1119 = vadd.f32 %v1117, %v1118
        %v1120 = vsel %vm454, %v471, 0.0
        %v1121 = vadd.f32 %v1119, %v1120
        %v1122 = vsel %vm454, %v472, 0.0
        %v1123 = vadd.f32 %v1121, %v1122
        %v1124 = vsel %vm454, %v473, 0.0
        %v1125 = vadd.f32 %v1123, %v1124
        %v1126 = vsel %vm454, %v474, 0.0
        %v1127 = vadd.f32 %v1125, %v1126
        %v1128 = vsel %vm454, %v475, 0.0
        %v1129 = vadd.f32 %v1127, %v1128
        %v1130 = vsel %vm454, %v476, 0.0
        %v1131 = vadd.f32 %v1129, %v1130
        %v1132 = vsel %vm454, %v477, 0.0
        %v1133 = vadd.f32 %v1131, %v1132
        %v1134 = vsel %vm454, %v478, 0.0
        %v1135 = vadd.f32 %v1133, %v1134
        %v1136 = vsel %vm454, %v479, 0.0
        %v1137 = vadd.f32 %v1135, %v1136
        %v1138 = vsel %vm454, %v480, 0.0
        %v1139 = vadd.f32 %v1137, %v1138
        %v1140 = vsel %vm454, %v481, 0.0
        %v1141 = vadd.f32 %v1139, %v1140
        %v1142 = vsel %vm454, %v482, 0.0
        %v1143 = vadd.f32 %v1141, %v1142
        %v1144 = vsel %vm454, %v483, 0.0
        %v1145 = vadd.f32 %v1143, %v1144
        %v1146 = vsel %vm454, %v484, 0.0
        %v1147 = vadd.f32 %v1145, %v1146
        %v1148 = vsel %vm454, %v485, 0.0
        %v1149 = vadd.f32 %v1147, %v1148
        %v1150 = vsel %vm454, %v486, 0.0
        %v1151 = vadd.f32 %v1149, %v1150
        %v1152 = vsel %vm454, %v487, 0.0
        %v1153 = vadd.f32 %v1151, %v1152
        %v1154 = vsel %vm454, %v488, 0.0
        %v1155 = vadd.f32 %v1153, %v1154
        %v1156 = vsel %vm454, %v489, 0.0
        %v1157 = vadd.f32 %v1155, %v1156
        %v1158 = vsel %vm454, %v490, 0.0
        %v1159 = vadd.f32 %v1157, %v1158
        %v1160 = vsel %vm454, %v491, 0.0
        %v1161 = vadd.f32 %v1159, %v1160
        %v1162 = vsel %vm454, %v492, 0.0
        %v1163 = vadd.f32 %v1161, %v1162
        %v1164 = vsel %vm454, %v493, 0.0
        %v1165 = vadd.f32 %v1163, %v1164
        %v1166 = vsel %vm454, %v494, 0.0
        %v1167 = vadd.f32 %v1165, %v1166
        %v1168 = vsel %vm454, %v495, 0.0
        %v1169 = vadd.f32 %v1167, %v1168
        %v1170 = vrot.slane %v1169, 4
        %v1171 = vadd.f32 %v1169, %v1170
        %v1172 = vrot.slane %v1171, 2
        %v1173 = vadd.f32 %v1171, %v1172
        %v1174 = vrot.slane %v1173, 1
        %v1175 = vadd.f32 %v1173, %v1174
        %v1176 = vmul.f32 %v1175, 0.00390625
        %v1177 = vsub.f32 %v464, %v1176
        %v1178 = vsub.f32 %v465, %v1176
        %v1179 = vsub.f32 %v466, %v1176
        %v1180 = vsub.f32 %v467, %v1176
        %v1181 = vsub.f32 %v468, %v1176
        %v1182 = vsub.f32 %v469, %v1176
        %v1183 = vsub.f32 %v470, %v1176
        %v1184 = vsub.f32 %v471, %v1176
        %v1185 = vsub.f32 %v472, %v1176
        %v1186 = vsub.f32 %v473, %v1176
        %v1187 = vsub.f32 %v474, %v1176
        %v1188 = vsub.f32 %v475, %v1176
        %v1189 = vsub.f32 %v476, %v1176
        %v1190 = vsub.f32 %v477, %v1176
        %v1191 = vsub.f32 %v478, %v1176
        %v1192 = vsub.f32 %v479, %v1176
        %v1193 = vsub.f32 %v480, %v1176
        %v1194 = vsub.f32 %v481, %v1176
        %v1195 = vsub.f32 %v482, %v1176
        %v1196 = vsub.f32 %v483, %v1176
        %v1197 = vsub.f32 %v484, %v1176
        %v1198 = vsub.f32 %v485, %v1176
        %v1199 = vsub.f32 %v486, %v1176
        %v1200 = vsub.f32 %v487, %v1176
        %v1201 = vsub.f32 %v488, %v1176
        %v1202 = vsub.f32 %v489, %v1176
        %v1203 = vsub.f32 %v490, %v1176
        %v1204 = vsub.f32 %v491, %v1176
        %v1205 = vsub.f32 %v492, %v1176
        %v1206 = vsub.f32 %v493, %v1176
        %v1207 = vsub.f32 %v494, %v1176
        %v1208 = vsub.f32 %v495, %v1176
        %v1209 = vmul.f32 %v1177, %v1177
        %v1210 = vmul.f32 %v1178, %v1178
        %v1211 = vmul.f32 %v1179, %v1179
        %v1212 = vmul.f32 %v1180, %v1180
        %v1213 = vmul.f32 %v1181, %v1181
        %v1214 = vmul.f32 %v1182, %v1182
        %v1215 = vmul.f32 %v1183, %v1183
        %v1216 = vmul.f32 %v1184, %v1184
        %v1217 = vmul.f32 %v1185, %v1185
        %v1218 = vmul.f32 %v1186, %v1186
        %v1219 = vmul.f32 %v1187, %v1187
        %v1220 = vmul.f32 %v1188, %v1188
        %v1221 = vmul.f32 %v1189, %v1189
        %v1222 = vmul.f32 %v1190, %v1190
        %v1223 = vmul.f32 %v1191, %v1191
        %v1224 = vmul.f32 %v1192, %v1192
        %v1225 = vmul.f32 %v1193, %v1193
        %v1226 = vmul.f32 %v1194, %v1194
        %v1227 = vmul.f32 %v1195, %v1195
        %v1228 = vmul.f32 %v1196, %v1196
        %v1229 = vmul.f32 %v1197, %v1197
        %v1230 = vmul.f32 %v1198, %v1198
        %v1231 = vmul.f32 %v1199, %v1199
        %v1232 = vmul.f32 %v1200, %v1200
        %v1233 = vmul.f32 %v1201, %v1201
        %v1234 = vmul.f32 %v1202, %v1202
        %v1235 = vmul.f32 %v1203, %v1203
        %v1236 = vmul.f32 %v1204, %v1204
        %v1237 = vmul.f32 %v1205, %v1205
        %v1238 = vmul.f32 %v1206, %v1206
        %v1239 = vmul.f32 %v1207, %v1207
        %v1240 = vmul.f32 %v1208, %v1208
        %v1241 = vsel %vm454, %v1209, 0.0
        %v1242 = vsel %vm454, %v1210, 0.0
        %v1243 = vadd.f32 %v1241, %v1242
        %v1244 = vsel %vm454, %v1211, 0.0
        %v1245 = vadd.f32 %v1243, %v1244
        %v1246 = vsel %vm454, %v1212, 0.0
        %v1247 = vadd.f32 %v1245, %v1246
        %v1248 = vsel %vm454, %v1213, 0.0
        %v1249 = vadd.f32 %v1247, %v1248
        %v1250 = vsel %vm454, %v1214, 0.0
        %v1251 = vadd.f32 %v1249, %v1250
        %v1252 = vsel %vm454, %v1215, 0.0
        %v1253 = vadd.f32 %v1251, %v1252
        %v1254 = vsel %vm454, %v1216, 0.0
        %v1255 = vadd.f32 %v1253, %v1254
        %v1256 = vsel %vm454, %v1217, 0.0
        %v1257 = vadd.f32 %v1255, %v1256
        %v1258 = vsel %vm454, %v1218, 0.0
        %v1259 = vadd.f32 %v1257, %v1258
        %v1260 = vsel %vm454, %v1219, 0.0
        %v1261 = vadd.f32 %v1259, %v1260
        %v1262 = vsel %vm454, %v1220, 0.0
        %v1263 = vadd.f32 %v1261, %v1262
        %v1264 = vsel %vm454, %v1221, 0.0
        %v1265 = vadd.f32 %v1263, %v1264
        %v1266 = vsel %vm454, %v1222, 0.0
        %v1267 = vadd.f32 %v1265, %v1266
        %v1268 = vsel %vm454, %v1223, 0.0
        %v1269 = vadd.f32 %v1267, %v1268
        %v1270 = vsel %vm454, %v1224, 0.0
        %v1271 = vadd.f32 %v1269, %v1270
        %v1272 = vsel %vm454, %v1225, 0.0
        %v1273 = vadd.f32 %v1271, %v1272
        %v1274 = vsel %vm454, %v1226, 0.0
        %v1275 = vadd.f32 %v1273, %v1274
        %v1276 = vsel %vm454, %v1227, 0.0
        %v1277 = vadd.f32 %v1275, %v1276
        %v1278 = vsel %vm454, %v1228, 0.0
        %v1279 = vadd.f32 %v1277, %v1278
        %v1280 = vsel %vm454, %v1229, 0.0
        %v1281 = vadd.f32 %v1279, %v1280
        %v1282 = vsel %vm454, %v1230, 0.0
        %v1283 = vadd.f32 %v1281, %v1282
        %v1284 = vsel %vm454, %v1231, 0.0
        %v1285 = vadd.f32 %v1283, %v1284
        %v1286 = vsel %vm454, %v1232, 0.0
        %v1287 = vadd.f32 %v1285, %v1286
        %v1288 = vsel %vm454, %v1233, 0.0
        %v1289 = vadd.f32 %v1287, %v1288
        %v1290 = vsel %vm454, %v1234, 0.0
        %v1291 = vadd.f32 %v1289, %v1290
        %v1292 = vsel %vm454, %v1235, 0.0
        %v1293 = vadd.f32 %v1291, %v1292
        %v1294 = vsel %vm454, %v1236, 0.0
        %v1295 = vadd.f32 %v1293, %v1294
        %v1296 = vsel %vm454, %v1237, 0.0
        %v1297 = vadd.f32 %v1295, %v1296
        %v1298 = vsel %vm454, %v1238, 0.0
        %v1299 = vadd.f32 %v1297, %v1298
        %v1300 = vsel %vm454, %v1239, 0.0
        %v1301 = vadd.f32 %v1299, %v1300
        %v1302 = vsel %vm454, %v1240, 0.0
        %v1303 = vadd.f32 %v1301, %v1302
        %v1304 = vrot.slane %v1303, 4
        %v1305 = vadd.f32 %v1303, %v1304
        %v1306 = vrot.slane %v1305, 2
        %v1307 = vadd.f32 %v1305, %v1306
        %v1308 = vrot.slane %v1307, 1
        %v1309 = vadd.f32 %v1307, %v1308
        %v1310 = vmul.f32 %v1309, 0.00390625
        %v1311 = vadd.f32 %v1310, 1e-05
        %v1312 = vrsqrt.pop %v1311
        %v1313 = vmul.f32 %v1177, %v1312
        %v1314 = vmul.f32 %v1178, %v1312
        %v1315 = vmul.f32 %v1179, %v1312
        %v1316 = vmul.f32 %v1180, %v1312
        %v1317 = vmul.f32 %v1181, %v1312
        %v1318 = vmul.f32 %v1182, %v1312
        %v1319 = vmul.f32 %v1183, %v1312
        %v1320 = vmul.f32 %v1184, %v1312
        %v1321 = vmul.f32 %v1185, %v1312
        %v1322 = vmul.f32 %v1186, %v1312
        %v1323 = vmul.f32 %v1187, %v1312
        %v1324 = vmul.f32 %v1188, %v1312
        %v1325 = vmul.f32 %v1189, %v1312
        %v1326 = vmul.f32 %v1190, %v1312
        %v1327 = vmul.f32 %v1191, %v1312
        %v1328 = vmul.f32 %v1192, %v1312
        %v1329 = vmul.f32 %v1193, %v1312
        %v1330 = vmul.f32 %v1194, %v1312
        %v1331 = vmul.f32 %v1195, %v1312
        %v1332 = vmul.f32 %v1196, %v1312
        %v1333 = vmul.f32 %v1197, %v1312
        %v1334 = vmul.f32 %v1198, %v1312
        %v1335 = vmul.f32 %v1199, %v1312
        %v1336 = vmul.f32 %v1200, %v1312
        %v1337 = vmul.f32 %v1201, %v1312
        %v1338 = vmul.f32 %v1202, %v1312
        %v1339 = vmul.f32 %v1203, %v1312
        %v1340 = vmul.f32 %v1204, %v1312
        %v1341 = vmul.f32 %v1205, %v1312
        %v1342 = vmul.f32 %v1206, %v1312
        %v1343 = vmul.f32 %v1207, %v1312
        %v1344 = vmul.f32 %v1208, %v1312
        %v1346 = vlaneseq
        %v1347 = vshrl.u32 %v1346, 7
        %v1348 = vsub.s32 0, %v1347
        %v1349 = vrot.slane %v1105, %v1348
        %v1351 = vmul.f32 %v1313, %v1349
        %v1352 = vmul.f32 %v1314, %v1349
        %v1353 = vmul.f32 %v1315, %v1349
        %v1354 = vmul.f32 %v1316, %v1349
        %v1355 = vmul.f32 %v1317, %v1349
        %v1356 = vmul.f32 %v1318, %v1349
        %v1357 = vmul.f32 %v1319, %v1349
        %v1358 = vmul.f32 %v1320, %v1349
        %v1359 = vmul.f32 %v1321, %v1349
        %v1360 = vmul.f32 %v1322, %v1349
        %v1361 = vmul.f32 %v1323, %v1349
        %v1362 = vmul.f32 %v1324, %v1349
        %v1363 = vmul.f32 %v1325, %v1349
        %v1364 = vmul.f32 %v1326, %v1349
        %v1365 = vmul.f32 %v1327, %v1349
        %v1366 = vmul.f32 %v1328, %v1349
        %v1367 = vmul.f32 %v1329, %v1349
        %v1368 = vmul.f32 %v1330, %v1349
        %v1369 = vmul.f32 %v1331, %v1349
        %v1370 = vmul.f32 %v1332, %v1349
        %v1371 = vmul.f32 %v1333, %v1349
        %v1372 = vmul.f32 %v1334, %v1349
        %v1373 = vmul.f32 %v1335, %v1349
        %v1374 = vmul.f32 %v1336, %v1349
        %v1375 = vmul.f32 %v1337, %v1349
        %v1376 = vmul.f32 %v1338, %v1349
        %v1377 = vmul.f32 %v1339, %v1349
        %v1378 = vmul.f32 %v1340, %v1349
        %v1379 = vmul.f32 %v1341, %v1349
        %v1380 = vmul.f32 %v1342, %v1349
        %v1381 = vmul.f32 %v1343, %v1349
        %v1382 = vmul.f32 %v1344, %v1349
        %v1384 = vlaneseq
        %v1385 = vshrl.u32 %v1384, 7
        %v1386 = vsub.s32 0, %v1385
        %v1387 = vrot.slane %v1106, %v1386
        %v1389 = vadd.f32 %v1351, %v1387
        %v1390 = vadd.f32 %v1352, %v1387
        %v1391 = vadd.f32 %v1353, %v1387
        %v1392 = vadd.f32 %v1354, %v1387
        %v1393 = vadd.f32 %v1355, %v1387
        %v1394 = vadd.f32 %v1356, %v1387
        %v1395 = vadd.f32 %v1357, %v1387
        %v1396 = vadd.f32 %v1358, %v1387
        %v1397 = vadd.f32 %v1359, %v1387
        %v1398 = vadd.f32 %v1360, %v1387
        %v1399 = vadd.f32 %v1361, %v1387
        %v1400 = vadd.f32 %v1362, %v1387
        %v1401 = vadd.f32 %v1363, %v1387
        %v1402 = vadd.f32 %v1364, %v1387
        %v1403 = vadd.f32 %v1365, %v1387
        %v1404 = vadd.f32 %v1366, %v1387
        %v1405 = vadd.f32 %v1367, %v1387
        %v1406 = vadd.f32 %v1368, %v1387
        %v1407 = vadd.f32 %v1369, %v1387
        %v1408 = vadd.f32 %v1370, %v1387
        %v1409 = vadd.f32 %v1371, %v1387
        %v1410 = vadd.f32 %v1372, %v1387
        %v1411 = vadd.f32 %v1373, %v1387
        %v1412 = vadd.f32 %v1374, %v1387
        %v1413 = vadd.f32 %v1375, %v1387
        %v1414 = vadd.f32 %v1376, %v1387
        %v1415 = vadd.f32 %v1377, %v1387
        %v1416 = vadd.f32 %v1378, %v1387
        %v1417 = vadd.f32 %v1379, %v1387
        %v1418 = vadd.f32 %v1380, %v1387
        %v1419 = vadd.f32 %v1381, %v1387
        %v1420 = vadd.f32 %v1382, %v1387
        %v1421 = vxor.u32 %v1389, 2147483648
        %v1422 = vxor.u32 %v1390, 2147483648
        %v1423 = vxor.u32 %v1391, 2147483648
        %v1424 = vxor.u32 %v1392, 2147483648
        %v1425 = vxor.u32 %v1393, 2147483648
        %v1426 = vxor.u32 %v1394, 2147483648
        %v1427 = vxor.u32 %v1395, 2147483648
        %v1428 = vxor.u32 %v1396, 2147483648
        %v1429 = vxor.u32 %v1397, 2147483648
        %v1430 = vxor.u32 %v1398, 2147483648
        %v1431 = vxor.u32 %v1399, 2147483648
        %v1432 = vxor.u32 %v1400, 2147483648
        %v1433 = vxor.u32 %v1401, 2147483648
        %v1434 = vxor.u32 %v1402, 2147483648
        %v1435 = vxor.u32 %v1403, 2147483648
        %v1436 = vxor.u32 %v1404, 2147483648
        %v1437 = vxor.u32 %v1405, 2147483648
        %v1438 = vxor.u32 %v1406, 2147483648
        %v1439 = vxor.u32 %v1407, 2147483648
        %v1440 = vxor.u32 %v1408, 2147483648
        %v1441 = vxor.u32 %v1409, 2147483648
        %v1442 = vxor.u32 %v1410, 2147483648
        %v1443 = vxor.u32 %v1411, 2147483648
        %v1444 = vxor.u32 %v1412, 2147483648
        %v1445 = vxor.u32 %v1413, 2147483648
        %v1446 = vxor.u32 %v1414, 2147483648
        %v1447 = vxor.u32 %v1415, 2147483648
        %v1448 = vxor.u32 %v1416, 2147483648
        %v1449 = vxor.u32 %v1417, 2147483648
        %v1450 = vxor.u32 %v1418, 2147483648
        %v1451 = vxor.u32 %v1419, 2147483648
        %v1452 = vxor.u32 %v1420, 2147483648
        %v1453 = vmul.f32 %v1421, 1.442695
        %v1454 = vpow.pop %v1453
        %v1455 = vmul.f32 %v1422, 1.442695
        %v1456 = vpow.pop %v1455
        %v1457 = vmul.f32 %v1423, 1.442695
        %v1458 = vpow.pop %v1457
        %v1459 = vmul.f32 %v1424, 1.442695
        %v1460 = vpow.pop %v1459
        %v1461 = vmul.f32 %v1425, 1.442695
        %v1462 = vpow.pop %v1461
        %v1463 = vmul.f32 %v1426, 1.442695
        %v1464 = vpow.pop %v1463
        %v1465 = vmul.f32 %v1427, 1.442695
        %v1466 = vpow.pop %v1465
        %v1467 = vmul.f32 %v1428, 1.442695
        %v1468 = vpow.pop %v1467
        %v1469 = vmul.f32 %v1429, 1.442695
        %v1470 = vpow.pop %v1469
        %v1471 = vmul.f32 %v1430, 1.442695
        %v1472 = vpow.pop %v1471
        %v1473 = vmul.f32 %v1431, 1.442695
        %v1474 = vpow.pop %v1473
        %v1475 = vmul.f32 %v1432, 1.442695
        %v1476 = vpow.pop %v1475
        %v1477 = vmul.f32 %v1433, 1.442695
        %v1478 = vpow.pop %v1477
        %v1479 = vmul.f32 %v1434, 1.442695
        %v1480 = vpow.pop %v1479
        %v1481 = vmul.f32 %v1435, 1.442695
        %v1482 = vpow.pop %v1481
        %v1483 = vmul.f32 %v1436, 1.442695
        %v1484 = vpow.pop %v1483
        %v1485 = vmul.f32 %v1437, 1.442695
        %v1486 = vpow.pop %v1485
        %v1487 = vmul.f32 %v1438, 1.442695
        %v1488 = vpow.pop %v1487
        %v1489 = vmul.f32 %v1439, 1.442695
        %v1490 = vpow.pop %v1489
        %v1491 = vmul.f32 %v1440, 1.442695
        %v1492 = vpow.pop %v1491
        %v1493 = vmul.f32 %v1441, 1.442695
        %v1494 = vpow.pop %v1493
        %v1495 = vmul.f32 %v1442, 1.442695
        %v1496 = vpow.pop %v1495
        %v1497 = vmul.f32 %v1443, 1.442695
        %v1498 = vpow.pop %v1497
        %v1499 = vmul.f32 %v1444, 1.442695
        %v1500 = vpow.pop %v1499
        %v1501 = vmul.f32 %v1445, 1.442695
        %v1502 = vpow.pop %v1501
        %v1503 = vmul.f32 %v1446, 1.442695
        %v1504 = vpow.pop %v1503
        %v1505 = vmul.f32 %v1447, 1.442695
        %v1506 = vpow.pop %v1505
        %v1507 = vmul.f32 %v1448, 1.442695
        %v1508 = vpow.pop %v1507
        %v1509 = vmul.f32 %v1449, 1.442695
        %v1510 = vpow.pop %v1509
        %v1511 = vmul.f32 %v1450, 1.442695
        %v1512 = vpow.pop %v1511
        %v1513 = vmul.f32 %v1451, 1.442695
        %v1514 = vpow.pop %v1513
        %v1515 = vmul.f32 %v1452, 1.442695
        %v1516 = vpow.pop %v1515
        %v1517 = vadd.f32 %v1454, 1.0
        %v1518 = vadd.f32 %v1456, 1.0
        %v1519 = vadd.f32 %v1458, 1.0
        %v1520 = vadd.f32 %v1460, 1.0
        %v1521 = vadd.f32 %v1462, 1.0
        %v1522 = vadd.f32 %v1464, 1.0
        %v1523 = vadd.f32 %v1466, 1.0
        %v1524 = vadd.f32 %v1468, 1.0
        %v1525 = vadd.f32 %v1470, 1.0
        %v1526 = vadd.f32 %v1472, 1.0
        %v1527 = vadd.f32 %v1474, 1.0
        %v1528 = vadd.f32 %v1476, 1.0
        %v1529 = vadd.f32 %v1478, 1.0
        %v1530 = vadd.f32 %v1480, 1.0
        %v1531 = vadd.f32 %v1482, 1.0
        %v1532 = vadd.f32 %v1484, 1.0
        %v1533 = vadd.f32 %v1486, 1.0
        %v1534 = vadd.f32 %v1488, 1.0
        %v1535 = vadd.f32 %v1490, 1.0
        %v1536 = vadd.f32 %v1492, 1.0
        %v1537 = vadd.f32 %v1494, 1.0
        %v1538 = vadd.f32 %v1496, 1.0
        %v1539 = vadd.f32 %v1498, 1.0
        %v1540 = vadd.f32 %v1500, 1.0
        %v1541 = vadd.f32 %v1502, 1.0
        %v1542 = vadd.f32 %v1504, 1.0
        %v1543 = vadd.f32 %v1506, 1.0
        %v1544 = vadd.f32 %v1508, 1.0
        %v1545 = vadd.f32 %v1510, 1.0
        %v1546 = vadd.f32 %v1512, 1.0
        %v1547 = vadd.f32 %v1514, 1.0
        %v1548 = vadd.f32 %v1516, 1.0
        %v1549 = vrcp.pop %v1517
        %v1550 = vmul.f32 1.0, %v1549
        %v1551 = vrcp.pop %v1518
        %v1552 = vmul.f32 1.0, %v1551
        %v1553 = vrcp.pop %v1519
        %v1554 = vmul.f32 1.0, %v1553
        %v1555 = vrcp.pop %v1520
        %v1556 = vmul.f32 1.0, %v1555
        %v1557 = vrcp.pop %v1521
        %v1558 = vmul.f32 1.0, %v1557
        %v1559 = vrcp.pop %v1522
        %v1560 = vmul.f32 1.0, %v1559
        %v1561 = vrcp.pop %v1523
        %v1562 = vmul.f32 1.0, %v1561
        %v1563 = vrcp.pop %v1524
        %v1564 = vmul.f32 1.0, %v1563
        %v1565 = vrcp.pop %v1525
        %v1566 = vmul.f32 1.0, %v1565
        %v1567 = vrcp.pop %v1526
        %v1568 = vmul.f32 1.0, %v1567
        %v1569 = vrcp.pop %v1527
        %v1570 = vmul.f32 1.0, %v1569
        %v1571 = vrcp.pop %v1528
        %v1572 = vmul.f32 1.0, %v1571
        %v1573 = vrcp.pop %v1529
        %v1574 = vmul.f32 1.0, %v1573
        %v1575 = vrcp.pop %v1530
        %v1576 = vmul.f32 1.0, %v1575
        %v1577 = vrcp.pop %v1531
        %v1578 = vmul.f32 1.0, %v1577
        %v1579 = vrcp.pop %v1532
        %v1580 = vmul.f32 1.0, %v1579
        %v1581 = vrcp.pop %v1533
        %v1582 = vmul.f32 1.0, %v1581
        %v1583 = vrcp.pop %v1534
        %v1584 = vmul.f32 1.0, %v1583
        %v1585 = vrcp.pop %v1535
        %v1586 = vmul.f32 1.0, %v1585
        %v1587 = vrcp.pop %v1536
        %v1588 = vmul.f32 1.0, %v1587
        %v1589 = vrcp.pop %v1537
        %v1590 = vmul.f32 1.0, %v1589
        %v1591 = vrcp.pop %v1538
        %v1592 = vmul.f32 1.0, %v1591
        %v1593 = vrcp.pop %v1539
        %v1594 = vmul.f32 1.0, %v1593
        %v1595 = vrcp.pop %v1540
        %v1596 = vmul.f32 1.0, %v1595
        %v1597 = vrcp.pop %v1541
        %v1598 = vmul.f32 1.0, %v1597
        %v1599 = vrcp.pop %v1542
        %v1600 = vmul.f32 1.0, %v1599
        %v1601 = vrcp.pop %v1543
        %v1602 = vmul.f32 1.0, %v1601
        %v1603 = vrcp.pop %v1544
        %v1604 = vmul.f32 1.0, %v1603
        %v1605 = vrcp.pop %v1545
        %v1606 = vmul.f32 1.0, %v1605
        %v1607 = vrcp.pop %v1546
        %v1608 = vmul.f32 1.0, %v1607
        %v1609 = vrcp.pop %v1547
        %v1610 = vmul.f32 1.0, %v1609
        %v1611 = vrcp.pop %v1548
        %v1612 = vmul.f32 1.0, %v1611
        %v1613 = vmul.f32 %v1389, %v1550
        %v1614 = vmul.f32 %v1390, %v1552
        %v1615 = vmul.f32 %v1391, %v1554
        %v1616 = vmul.f32 %v1392, %v1556
        %v1617 = vmul.f32 %v1393, %v1558
        %v1618 = vmul.f32 %v1394, %v1560
        %v1619 = vmul.f32 %v1395, %v1562
        %v1620 = vmul.f32 %v1396, %v1564
        %v1621 = vmul.f32 %v1397, %v1566
        %v1622 = vmul.f32 %v1398, %v1568
        %v1623 = vmul.f32 %v1399, %v1570
        %v1624 = vmul.f32 %v1400, %v1572
        %v1625 = vmul.f32 %v1401, %v1574
        %v1626 = vmul.f32 %v1402, %v1576
        %v1627 = vmul.f32 %v1403, %v1578
        %v1628 = vmul.f32 %v1404, %v1580
        %v1629 = vmul.f32 %v1405, %v1582
        %v1630 = vmul.f32 %v1406, %v1584
        %v1631 = vmul.f32 %v1407, %v1586
        %v1632 = vmul.f32 %v1408, %v1588
        %v1633 = vmul.f32 %v1409, %v1590
        %v1634 = vmul.f32 %v1410, %v1592
        %v1635 = vmul.f32 %v1411, %v1594
        %v1636 = vmul.f32 %v1412, %v1596
        %v1637 = vmul.f32 %v1413, %v1598
        %v1638 = vmul.f32 %v1414, %v1600
        %v1639 = vmul.f32 %v1415, %v1602
        %v1640 = vmul.f32 %v1416, %v1604
        %v1641 = vmul.f32 %v1417, %v1606
        %v1642 = vmul.f32 %v1418, %v1608
        %v1643 = vmul.f32 %v1419, %v1610
        %v1644 = vmul.f32 %v1420, %v1612
        %v1645 = vpack.c.bf16 %v1614, %v1613
        %v1646 = vpack.c.bf16 %v1616, %v1615
        %v1647 = vpack.c.bf16 %v1618, %v1617
        %v1648 = vpack.c.bf16 %v1620, %v1619
        %v1649 = vpack.c.bf16 %v1622, %v1621
        %v1650 = vpack.c.bf16 %v1624, %v1623
        %v1651 = vpack.c.bf16 %v1626, %v1625
        %v1652 = vpack.c.bf16 %v1628, %v1627
        %v1653 = vpack.c.bf16 %v1630, %v1629
        %v1654 = vpack.c.bf16 %v1632, %v1631
        %v1655 = vpack.c.bf16 %v1634, %v1633
        %v1656 = vpack.c.bf16 %v1636, %v1635
        %v1657 = vpack.c.bf16 %v1638, %v1637
        %v1658 = vpack.c.bf16 %v1640, %v1639
        %v1659 = vpack.c.bf16 %v1642, %v1641
        %v1660 = vpack.c.bf16 %v1644, %v1643
        %1661 = vst.msk [vmem:[#allocation2 + $0x10] sm:$0xff] %vm454, %v1645
        %1662 = vst.msk [vmem:[#allocation2 + $0x18] sm:$0xff] %vm454, %v1646
        %1663 = vst.msk [vmem:[#allocation2 + $0x20] sm:$0xff] %vm454, %v1647
        %1664 = vst.msk [vmem:[#allocation2 + $0x28] sm:$0xff] %vm454, %v1648
        %1665 = vst.msk [vmem:[#allocation2 + $0x30] sm:$0xff] %vm454, %v1649
        %1666 = vst.msk [vmem:[#allocation2 + $0x38] sm:$0xff] %vm454, %v1650
        %1667 = vst.msk [vmem:[#allocation2 + $0x40] sm:$0xff] %vm454, %v1651
        %1668 = vst.msk [vmem:[#allocation2 + $0x48] sm:$0xff] %vm454, %v1652
        %1669 = vst.msk [vmem:[#allocation2 + $0x50] sm:$0xff] %vm454, %v1653
        %1670 = vst.msk [vmem:[#allocation2 + $0x58] sm:$0xff] %vm454, %v1654
        %1671 = vst.msk [vmem:[#allocation2 + $0x60] sm:$0xff] %vm454, %v1655
        %1672 = vst.msk [vmem:[#allocation2 + $0x68] sm:$0xff] %vm454, %v1656
        %1673 = vst.msk [vmem:[#allocation2 + $0x70] sm:$0xff] %vm454, %v1657
        %1674 = vst.msk [vmem:[#allocation2 + $0x78] sm:$0xff] %vm454, %v1658
        %1675 = vst.msk [vmem:[#allocation2 + $0x80] sm:$0xff] %vm454, %v1659
        %1676 = vst.msk [vmem:[#allocation2 + $0x88] sm:$0xff] %vm454, %v1660
        %v1677 = vld [vmem:[#allocation2] sm:$0x80]
        %v1678 = vld [vmem:[#allocation2 + $0x8] sm:$0xff]
        %v1679 = vld [vmem:[#allocation2 + $0x10] sm:$0xff]
        %v1680 = vld [vmem:[#allocation2 + $0x18] sm:$0xff]
        %v1681 = vld [vmem:[#allocation2 + $0x20] sm:$0xff]
        %v1682 = vld [vmem:[#allocation2 + $0x28] sm:$0xff]
        %v1683 = vld [vmem:[#allocation2 + $0x30] sm:$0xff]
        %v1684 = vld [vmem:[#allocation2 + $0x38] sm:$0xff]
        %v1685 = vld [vmem:[#allocation2 + $0x40] sm:$0xff]
        %v1686 = vld [vmem:[#allocation2 + $0x48] sm:$0xff]
        %v1687 = vld [vmem:[#allocation2 + $0x50] sm:$0xff]
        %v1688 = vld [vmem:[#allocation2 + $0x58] sm:$0xff]
        %v1689 = vld [vmem:[#allocation2 + $0x60] sm:$0xff]
        %v1690 = vld [vmem:[#allocation2 + $0x68] sm:$0xff]
        %v1691 = vld [vmem:[#allocation2 + $0x70] sm:$0xff]
        %v1692 = vld [vmem:[#allocation2 + $0x78] sm:$0xff]
        %v1693 = vld [vmem:[#allocation2 + $0x80] sm:$0xff]
        %v1694 = vld [vmem:[#allocation2 + $0x88] sm:$0xff]
        %vm1695 = vsmask.f32 256
        %v1697 = vshrl.u32 %v1677, 16
        %v1699 = vrot.slane %v1697, 7
        %v1701 = vshrl.u32 %v1678, 16
        %v1703 = vrot.slane %v1701, 7
        %v1704 = vshll.u32 %v1678, 16
        %v1706 = vor.u32 %v1703, %v1704
        %v1707 = vsel %vm1695, %v1699, %v1706
        %v1709 = vshrl.u32 %v1679, 16
        %v1711 = vrot.slane %v1709, 7
        %v1712 = vshll.u32 %v1679, 16
        %v1714 = vor.u32 %v1711, %v1712
        %v1715 = vsel %vm1695, %v1703, %v1714
        %v1717 = vshrl.u32 %v1680, 16
        %v1719 = vrot.slane %v1717, 7
        %v1720 = vshll.u32 %v1680, 16
        %v1722 = vor.u32 %v1719, %v1720
        %v1723 = vsel %vm1695, %v1711, %v1722
        %v1725 = vshrl.u32 %v1681, 16
        %v1727 = vrot.slane %v1725, 7
        %v1728 = vshll.u32 %v1681, 16
        %v1730 = vor.u32 %v1727, %v1728
        %v1731 = vsel %vm1695, %v1719, %v1730
        %v1733 = vshrl.u32 %v1682, 16
        %v1735 = vrot.slane %v1733, 7
        %v1736 = vshll.u32 %v1682, 16
        %v1738 = vor.u32 %v1735, %v1736
        %v1739 = vsel %vm1695, %v1727, %v1738
        %v1741 = vshrl.u32 %v1683, 16
        %v1743 = vrot.slane %v1741, 7
        %v1744 = vshll.u32 %v1683, 16
        %v1746 = vor.u32 %v1743, %v1744
        %v1747 = vsel %vm1695, %v1735, %v1746
        %v1749 = vshrl.u32 %v1684, 16
        %v1751 = vrot.slane %v1749, 7
        %v1752 = vshll.u32 %v1684, 16
        %v1754 = vor.u32 %v1751, %v1752
        %v1755 = vsel %vm1695, %v1743, %v1754
        %v1757 = vshrl.u32 %v1685, 16
        %v1759 = vrot.slane %v1757, 7
        %v1760 = vshll.u32 %v1685, 16
        %v1762 = vor.u32 %v1759, %v1760
        %v1763 = vsel %vm1695, %v1751, %v1762
        %v1765 = vshrl.u32 %v1686, 16
        %v1767 = vrot.slane %v1765, 7
        %v1768 = vshll.u32 %v1686, 16
        %v1770 = vor.u32 %v1767, %v1768
        %v1771 = vsel %vm1695, %v1759, %v1770
        %v1773 = vshrl.u32 %v1687, 16
        %v1775 = vrot.slane %v1773, 7
        %v1776 = vshll.u32 %v1687, 16
        %v1778 = vor.u32 %v1775, %v1776
        %v1779 = vsel %vm1695, %v1767, %v1778
        %v1781 = vshrl.u32 %v1688, 16
        %v1783 = vrot.slane %v1781, 7
        %v1784 = vshll.u32 %v1688, 16
        %v1786 = vor.u32 %v1783, %v1784
        %v1787 = vsel %vm1695, %v1775, %v1786
        %v1789 = vshrl.u32 %v1689, 16
        %v1791 = vrot.slane %v1789, 7
        %v1792 = vshll.u32 %v1689, 16
        %v1794 = vor.u32 %v1791, %v1792
        %v1795 = vsel %vm1695, %v1783, %v1794
        %v1797 = vshrl.u32 %v1690, 16
        %v1799 = vrot.slane %v1797, 7
        %v1800 = vshll.u32 %v1690, 16
        %v1802 = vor.u32 %v1799, %v1800
        %v1803 = vsel %vm1695, %v1791, %v1802
        %v1805 = vshrl.u32 %v1691, 16
        %v1807 = vrot.slane %v1805, 7
        %v1808 = vshll.u32 %v1691, 16
        %v1810 = vor.u32 %v1807, %v1808
        %v1811 = vsel %vm1695, %v1799, %v1810
        %v1813 = vshrl.u32 %v1692, 16
        %v1815 = vrot.slane %v1813, 7
        %v1816 = vshll.u32 %v1692, 16
        %v1818 = vor.u32 %v1815, %v1816
        %v1819 = vsel %vm1695, %v1807, %v1818
        %v1821 = vshrl.u32 %v1693, 16
        %v1823 = vrot.slane %v1821, 7
        %v1824 = vshll.u32 %v1693, 16
        %v1826 = vor.u32 %v1823, %v1824
        %v1827 = vsel %vm1695, %v1815, %v1826
        %v1829 = vshrl.u32 %v1694, 16
        %v1831 = vrot.slane %v1829, 7
        %v1832 = vshll.u32 %v1694, 16
        %v1834 = vor.u32 %v1831, %v1832
        %v1835 = vsel %vm1695, %v1823, %v1834
        %1853 = vst.msk [vmem:[#allocation4] sm:$0xff] %vm454, %v1707
        %1854 = vst.msk [vmem:[#allocation4 + $0x8] sm:$0xff] %vm454, %v1715
        %1855 = vst.msk [vmem:[#allocation4 + $0x10] sm:$0xff] %vm454, %v1723
        %1856 = vst.msk [vmem:[#allocation4 + $0x18] sm:$0xff] %vm454, %v1731
        %1857 = vst.msk [vmem:[#allocation4 + $0x20] sm:$0xff] %vm454, %v1739
        %1858 = vst.msk [vmem:[#allocation4 + $0x28] sm:$0xff] %vm454, %v1747
        %1859 = vst.msk [vmem:[#allocation4 + $0x30] sm:$0xff] %vm454, %v1755
        %1860 = vst.msk [vmem:[#allocation4 + $0x38] sm:$0xff] %vm454, %v1763
        %1861 = vst.msk [vmem:[#allocation4 + $0x40] sm:$0xff] %vm454, %v1771
        %1862 = vst.msk [vmem:[#allocation4 + $0x48] sm:$0xff] %vm454, %v1779
        %1863 = vst.msk [vmem:[#allocation4 + $0x50] sm:$0xff] %vm454, %v1787
        %1864 = vst.msk [vmem:[#allocation4 + $0x58] sm:$0xff] %vm454, %v1795
        %1865 = vst.msk [vmem:[#allocation4 + $0x60] sm:$0xff] %vm454, %v1803
        %1866 = vst.msk [vmem:[#allocation4 + $0x68] sm:$0xff] %vm454, %v1811
        %1867 = vst.msk [vmem:[#allocation4 + $0x70] sm:$0xff] %vm454, %v1819
        %1868 = vst.msk [vmem:[#allocation4 + $0x78] sm:$0xff] %vm454, %v1827
        %1869 = vst.msk [vmem:[#allocation4 + $0x80] sm:$0xff] %vm454, %v1835
        %v1870 = vld [vmem:[#allocation2 + $0x8] sm:$0x80]
        %v1871 = vld [vmem:[#allocation2 + $0x10] sm:$0xff]
        %v1872 = vld [vmem:[#allocation2 + $0x18] sm:$0xff]
        %v1873 = vld [vmem:[#allocation2 + $0x20] sm:$0xff]
        %v1874 = vld [vmem:[#allocation2 + $0x28] sm:$0xff]
        %v1875 = vld [vmem:[#allocation2 + $0x30] sm:$0xff]
        %v1876 = vld [vmem:[#allocation2 + $0x38] sm:$0xff]
        %v1877 = vld [vmem:[#allocation2 + $0x40] sm:$0xff]
        %v1878 = vld [vmem:[#allocation2 + $0x48] sm:$0xff]
        %v1879 = vld [vmem:[#allocation2 + $0x50] sm:$0xff]
        %v1880 = vld [vmem:[#allocation2 + $0x58] sm:$0xff]
        %v1881 = vld [vmem:[#allocation2 + $0x60] sm:$0xff]
        %v1882 = vld [vmem:[#allocation2 + $0x68] sm:$0xff]
        %v1883 = vld [vmem:[#allocation2 + $0x70] sm:$0xff]
        %v1884 = vld [vmem:[#allocation2 + $0x78] sm:$0xff]
        %v1885 = vld [vmem:[#allocation2 + $0x80] sm:$0xff]
        %v1886 = vld [vmem:[#allocation2 + $0x88] sm:$0xff]
        %v1887 = vld [vmem:[#allocation2 + $0x90] sm:$0xff]
        %v1889 = vshrl.u32 %v1870, 16
        %v1891 = vrot.slane %v1889, 7
        %v1893 = vshrl.u32 %v1871, 16
        %v1895 = vrot.slane %v1893, 7
        %v1896 = vshll.u32 %v1871, 16
        %v1898 = vor.u32 %v1895, %v1896
        %v1899 = vsel %vm1695, %v1891, %v1898
        %v1901 = vshrl.u32 %v1872, 16
        %v1903 = vrot.slane %v1901, 7
        %v1904 = vshll.u32 %v1872, 16
        %v1906 = vor.u32 %v1903, %v1904
        %v1907 = vsel %vm1695, %v1895, %v1906
        %v1909 = vshrl.u32 %v1873, 16
        %v1911 = vrot.slane %v1909, 7
        %v1912 = vshll.u32 %v1873, 16
        %v1914 = vor.u32 %v1911, %v1912
        %v1915 = vsel %vm1695, %v1903, %v1914
        %v1917 = vshrl.u32 %v1874, 16
        %v1919 = vrot.slane %v1917, 7
        %v1920 = vshll.u32 %v1874, 16
        %v1922 = vor.u32 %v1919, %v1920
        %v1923 = vsel %vm1695, %v1911, %v1922
        %v1925 = vshrl.u32 %v1875, 16
        %v1927 = vrot.slane %v1925, 7
        %v1928 = vshll.u32 %v1875, 16
        %v1930 = vor.u32 %v1927, %v1928
        %v1931 = vsel %vm1695, %v1919, %v1930
        %v1933 = vshrl.u32 %v1876, 16
        %v1935 = vrot.slane %v1933, 7
        %v1936 = vshll.u32 %v1876, 16
        %v1938 = vor.u32 %v1935, %v1936
        %v1939 = vsel %vm1695, %v1927, %v1938
        %v1941 = vshrl.u32 %v1877, 16
        %v1943 = vrot.slane %v1941, 7
        %v1944 = vshll.u32 %v1877, 16
        %v1946 = vor.u32 %v1943, %v1944
        %v1947 = vsel %vm1695, %v1935, %v1946
        %v1949 = vshrl.u32 %v1878, 16
        %v1951 = vrot.slane %v1949, 7
        %v1952 = vshll.u32 %v1878, 16
        %v1954 = vor.u32 %v1951, %v1952
        %v1955 = vsel %vm1695, %v1943, %v1954
        %v1957 = vshrl.u32 %v1879, 16
        %v1959 = vrot.slane %v1957, 7
        %v1960 = vshll.u32 %v1879, 16
        %v1962 = vor.u32 %v1959, %v1960
        %v1963 = vsel %vm1695, %v1951, %v1962
        %v1965 = vshrl.u32 %v1880, 16
        %v1967 = vrot.slane %v1965, 7
        %v1968 = vshll.u32 %v1880, 16
        %v1970 = vor.u32 %v1967, %v1968
        %v1971 = vsel %vm1695, %v1959, %v1970
        %v1973 = vshrl.u32 %v1881, 16
        %v1975 = vrot.slane %v1973, 7
        %v1976 = vshll.u32 %v1881, 16
        %v1978 = vor.u32 %v1975, %v1976
        %v1979 = vsel %vm1695, %v1967, %v1978
        %v1981 = vshrl.u32 %v1882, 16
        %v1983 = vrot.slane %v1981, 7
        %v1984 = vshll.u32 %v1882, 16
        %v1986 = vor.u32 %v1983, %v1984
        %v1987 = vsel %vm1695, %v1975, %v1986
        %v1989 = vshrl.u32 %v1883, 16
        %v1991 = vrot.slane %v1989, 7
        %v1992 = vshll.u32 %v1883, 16
        %v1994 = vor.u32 %v1991, %v1992
        %v1995 = vsel %vm1695, %v1983, %v1994
        %v1997 = vshrl.u32 %v1884, 16
        %v1999 = vrot.slane %v1997, 7
        %v2000 = vshll.u32 %v1884, 16
        %v2002 = vor.u32 %v1999, %v2000
        %v2003 = vsel %vm1695, %v1991, %v2002
        %v2005 = vshrl.u32 %v1885, 16
        %v2007 = vrot.slane %v2005, 7
        %v2008 = vshll.u32 %v1885, 16
        %v2010 = vor.u32 %v2007, %v2008
        %v2011 = vsel %vm1695, %v1999, %v2010
        %v2013 = vshrl.u32 %v1886, 16
        %v2015 = vrot.slane %v2013, 7
        %v2016 = vshll.u32 %v1886, 16
        %v2018 = vor.u32 %v2015, %v2016
        %v2019 = vsel %vm1695, %v2007, %v2018
        %v2021 = vshrl.u32 %v1887, 16
        %v2023 = vrot.slane %v2021, 7
        %v2024 = vshll.u32 %v1887, 16
        %v2026 = vor.u32 %v2023, %v2024
        %v2027 = vsel %vm1695, %v2015, %v2026
        %2028 = vrot.lane.b32.xlu0 %v1899, 32
        %v2029 = vpop.permute.xlu0 %2028
        %2030 = vrot.lane.b32.xlu0 %v1907, 32
        %v2031 = vpop.permute.xlu0 %2030
        %2032 = vrot.lane.b32.xlu0 %v1915, 32
        %v2033 = vpop.permute.xlu0 %2032
        %2034 = vrot.lane.b32.xlu0 %v1923, 32
        %v2035 = vpop.permute.xlu0 %2034
        %2036 = vrot.lane.b32.xlu0 %v1931, 32
        %v2037 = vpop.permute.xlu0 %2036
        %2038 = vrot.lane.b32.xlu0 %v1939, 32
        %v2039 = vpop.permute.xlu0 %2038
        %2040 = vrot.lane.b32.xlu0 %v1947, 32
        %v2041 = vpop.permute.xlu0 %2040
        %2042 = vrot.lane.b32.xlu0 %v1955, 32
        %v2043 = vpop.permute.xlu0 %2042
        %2044 = vrot.lane.b32.xlu0 %v1963, 32
        %v2045 = vpop.permute.xlu0 %2044
        %2046 = vrot.lane.b32.xlu0 %v1971, 32
        %v2047 = vpop.permute.xlu0 %2046
        %2048 = vrot.lane.b32.xlu0 %v1979, 32
        %v2049 = vpop.permute.xlu0 %2048
        %2050 = vrot.lane.b32.xlu0 %v1987, 32
        %v2051 = vpop.permute.xlu0 %2050
        %2052 = vrot.lane.b32.xlu0 %v1995, 32
        %v2053 = vpop.permute.xlu0 %2052
        %2054 = vrot.lane.b32.xlu0 %v2003, 32
        %v2055 = vpop.permute.xlu0 %2054
        %2056 = vrot.lane.b32.xlu0 %v2011, 32
        %v2057 = vpop.permute.xlu0 %2056
        %2058 = vrot.lane.b32.xlu0 %v2019, 32
        %v2059 = vpop.permute.xlu0 %2058
        %2060 = vrot.lane.b32.xlu0 %v2027, 32
        %v2061 = vpop.permute.xlu0 %2060
        %vm2079 = vcmask 523520
        %2080 = vst.msk [vmem:[#allocation4] sm:$0xff] %vm2079, %v2029
        %2081 = vst.msk [vmem:[#allocation4 + $0x8] sm:$0xff] %vm2079, %v2031
        %2082 = vst.msk [vmem:[#allocation4 + $0x10] sm:$0xff] %vm2079, %v2033
        %2083 = vst.msk [vmem:[#allocation4 + $0x18] sm:$0xff] %vm2079, %v2035
        %2084 = vst.msk [vmem:[#allocation4 + $0x20] sm:$0xff] %vm2079, %v2037
        %2085 = vst.msk [vmem:[#allocation4 + $0x28] sm:$0xff] %vm2079, %v2039
        %2086 = vst.msk [vmem:[#allocation4 + $0x30] sm:$0xff] %vm2079, %v2041
        %2087 = vst.msk [vmem:[#allocation4 + $0x38] sm:$0xff] %vm2079, %v2043
        %2088 = vst.msk [vmem:[#allocation4 + $0x40] sm:$0xff] %vm2079, %v2045
        %2089 = vst.msk [vmem:[#allocation4 + $0x48] sm:$0xff] %vm2079, %v2047
        %2090 = vst.msk [vmem:[#allocation4 + $0x50] sm:$0xff] %vm2079, %v2049
        %2091 = vst.msk [vmem:[#allocation4 + $0x58] sm:$0xff] %vm2079, %v2051
        %2092 = vst.msk [vmem:[#allocation4 + $0x60] sm:$0xff] %vm2079, %v2053
        %2093 = vst.msk [vmem:[#allocation4 + $0x68] sm:$0xff] %vm2079, %v2055
        %2094 = vst.msk [vmem:[#allocation4 + $0x70] sm:$0xff] %vm2079, %v2057
        %2095 = vst.msk [vmem:[#allocation4 + $0x78] sm:$0xff] %vm2079, %v2059
        %2096 = vst.msk [vmem:[#allocation4 + $0x80] sm:$0xff] %vm2079, %v2061
        %v2097 = vld [vmem:[#allocation2 + $0x10] sm:$0x80]
        %v2098 = vld [vmem:[#allocation2 + $0x18] sm:$0xff]
        %v2099 = vld [vmem:[#allocation2 + $0x20] sm:$0xff]
        %v2100 = vld [vmem:[#allocation2 + $0x28] sm:$0xff]
        %v2101 = vld [vmem:[#allocation2 + $0x30] sm:$0xff]
        %v2102 = vld [vmem:[#allocation2 + $0x38] sm:$0xff]
        %v2103 = vld [vmem:[#allocation2 + $0x40] sm:$0xff]
        %v2104 = vld [vmem:[#allocation2 + $0x48] sm:$0xff]
        %v2105 = vld [vmem:[#allocation2 + $0x50] sm:$0xff]
        %v2106 = vld [vmem:[#allocation2 + $0x58] sm:$0xff]
        %v2107 = vld [vmem:[#allocation2 + $0x60] sm:$0xff]
        %v2108 = vld [vmem:[#allocation2 + $0x68] sm:$0xff]
        %v2109 = vld [vmem:[#allocation2 + $0x70] sm:$0xff]
        %v2110 = vld [vmem:[#allocation2 + $0x78] sm:$0xff]
        %v2111 = vld [vmem:[#allocation2 + $0x80] sm:$0xff]
        %v2112 = vld [vmem:[#allocation2 + $0x88] sm:$0xff]
        %v2113 = vld [vmem:[#allocation2 + $0x90] sm:$0xff]
        %v2114 = vld [vmem:[#allocation2 + $0x98] sm:$0xff]
        %v2116 = vshrl.u32 %v2097, 16
        %v2118 = vrot.slane %v2116, 7
        %v2120 = vshrl.u32 %v2098, 16
        %v2122 = vrot.slane %v2120, 7
        %v2123 = vshll.u32 %v2098, 16
        %v2125 = vor.u32 %v2122, %v2123
        %v2126 = vsel %vm1695, %v2118, %v2125
        %v2128 = vshrl.u32 %v2099, 16
        %v2130 = vrot.slane %v2128, 7
        %v2131 = vshll.u32 %v2099, 16
        %v2133 = vor.u32 %v2130, %v2131
        %v2134 = vsel %vm1695, %v2122, %v2133
        %v2136 = vshrl.u32 %v2100, 16
        %v2138 = vrot.slane %v2136, 7
        %v2139 = vshll.u32 %v2100, 16
        %v2141 = vor.u32 %v2138, %v2139
        %v2142 = vsel %vm1695, %v2130, %v2141
        %v2144 = vshrl.u32 %v2101, 16
        %v2146 = vrot.slane %v2144, 7
        %v2147 = vshll.u32 %v2101, 16
        %v2149 = vor.u32 %v2146, %v2147
        %v2150 = vsel %vm1695, %v2138, %v2149
        %v2152 = vshrl.u32 %v2102, 16
        %v2154 = vrot.slane %v2152, 7
        %v2155 = vshll.u32 %v2102, 16
        %v2157 = vor.u32 %v2154, %v2155
        %v2158 = vsel %vm1695, %v2146, %v2157
        %v2160 = vshrl.u32 %v2103, 16
        %v2162 = vrot.slane %v2160, 7
        %v2163 = vshll.u32 %v2103, 16
        %v2165 = vor.u32 %v2162, %v2163
        %v2166 = vsel %vm1695, %v2154, %v2165
        %v2168 = vshrl.u32 %v2104, 16
        %v2170 = vrot.slane %v2168, 7
        %v2171 = vshll.u32 %v2104, 16
        %v2173 = vor.u32 %v2170, %v2171
        %v2174 = vsel %vm1695, %v2162, %v2173
        %v2176 = vshrl.u32 %v2105, 16
        %v2178 = vrot.slane %v2176, 7
        %v2179 = vshll.u32 %v2105, 16
        %v2181 = vor.u32 %v2178, %v2179
        %v2182 = vsel %vm1695, %v2170, %v2181
        %v2184 = vshrl.u32 %v2106, 16
        %v2186 = vrot.slane %v2184, 7
        %v2187 = vshll.u32 %v2106, 16
        %v2189 = vor.u32 %v2186, %v2187
        %v2190 = vsel %vm1695, %v2178, %v2189
        %v2192 = vshrl.u32 %v2107, 16
        %v2194 = vrot.slane %v2192, 7
        %v2195 = vshll.u32 %v2107, 16
        %v2197 = vor.u32 %v2194, %v2195
        %v2198 = vsel %vm1695, %v2186, %v2197
        %v2200 = vshrl.u32 %v2108, 16
        %v2202 = vrot.slane %v2200, 7
        %v2203 = vshll.u32 %v2108, 16
        %v2205 = vor.u32 %v2202, %v2203
        %v2206 = vsel %vm1695, %v2194, %v2205
        %v2208 = vshrl.u32 %v2109, 16
        %v2210 = vrot.slane %v2208, 7
        %v2211 = vshll.u32 %v2109, 16
        %v2213 = vor.u32 %v2210, %v2211
        %v2214 = vsel %vm1695, %v2202, %v2213
        %v2216 = vshrl.u32 %v2110, 16
        %v2218 = vrot.slane %v2216, 7
        %v2219 = vshll.u32 %v2110, 16
        %v2221 = vor.u32 %v2218, %v2219
        %v2222 = vsel %vm1695, %v2210, %v2221
        %v2224 = vshrl.u32 %v2111, 16
        %v2226 = vrot.slane %v2224, 7
        %v2227 = vshll.u32 %v2111, 16
        %v2229 = vor.u32 %v2226, %v2227
        %v2230 = vsel %vm1695, %v2218, %v2229
        %v2232 = vshrl.u32 %v2112, 16
        %v2234 = vrot.slane %v2232, 7
        %v2235 = vshll.u32 %v2112, 16
        %v2237 = vor.u32 %v2234, %v2235
        %v2238 = vsel %vm1695, %v2226, %v2237
        %v2240 = vshrl.u32 %v2113, 16
        %v2242 = vrot.slane %v2240, 7
        %v2243 = vshll.u32 %v2113, 16
        %v2245 = vor.u32 %v2242, %v2243
        %v2246 = vsel %vm1695, %v2234, %v2245
        %v2248 = vshrl.u32 %v2114, 16
        %v2250 = vrot.slane %v2248, 7
        %v2251 = vshll.u32 %v2114, 16
        %v2253 = vor.u32 %v2250, %v2251
        %v2254 = vsel %vm1695, %v2242, %v2253
        %2255 = vrot.lane.b32.xlu0 %v2126, 64
        %v2256 = vpop.permute.xlu0 %2255
        %2257 = vrot.lane.b32.xlu0 %v2134, 64
        %v2258 = vpop.permute.xlu0 %2257
        %2259 = vrot.lane.b32.xlu0 %v2142, 64
        %v2260 = vpop.permute.xlu0 %2259
        %2261 = vrot.lane.b32.xlu0 %v2150, 64
        %v2262 = vpop.permute.xlu0 %2261
        %2263 = vrot.lane.b32.xlu0 %v2158, 64
        %v2264 = vpop.permute.xlu0 %2263
        %2265 = vrot.lane.b32.xlu0 %v2166, 64
        %v2266 = vpop.permute.xlu0 %2265
        %2267 = vrot.lane.b32.xlu0 %v2174, 64
        %v2268 = vpop.permute.xlu0 %2267
        %2269 = vrot.lane.b32.xlu0 %v2182, 64
        %v2270 = vpop.permute.xlu0 %2269
        %2271 = vrot.lane.b32.xlu0 %v2190, 64
        %v2272 = vpop.permute.xlu0 %2271
        %2273 = vrot.lane.b32.xlu0 %v2198, 64
        %v2274 = vpop.permute.xlu0 %2273
        %2275 = vrot.lane.b32.xlu0 %v2206, 64
        %v2276 = vpop.permute.xlu0 %2275
        %2277 = vrot.lane.b32.xlu0 %v2214, 64
        %v2278 = vpop.permute.xlu0 %2277
        %2279 = vrot.lane.b32.xlu0 %v2222, 64
        %v2280 = vpop.permute.xlu0 %2279
        %2281 = vrot.lane.b32.xlu0 %v2230, 64
        %v2282 = vpop.permute.xlu0 %2281
        %2283 = vrot.lane.b32.xlu0 %v2238, 64
        %v2284 = vpop.permute.xlu0 %2283
        %2285 = vrot.lane.b32.xlu0 %v2246, 64
        %v2286 = vpop.permute.xlu0 %2285
        %2287 = vrot.lane.b32.xlu0 %v2254, 64
        %v2288 = vpop.permute.xlu0 %2287
        %vm2306 = vcmask 785920
        %2307 = vst.msk [vmem:[#allocation4] sm:$0xff] %vm2306, %v2256
        %2308 = vst.msk [vmem:[#allocation4 + $0x8] sm:$0xff] %vm2306, %v2258
        %2309 = vst.msk [vmem:[#allocation4 + $0x10] sm:$0xff] %vm2306, %v2260
        %2310 = vst.msk [vmem:[#allocation4 + $0x18] sm:$0xff] %vm2306, %v2262
        %2311 = vst.msk [vmem:[#allocation4 + $0x20] sm:$0xff] %vm2306, %v2264
        %2312 = vst.msk [vmem:[#allocation4 + $0x28] sm:$0xff] %vm2306, %v2266
        %2313 = vst.msk [vmem:[#allocation4 + $0x30] sm:$0xff] %vm2306, %v2268
        %2314 = vst.msk [vmem:[#allocation4 + $0x38] sm:$0xff] %vm2306, %v2270
        %2315 = vst.msk [vmem:[#allocation4 + $0x40] sm:$0xff] %vm2306, %v2272
        %2316 = vst.msk [vmem:[#allocation4 + $0x48] sm:$0xff] %vm2306, %v2274
        %2317 = vst.msk [vmem:[#allocation4 + $0x50] sm:$0xff] %vm2306, %v2276
        %2318 = vst.msk [vmem:[#allocation4 + $0x58] sm:$0xff] %vm2306, %v2278
        %2319 = vst.msk [vmem:[#allocation4 + $0x60] sm:$0xff] %vm2306, %v2280
        %2320 = vst.msk [vmem:[#allocation4 + $0x68] sm:$0xff] %vm2306, %v2282
        %2321 = vst.msk [vmem:[#allocation4 + $0x70] sm:$0xff] %vm2306, %v2284
        %2322 = vst.msk [vmem:[#allocation4 + $0x78] sm:$0xff] %vm2306, %v2286
        %2323 = vst.msk [vmem:[#allocation4 + $0x80] sm:$0xff] %vm2306, %v2288
        %v2324 = vld [vmem:[#allocation4] sm:$0xff]
        %v2325 = vld [vmem:[#allocation4 + $0x8] sm:$0xff]
        %v2326 = vld [vmem:[#allocation4 + $0x10] sm:$0xff]
        %v2327 = vld [vmem:[#allocation4 + $0x18] sm:$0xff]
        %v2328 = vld [vmem:[#allocation4 + $0x20] sm:$0xff]
        %v2329 = vld [vmem:[#allocation4 + $0x28] sm:$0xff]
        %v2330 = vld [vmem:[#allocation4 + $0x30] sm:$0xff]
        %v2331 = vld [vmem:[#allocation4 + $0x38] sm:$0xff]
        %v2332 = vld [vmem:[#allocation4 + $0x40] sm:$0xff]
        %v2333 = vld [vmem:[#allocation4 + $0x48] sm:$0xff]
        %v2334 = vld [vmem:[#allocation4 + $0x50] sm:$0xff]
        %v2335 = vld [vmem:[#allocation4 + $0x58] sm:$0xff]
        %v2336 = vld [vmem:[#allocation4 + $0x60] sm:$0xff]
        %v2337 = vld [vmem:[#allocation4 + $0x68] sm:$0xff]
        %v2338 = vld [vmem:[#allocation4 + $0x70] sm:$0xff]
        %v2339 = vld [vmem:[#allocation4 + $0x78] sm:$0xff]
        %v2340 = vld [vmem:[%s4] sm:$0xf]
        %v2341 = vld [vmem:[%s4 + $0x4] sm:$0xf]
        %v2342 = vld [vmem:[%s4 + $0x8] sm:$0xf]
        %v2343 = vld [vmem:[%s4 + $0xc] sm:$0xf]
        %v2344 = vld [vmem:[%s4 + $0x10] sm:$0xf]
        %v2345 = vld [vmem:[%s4 + $0x14] sm:$0xf]
        %v2346 = vld [vmem:[%s4 + $0x18] sm:$0xf]
        %v2347 = vld [vmem:[%s4 + $0x1c] sm:$0xf]
        %v2348 = vld [vmem:[%s4 + $0x20] sm:$0xf]
        %v2349 = vld [vmem:[%s4 + $0x24] sm:$0xf]
        %v2350 = vld [vmem:[%s4 + $0x28] sm:$0xf]
        %v2351 = vld [vmem:[%s4 + $0x2c] sm:$0xf]
        %v2364 = vunpack.c.l.b16 %v2340
        %v2365 = vunpack.c.l.b16 %v2341
        %v2366 = vunpack.c.l.b16 %v2342
        %v2367 = vunpack.c.l.b16 %v2343
        %v2368 = vunpack.c.l.b16 %v2344
        %v2369 = vunpack.c.l.b16 %v2345
        %v2370 = vunpack.c.l.b16 %v2346
        %v2371 = vunpack.c.l.b16 %v2347
        %v2372 = vunpack.c.l.b16 %v2348
        %v2373 = vunpack.c.l.b16 %v2349
        %v2374 = vunpack.c.l.b16 %v2350
        %v2375 = vunpack.c.l.b16 %v2351
        %v2376 = vpack.c.b16 %v2365, %v2364
        %v2377 = vpack.c.b16 %v2367, %v2366
        %v2378 = vpack.c.b16 %v2369, %v2368
        %v2379 = vpack.c.b16 %v2371, %v2370
        %v2380 = vpack.c.b16 %v2373, %v2372
        %v2381 = vpack.c.b16 %v2375, %v2374
        %vm2388 = vcmask 785408
        %v2390 = vsel %vm2388, %v2324, 0
        %v2393 = vsel %vm2388, %v2325, 0
        %v2396 = vsel %vm2388, %v2326, 0
        %v2399 = vsel %vm2388, %v2327, 0
        %v2402 = vsel %vm2388, %v2328, 0
        %v2405 = vsel %vm2388, %v2329, 0
        %v2408 = vsel %vm2388, %v2330, 0
        %v2411 = vsel %vm2388, %v2331, 0
        %v2414 = vsel %vm2388, %v2332, 0
        %v2417 = vsel %vm2388, %v2333, 0
        %v2420 = vsel %vm2388, %v2334, 0
        %v2423 = vsel %vm2388, %v2335, 0
        %v2426 = vsel %vm2388, %v2336, 0
        %v2429 = vsel %vm2388, %v2337, 0
        %v2432 = vsel %vm2388, %v2338, 0
        %v2435 = vsel %vm2388, %v2339, 0
        %2437 = vmatprep.subr.bf16.mxu0 0
        %2438 = vmatpush1.bf16.msra.mxu0 %v2376
        %2439 = vmatprep.subr.bf16.mxu0 0
        %2440 = vmatpush1.bf16.msra.mxu0 %v2377
        %2441 = vmatprep.subr.bf16.mxu0 0
        %2442 = vmatpush1.bf16.msra.mxu0 %v2378
        %2443 = vmatprep.subr.bf16.mxu0 0
        %2444 = vmatpush1.bf16.msra.mxu0 %v2379
        %2445 = vmatprep.subr.bf16.mxu0 0
        %2446 = vmatpush1.bf16.msra.mxu0 %v2380
        %2447 = vmatprep.subr.bf16.mxu0 0
        %2448 = vmatpush1.bf16.msra.mxu0 %v2381
        %2449 = vmatprep.subr.bf16.mxu0 0
        %2450 = vmatpush1.bf16.msra.mxu0 0
        %2451 = vmatprep.subr.bf16.mxu0 0
        %2452 = vmatpush1.bf16.msra.mxu0 0
        %2453 = vmatprep.subr.bf16.mxu0 0
        %2454 = vmatpush1.bf16.msra.mxu0 0
        %2455 = vmatprep.subr.bf16.mxu0 0
        %2456 = vmatpush1.bf16.msra.mxu0 0
        %2457 = vmatprep.subr.bf16.mxu0 0
        %2458 = vmatpush1.bf16.msra.mxu0 0
        %2459 = vmatprep.subr.bf16.mxu0 0
        %2460 = vmatpush1.bf16.msra.mxu0 0
        %2461 = vmatprep.subr.bf16.mxu0 0
        %2462 = vmatpush1.bf16.msra.mxu0 0
        %2463 = vmatprep.subr.bf16.mxu0 0
        %2464 = vmatpush1.bf16.msra.mxu0 0
        %2465 = vmatprep.subr.bf16.mxu0 0
        %2466 = vmatpush1.bf16.msra.mxu0 0
        %2467 = vmatprep.subr.bf16.mxu0 0
        %2468 = vmatpush1.bf16.msra.mxu0 0
        %2469 = vmatprep.mubr.bf16.mxu0 0
        %2470 = vmatmul.mubr.bf16.gmra.mrb[0].mxu0 %v2390
        %v2471 = vpop.f32.mrb[0].mxu0
        %v2472 = vadd.f32 0.0, %v2471
        %v2473 = vpop.f32.mrb[0].mxu0
        %v2474 = vpop.f32.mrb[0].mxu0
        %v2475 = vadd.f32 0.0, %v2474
        %v2476 = vpop.f32.mrb[0].mxu0
        %2477 = vmatprep.mubr.bf16.mxu0 0
        %2478 = vmatmul.mubr.bf16.gmra.mrb[0].mxu0 %v2393
        %v2479 = vpop.f32.mrb[0].mxu0
        %v2480 = vadd.f32 0.0, %v2479
        %v2481 = vpop.f32.mrb[0].mxu0
        %v2482 = vpop.f32.mrb[0].mxu0
        %v2483 = vadd.f32 0.0, %v2482
        %v2484 = vpop.f32.mrb[0].mxu0
        %2485 = vmatprep.mubr.bf16.mxu0 0
        %2486 = vmatmul.mubr.bf16.gmra.mrb[0].mxu0 %v2396
        %v2487 = vpop.f32.mrb[0].mxu0
        %v2488 = vadd.f32 0.0, %v2487
        %v2489 = vpop.f32.mrb[0].mxu0
        %v2490 = vpop.f32.mrb[0].mxu0
        %v2491 = vadd.f32 0.0, %v2490
        %v2492 = vpop.f32.mrb[0].mxu0
        %2493 = vmatprep.mubr.bf16.mxu0 0
        %2494 = vmatmul.mubr.bf16.gmra.mrb[0].mxu0 %v2399
        %v2495 = vpop.f32.mrb[0].mxu0
        %v2496 = vadd.f32 0.0, %v2495
        %v2497 = vpop.f32.mrb[0].mxu0
        %v2498 = vpop.f32.mrb[0].mxu0
        %v2499 = vadd.f32 0.0, %v2498
        %v2500 = vpop.f32.mrb[0].mxu0
        %2501 = vmatprep.mubr.bf16.mxu0 0
        %2502 = vmatmul.mubr.bf16.gmra.mrb[0].mxu0 %v2402
        %v2503 = vpop.f32.mrb[0].mxu0
        %v2504 = vadd.f32 0.0, %v2503
        %v2505 = vpop.f32.mrb[0].mxu0
        %v2506 = vpop.f32.mrb[0].mxu0
        %v2507 = vadd.f32 0.0, %v2506
        %v2508 = vpop.f32.mrb[0].mxu0
        %2509 = vmatprep.mubr.bf16.mxu0 0
        %2510 = vmatmul.mubr.bf16.gmra.mrb[0].mxu0 %v2405
        %v2511 = vpop.f32.mrb[0].mxu0
        %v2512 = vadd.f32 0.0, %v2511
        %v2513 = vpop.f32.mrb[0].mxu0
        %v2514 = vpop.f32.mrb[0].mxu0
        %v2515 = vadd.f32 0.0, %v2514
        %v2516 = vpop.f32.mrb[0].mxu0
        %2517 = vmatprep.mubr.bf16.mxu0 0
        %2518 = vmatmul.mubr.bf16.gmra.mrb[0].mxu0 %v2408
        %v2519 = vpop.f32.mrb[0].mxu0
        %v2520 = vadd.f32 0.0, %v2519
        %v2521 = vpop.f32.mrb[0].mxu0
        %v2522 = vpop.f32.mrb[0].mxu0
        %v2523 = vadd.f32 0.0, %v2522
        %v2524 = vpop.f32.mrb[0].mxu0
        %2525 = vmatprep.mubr.bf16.mxu0 0
        %2526 = vmatmul.mubr.bf16.gmra.mrb[0].mxu0 %v2411
        %v2527 = vpop.f32.mrb[0].mxu0
        %v2528 = vadd.f32 0.0, %v2527
        %v2529 = vpop.f32.mrb[0].mxu0
        %v2530 = vpop.f32.mrb[0].mxu0
        %v2531 = vadd.f32 0.0, %v2530
        %v2532 = vpop.f32.mrb[0].mxu0
        %2533 = vmatprep.mubr.bf16.mxu0 0
        %2534 = vmatmul.mubr.bf16.gmra.mrb[0].mxu0 %v2414
        %v2535 = vpop.f32.mrb[0].mxu0
        %v2536 = vadd.f32 0.0, %v2535
        %v2537 = vpop.f32.mrb[0].mxu0
        %v2538 = vpop.f32.mrb[0].mxu0
        %v2539 = vadd.f32 0.0, %v2538
        %v2540 = vpop.f32.mrb[0].mxu0
        %2541 = vmatprep.mubr.bf16.mxu0 0
        %2542 = vmatmul.mubr.bf16.gmra.mrb[0].mxu0 %v2417
        %v2543 = vpop.f32.mrb[0].mxu0
        %v2544 = vadd.f32 0.0, %v2543
        %v2545 = vpop.f32.mrb[0].mxu0
        %v2546 = vpop.f32.mrb[0].mxu0
        %v2547 = vadd.f32 0.0, %v2546
        %v2548 = vpop.f32.mrb[0].mxu0
        %2549 = vmatprep.mubr.bf16.mxu0 0
        %2550 = vmatmul.mubr.bf16.gmra.mrb[0].mxu0 %v2420
        %v2551 = vpop.f32.mrb[0].mxu0
        %v2552 = vadd.f32 0.0, %v2551
        %v2553 = vpop.f32.mrb[0].mxu0
        %v2554 = vpop.f32.mrb[0].mxu0
        %v2555 = vadd.f32 0.0, %v2554
        %v2556 = vpop.f32.mrb[0].mxu0
        %2557 = vmatprep.mubr.bf16.mxu0 0
        %2558 = vmatmul.mubr.bf16.gmra.mrb[0].mxu0 %v2423
        %v2559 = vpop.f32.mrb[0].mxu0
        %v2560 = vadd.f32 0.0, %v2559
        %v2561 = vpop.f32.mrb[0].mxu0
        %v2562 = vpop.f32.mrb[0].mxu0
        %v2563 = vadd.f32 0.0, %v2562
        %v2564 = vpop.f32.mrb[0].mxu0
        %2565 = vmatprep.mubr.bf16.mxu0 0
        %2566 = vmatmul.mubr.bf16.gmra.mrb[0].mxu0 %v2426
        %v2567 = vpop.f32.mrb[0].mxu0
        %v2568 = vadd.f32 0.0, %v2567
        %v2569 = vpop.f32.mrb[0].mxu0
        %v2570 = vpop.f32.mrb[0].mxu0
        %v2571 = vadd.f32 0.0, %v2570
        %v2572 = vpop.f32.mrb[0].mxu0
        %2573 = vmatprep.mubr.bf16.mxu0 0
        %2574 = vmatmul.mubr.bf16.gmra.mrb[0].mxu0 %v2429
        %v2575 = vpop.f32.mrb[0].mxu0
        %v2576 = vadd.f32 0.0, %v2575
        %v2577 = vpop.f32.mrb[0].mxu0
        %v2578 = vpop.f32.mrb[0].mxu0
        %v2579 = vadd.f32 0.0, %v2578
        %v2580 = vpop.f32.mrb[0].mxu0
        %2581 = vmatprep.mubr.bf16.mxu0 0
        %2582 = vmatmul.mubr.bf16.gmra.mrb[0].mxu0 %v2432
        %v2583 = vpop.f32.mrb[0].mxu0
        %v2584 = vadd.f32 0.0, %v2583
        %v2585 = vpop.f32.mrb[0].mxu0
        %v2586 = vpop.f32.mrb[0].mxu0
        %v2587 = vadd.f32 0.0, %v2586
        %v2588 = vpop.f32.mrb[0].mxu0
        %2589 = vmatprep.mubr.bf16.mxu0 0
        %2590 = vmatmul.mubr.bf16.gmra.mrb[0].mxu0 %v2435
        %v2591 = vpop.f32.mrb[0].mxu0
        %v2592 = vadd.f32 0.0, %v2591
        %v2593 = vpop.f32.mrb[0].mxu0
        %v2594 = vpop.f32.mrb[0].mxu0
        %v2595 = vadd.f32 0.0, %v2594
        %v2596 = vpop.f32.mrb[0].mxu0
        %2597 = vdwg.mxu0
        %v2598 = vmul.f32 %v2472, %v977
        %v2599 = vmul.f32 %v2475, %v978
        %v2600 = vmul.f32 %v2480, %v979
        %v2601 = vmul.f32 %v2483, %v980
        %v2602 = vmul.f32 %v2488, %v981
        %v2603 = vmul.f32 %v2491, %v982
        %v2604 = vmul.f32 %v2496, %v983
        %v2605 = vmul.f32 %v2499, %v984
        %v2606 = vmul.f32 %v2504, %v985
        %v2607 = vmul.f32 %v2507, %v986
        %v2608 = vmul.f32 %v2512, %v987
        %v2609 = vmul.f32 %v2515, %v988
        %v2610 = vmul.f32 %v2520, %v989
        %v2611 = vmul.f32 %v2523, %v990
        %v2612 = vmul.f32 %v2528, %v991
        %v2613 = vmul.f32 %v2531, %v992
        %v2614 = vmul.f32 %v2536, %v993
        %v2615 = vmul.f32 %v2539, %v994
        %v2616 = vmul.f32 %v2544, %v995
        %v2617 = vmul.f32 %v2547, %v996
        %v2618 = vmul.f32 %v2552, %v997
        %v2619 = vmul.f32 %v2555, %v998
        %v2620 = vmul.f32 %v2560, %v999
        %v2621 = vmul.f32 %v2563, %v1000
        %v2622 = vmul.f32 %v2568, %v1001
        %v2623 = vmul.f32 %v2571, %v1002
        %v2624 = vmul.f32 %v2576, %v1003
        %v2625 = vmul.f32 %v2579, %v1004
        %v2626 = vmul.f32 %v2584, %v1005
        %v2627 = vmul.f32 %v2587, %v1006
        %v2628 = vmul.f32 %v2592, %v1007
        %v2629 = vmul.f32 %v2595, %v1008
        %v2630 = vld [vmem:[#allocation4] sm:$0xff]
        %v2631 = vld [vmem:[#allocation4 + $0x8] sm:$0xff]
        %v2632 = vld [vmem:[#allocation4 + $0x10] sm:$0xff]
        %v2633 = vld [vmem:[#allocation4 + $0x18] sm:$0xff]
        %v2634 = vld [vmem:[#allocation4 + $0x20] sm:$0xff]
        %v2635 = vld [vmem:[#allocation4 + $0x28] sm:$0xff]
        %v2636 = vld [vmem:[#allocation4 + $0x30] sm:$0xff]
        %v2637 = vld [vmem:[#allocation4 + $0x38] sm:$0xff]
        %v2638 = vld [vmem:[#allocation4 + $0x40] sm:$0xff]
        %v2639 = vld [vmem:[#allocation4 + $0x48] sm:$0xff]
        %v2640 = vld [vmem:[#allocation4 + $0x50] sm:$0xff]
        %v2641 = vld [vmem:[#allocation4 + $0x58] sm:$0xff]
        %v2642 = vld [vmem:[#allocation4 + $0x60] sm:$0xff]
        %v2643 = vld [vmem:[#allocation4 + $0x68] sm:$0xff]
        %v2644 = vld [vmem:[#allocation4 + $0x70] sm:$0xff]
        %v2645 = vld [vmem:[#allocation4 + $0x78] sm:$0xff]
        %v2646 = vld [vmem:[#allocation4 + $0x80] sm:$0x1]
        %v2647 = vld [vmem:[%s4 + $0x30] sm:$0xf]
        %v2648 = vld [vmem:[%s4 + $0x34] sm:$0xf]
        %v2649 = vld [vmem:[%s4 + $0x38] sm:$0xf]
        %v2650 = vld [vmem:[%s4 + $0x3c] sm:$0xf]
        %v2651 = vld [vmem:[%s4 + $0x40] sm:$0xf]
        %v2652 = vld [vmem:[%s4 + $0x44] sm:$0xf]
        %v2653 = vld [vmem:[%s4 + $0x48] sm:$0xf]
        %v2654 = vld [vmem:[%s4 + $0x4c] sm:$0xf]
        %v2655 = vld [vmem:[%s4 + $0x50] sm:$0xf]
        %v2656 = vld [vmem:[%s4 + $0x54] sm:$0xf]
        %v2657 = vld [vmem:[%s4 + $0x58] sm:$0xf]
        %v2658 = vld [vmem:[%s4 + $0x5c] sm:$0xf]
        %vm2659 = vsmask.f32 7424
        %v2661 = vshrl.u32 %v2630, 16
        %v2663 = vshll.u32 %v2630, 16
        %v2665 = vrot.slane %v2663, 1
        %v2666 = vor.u32 %v2661, %v2665
        %v2668 = vshll.u32 %v2631, 16
        %v2670 = vrot.slane %v2668, 1
        %v2671 = vsel %vm2659, %v2666, %v2670
        %v2672 = vshrl.u32 %v2631, 16
        %v2674 = vor.u32 %v2672, %v2670
        %v2676 = vshll.u32 %v2632, 16
        %v2678 = vrot.slane %v2676, 1
        %v2679 = vsel %vm2659, %v2674, %v2678
        %v2680 = vshrl.u32 %v2632, 16
        %v2682 = vor.u32 %v2680, %v2678
        %v2684 = vshll.u32 %v2633, 16
        %v2686 = vrot.slane %v2684, 1
        %v2687 = vsel %vm2659, %v2682, %v2686
        %v2688 = vshrl.u32 %v2633, 16
        %v2690 = vor.u32 %v2688, %v2686
        %v2692 = vshll.u32 %v2634, 16
        %v2694 = vrot.slane %v2692, 1
        %v2695 = vsel %vm2659, %v2690, %v2694
        %v2696 = vshrl.u32 %v2634, 16
        %v2698 = vor.u32 %v2696, %v2694
        %v2700 = vshll.u32 %v2635, 16
        %v2702 = vrot.slane %v2700, 1
        %v2703 = vsel %vm2659, %v2698, %v2702
        %v2704 = vshrl.u32 %v2635, 16
        %v2706 = vor.u32 %v2704, %v2702
        %v2708 = vshll.u32 %v2636, 16
        %v2710 = vrot.slane %v2708, 1
        %v2711 = vsel %vm2659, %v2706, %v2710
        %v2712 = vshrl.u32 %v2636, 16
        %v2714 = vor.u32 %v2712, %v2710
        %v2716 = vshll.u32 %v2637, 16
        %v2718 = vrot.slane %v2716, 1
        %v2719 = vsel %vm2659, %v2714, %v2718
        %v2720 = vshrl.u32 %v2637, 16
        %v2722 = vor.u32 %v2720, %v2718
        %v2724 = vshll.u32 %v2638, 16
        %v2726 = vrot.slane %v2724, 1
        %v2727 = vsel %vm2659, %v2722, %v2726
        %v2728 = vshrl.u32 %v2638, 16
        %v2730 = vor.u32 %v2728, %v2726
        %v2732 = vshll.u32 %v2639, 16
        %v2734 = vrot.slane %v2732, 1
        %v2735 = vsel %vm2659, %v2730, %v2734
        %v2736 = vshrl.u32 %v2639, 16
        %v2738 = vor.u32 %v2736, %v2734
        %v2740 = vshll.u32 %v2640, 16
        %v2742 = vrot.slane %v2740, 1
        %v2743 = vsel %vm2659, %v2738, %v2742
        %v2744 = vshrl.u32 %v2640, 16
        %v2746 = vor.u32 %v2744, %v2742
        %v2748 = vshll.u32 %v2641, 16
        %v2750 = vrot.slane %v2748, 1
        %v2751 = vsel %vm2659, %v2746, %v2750
        %v2752 = vshrl.u32 %v2641, 16
        %v2754 = vor.u32 %v2752, %v2750
        %v2756 = vshll.u32 %v2642, 16
        %v2758 = vrot.slane %v2756, 1
        %v2759 = vsel %vm2659, %v2754, %v2758
        %v2760 = vshrl.u32 %v2642, 16
        %v2762 = vor.u32 %v2760, %v2758
        %v2764 = vshll.u32 %v2643, 16
        %v2766 = vrot.slane %v2764, 1
        %v2767 = vsel %vm2659, %v2762, %v2766
        %v2768 = vshrl.u32 %v2643, 16
        %v2770 = vor.u32 %v2768, %v2766
        %v2772 = vshll.u32 %v2644, 16
        %v2774 = vrot.slane %v2772, 1
        %v2775 = vsel %vm2659, %v2770, %v2774
        %v2776 = vshrl.u32 %v2644, 16
        %v2778 = vor.u32 %v2776, %v2774
        %v2780 = vshll.u32 %v2645, 16
        %v2782 = vrot.slane %v2780, 1
        %v2783 = vsel %vm2659, %v2778, %v2782
        %v2784 = vshrl.u32 %v2645, 16
        %v2786 = vor.u32 %v2784, %v2782
        %v2788 = vshll.u32 %v2646, 16
        %v2790 = vrot.slane %v2788, 1
        %v2791 = vsel %vm2659, %v2786, %v2790
        %v2804 = vunpack.c.l.b16 %v2647
        %v2805 = vunpack.c.l.b16 %v2648
        %v2806 = vunpack.c.l.b16 %v2649
        %v2807 = vunpack.c.l.b16 %v2650
        %v2808 = vunpack.c.l.b16 %v2651
        %v2809 = vunpack.c.l.b16 %v2652
        %v2810 = vunpack.c.l.b16 %v2653
        %v2811 = vunpack.c.l.b16 %v2654
        %v2812 = vunpack.c.l.b16 %v2655
        %v2813 = vunpack.c.l.b16 %v2656
        %v2814 = vunpack.c.l.b16 %v2657
        %v2815 = vunpack.c.l.b16 %v2658
        %v2816 = vpack.c.b16 %v2805, %v2804
        %v2817 = vpack.c.b16 %v2807, %v2806
        %v2818 = vpack.c.b16 %v2809, %v2808
        %v2819 = vpack.c.b16 %v2811, %v2810
        %v2820 = vpack.c.b16 %v2813, %v2812
        %v2821 = vpack.c.b16 %v2815, %v2814
        %v2829 = vsel %vm2388, %v2671, 0
        %v2832 = vsel %vm2388, %v2679, 0
        %v2835 = vsel %vm2388, %v2687, 0
        %v2838 = vsel %vm2388, %v2695, 0
        %v2841 = vsel %vm2388, %v2703, 0
        %v2844 = vsel %vm2388, %v2711, 0
        %v2847 = vsel %vm2388, %v2719, 0
        %v2850 = vsel %vm2388, %v2727, 0
        %v2853 = vsel %vm2388, %v2735, 0
        %v2856 = vsel %vm2388, %v2743, 0
        %v2859 = vsel %vm2388, %v2751, 0
        %v2862 = vsel %vm2388, %v2759, 0
        %v2865 = vsel %vm2388, %v2767, 0
        %v2868 = vsel %vm2388, %v2775, 0
        %v2871 = vsel %vm2388, %v2783, 0
        %v2874 = vsel %vm2388, %v2791, 0
        %2876 = vmatprep.subr.bf16.mxu0 0
        %2877 = vmatpush1.bf16.msra.mxu0 %v2816
        %2878 = vmatprep.subr.bf16.mxu0 0
        %2879 = vmatpush1.bf16.msra.mxu0 %v2817
        %2880 = vmatprep.subr.bf16.mxu0 0
        %2881 = vmatpush1.bf16.msra.mxu0 %v2818
        %2882 = vmatprep.subr.bf16.mxu0 0
        %2883 = vmatpush1.bf16.msra.mxu0 %v2819
        %2884 = vmatprep.subr.bf16.mxu0 0
        %2885 = vmatpush1.bf16.msra.mxu0 %v2820
        %2886 = vmatprep.subr.bf16.mxu0 0
        %2887 = vmatpush1.bf16.msra.mxu0 %v2821
        %2888 = vmatprep.subr.bf16.mxu0 0
        %2889 = vmatpush1.bf16.msra.mxu0 0
        %2890 = vmatprep.subr.bf16.mxu0 0
        %2891 = vmatpush1.bf16.msra.mxu0 0
        %2892 = vmatprep.subr.bf16.mxu0 0
        %2893 = vmatpush1.bf16.msra.mxu0 0
        %2894 = vmatprep.subr.bf16.mxu0 0
        %2895 = vmatpush1.bf16.msra.mxu0 0
        %2896 = vmatprep.subr.bf16.mxu0 0
        %2897 = vmatpush1.bf16.msra.mxu0 0
        %2898 = vmatprep.subr.bf16.mxu0 0
        %2899 = vmatpush1.bf16.msra.mxu0 0
        %2900 = vmatprep.subr.bf16.mxu0 0
        %2901 = vmatpush1.bf16.msra.mxu0 0
        %2902 = vmatprep.subr.bf16.mxu0 0
        %2903 = vmatpush1.bf16.msra.mxu0 0
        %2904 = vmatprep.subr.bf16.mxu0 0
        %2905 = vmatpush1.bf16.msra.mxu0 0
        %2906 = vmatprep.subr.bf16.mxu0 0
        %2907 = vmatpush1.bf16.msra.mxu0 0
        %2908 = vmatprep.mubr.bf16.mxu0 0
        %2909 = vmatmul.mubr.bf16.gmra.mrb[0].mxu0 %v2829
        %v2910 = vpop.f32.mrb[0].mxu0
        %v2911 = vadd.f32 0.0, %v2910
        %v2912 = vpop.f32.mrb[0].mxu0
        %v2913 = vpop.f32.mrb[0].mxu0
        %v2914 = vadd.f32 0.0, %v2913
        %v2915 = vpop.f32.mrb[0].mxu0
        %2916 = vmatprep.mubr.bf16.mxu0 0
        %2917 = vmatmul.mubr.bf16.gmra.mrb[0].mxu0 %v2832
        %v2918 = vpop.f32.mrb[0].mxu0
        %v2919 = vadd.f32 0.0, %v2918
        %v2920 = vpop.f32.mrb[0].mxu0
        %v2921 = vpop.f32.mrb[0].mxu0
        %v2922 = vadd.f32 0.0, %v2921
        %v2923 = vpop.f32.mrb[0].mxu0
        %2924 = vmatprep.mubr.bf16.mxu0 0
        %2925 = vmatmul.mubr.bf16.gmra.mrb[0].mxu0 %v2835
        %v2926 = vpop.f32.mrb[0].mxu0
        %v2927 = vadd.f32 0.0, %v2926
        %v2928 = vpop.f32.mrb[0].mxu0
        %v2929 = vpop.f32.mrb[0].mxu0
        %v2930 = vadd.f32 0.0, %v2929
        %v2931 = vpop.f32.mrb[0].mxu0
        %2932 = vmatprep.mubr.bf16.mxu0 0
        %2933 = vmatmul.mubr.bf16.gmra.mrb[0].mxu0 %v2838
        %v2934 = vpop.f32.mrb[0].mxu0
        %v2935 = vadd.f32 0.0, %v2934
        %v2936 = vpop.f32.mrb[0].mxu0
        %v2937 = vpop.f32.mrb[0].mxu0
        %v2938 = vadd.f32 0.0, %v2937
        %v2939 = vpop.f32.mrb[0].mxu0
        %2940 = vmatprep.mubr.bf16.mxu0 0
        %2941 = vmatmul.mubr.bf16.gmra.mrb[0].mxu0 %v2841
        %v2942 = vpop.f32.mrb[0].mxu0
        %v2943 = vadd.f32 0.0, %v2942
        %v2944 = vpop.f32.mrb[0].mxu0
        %v2945 = vpop.f32.mrb[0].mxu0
        %v2946 = vadd.f32 0.0, %v2945
        %v2947 = vpop.f32.mrb[0].mxu0
        %2948 = vmatprep.mubr.bf16.mxu0 0
        %2949 = vmatmul.mubr.bf16.gmra.mrb[0].mxu0 %v2844
        %v2950 = vpop.f32.mrb[0].mxu0
        %v2951 = vadd.f32 0.0, %v2950
        %v2952 = vpop.f32.mrb[0].mxu0
        %v2953 = vpop.f32.mrb[0].mxu0
        %v2954 = vadd.f32 0.0, %v2953
        %v2955 = vpop.f32.mrb[0].mxu0
        %2956 = vmatprep.mubr.bf16.mxu0 0
        %2957 = vmatmul.mubr.bf16.gmra.mrb[0].mxu0 %v2847
        %v2958 = vpop.f32.mrb[0].mxu0
        %v2959 = vadd.f32 0.0, %v2958
        %v2960 = vpop.f32.mrb[0].mxu0
        %v2961 = vpop.f32.mrb[0].mxu0
        %v2962 = vadd.f32 0.0, %v2961
        %v2963 = vpop.f32.mrb[0].mxu0
        %2964 = vmatprep.mubr.bf16.mxu0 0
        %2965 = vmatmul.mubr.bf16.gmra.mrb[0].mxu0 %v2850
        %v2966 = vpop.f32.mrb[0].mxu0
        %v2967 = vadd.f32 0.0, %v2966
        %v2968 = vpop.f32.mrb[0].mxu0
        %v2969 = vpop.f32.mrb[0].mxu0
        %v2970 = vadd.f32 0.0, %v2969
        %v2971 = vpop.f32.mrb[0].mxu0
        %2972 = vmatprep.mubr.bf16.mxu0 0
        %2973 = vmatmul.mubr.bf16.gmra.mrb[0].mxu0 %v2853
        %v2974 = vpop.f32.mrb[0].mxu0
        %v2975 = vadd.f32 0.0, %v2974
        %v2976 = vpop.f32.mrb[0].mxu0
        %v2977 = vpop.f32.mrb[0].mxu0
        %v2978 = vadd.f32 0.0, %v2977
        %v2979 = vpop.f32.mrb[0].mxu0
        %2980 = vmatprep.mubr.bf16.mxu0 0
        %2981 = vmatmul.mubr.bf16.gmra.mrb[0].mxu0 %v2856
        %v2982 = vpop.f32.mrb[0].mxu0
        %v2983 = vadd.f32 0.0, %v2982
        %v2984 = vpop.f32.mrb[0].mxu0
        %v2985 = vpop.f32.mrb[0].mxu0
        %v2986 = vadd.f32 0.0, %v2985
        %v2987 = vpop.f32.mrb[0].mxu0
        %2988 = vmatprep.mubr.bf16.mxu0 0
        %2989 = vmatmul.mubr.bf16.gmra.mrb[0].mxu0 %v2859
        %v2990 = vpop.f32.mrb[0].mxu0
        %v2991 = vadd.f32 0.0, %v2990
        %v2992 = vpop.f32.mrb[0].mxu0
        %v2993 = vpop.f32.mrb[0].mxu0
        %v2994 = vadd.f32 0.0, %v2993
        %v2995 = vpop.f32.mrb[0].mxu0
        %2996 = vmatprep.mubr.bf16.mxu0 0
        %2997 = vmatmul.mubr.bf16.gmra.mrb[0].mxu0 %v2862
        %v2998 = vpop.f32.mrb[0].mxu0
        %v2999 = vadd.f32 0.0, %v2998
        %v3000 = vpop.f32.mrb[0].mxu0
        %v3001 = vpop.f32.mrb[0].mxu0
        %v3002 = vadd.f32 0.0, %v3001
        %v3003 = vpop.f32.mrb[0].mxu0
        %3004 = vmatprep.mubr.bf16.mxu0 0
        %3005 = vmatmul.mubr.bf16.gmra.mrb[0].mxu0 %v2865
        %v3006 = vpop.f32.mrb[0].mxu0
        %v3007 = vadd.f32 0.0, %v3006
        %v3008 = vpop.f32.mrb[0].mxu0
        %v3009 = vpop.f32.mrb[0].mxu0
        %v3010 = vadd.f32 0.0, %v3009
        %v3011 = vpop.f32.mrb[0].mxu0
        %3012 = vmatprep.mubr.bf16.mxu0 0
        %3013 = vmatmul.mubr.bf16.gmra.mrb[0].mxu0 %v2868
        %v3014 = vpop.f32.mrb[0].mxu0
        %v3015 = vadd.f32 0.0, %v3014
        %v3016 = vpop.f32.mrb[0].mxu0
        %v3017 = vpop.f32.mrb[0].mxu0
        %v3018 = vadd.f32 0.0, %v3017
        %v3019 = vpop.f32.mrb[0].mxu0
        %3020 = vmatprep.mubr.bf16.mxu0 0
        %3021 = vmatmul.mubr.bf16.gmra.mrb[0].mxu0 %v2871
        %v3022 = vpop.f32.mrb[0].mxu0
        %v3023 = vadd.f32 0.0, %v3022
        %v3024 = vpop.f32.mrb[0].mxu0
        %v3025 = vpop.f32.mrb[0].mxu0
        %v3026 = vadd.f32 0.0, %v3025
        %v3027 = vpop.f32.mrb[0].mxu0
        %3028 = vmatprep.mubr.bf16.mxu0 0
        %3029 = vmatmul.mubr.bf16.gmra.mrb[0].mxu0 %v2874
        %v3030 = vpop.f32.mrb[0].mxu0
        %v3031 = vadd.f32 0.0, %v3030
        %v3032 = vpop.f32.mrb[0].mxu0
        %v3033 = vpop.f32.mrb[0].mxu0
        %v3034 = vadd.f32 0.0, %v3033
        %v3035 = vpop.f32.mrb[0].mxu0
        %3036 = vdwg.mxu0
        %v3037 = vadd.f32 %v2598, %v2911
        %v3038 = vadd.f32 %v2599, %v2914
        %v3039 = vadd.f32 %v2600, %v2919
        %v3040 = vadd.f32 %v2601, %v2922
        %v3041 = vadd.f32 %v2602, %v2927
        %v3042 = vadd.f32 %v2603, %v2930
        %v3043 = vadd.f32 %v2604, %v2935
        %v3044 = vadd.f32 %v2605, %v2938
        %v3045 = vadd.f32 %v2606, %v2943
        %v3046 = vadd.f32 %v2607, %v2946
        %v3047 = vadd.f32 %v2608, %v2951
        %v3048 = vadd.f32 %v2609, %v2954
        %v3049 = vadd.f32 %v2610, %v2959
        %v3050 = vadd.f32 %v2611, %v2962
        %v3051 = vadd.f32 %v2612, %v2967
        %v3052 = vadd.f32 %v2613, %v2970
        %v3053 = vadd.f32 %v2614, %v2975
        %v3054 = vadd.f32 %v2615, %v2978
        %v3055 = vadd.f32 %v2616, %v2983
        %v3056 = vadd.f32 %v2617, %v2986
        %v3057 = vadd.f32 %v2618, %v2991
        %v3058 = vadd.f32 %v2619, %v2994
        %v3059 = vadd.f32 %v2620, %v2999
        %v3060 = vadd.f32 %v2621, %v3002
        %v3061 = vadd.f32 %v2622, %v3007
        %v3062 = vadd.f32 %v2623, %v3010
        %v3063 = vadd.f32 %v2624, %v3015
        %v3064 = vadd.f32 %v2625, %v3018
        %v3065 = vadd.f32 %v2626, %v3023
        %v3066 = vadd.f32 %v2627, %v3026
        %v3067 = vadd.f32 %v2628, %v3031
        %v3068 = vadd.f32 %v2629, %v3034
        %v3069 = vld [vmem:[#allocation4] sm:$0xfe]
        %v3070 = vld [vmem:[%s4 + $0x60] sm:$0xf]
        %v3071 = vld [vmem:[%s4 + $0x64] sm:$0xf]
        %v3072 = vld [vmem:[%s4 + $0x68] sm:$0xf]
        %v3073 = vld [vmem:[%s4 + $0x6c] sm:$0xf]
        %v3074 = vld [vmem:[%s4 + $0x70] sm:$0xf]
        %v3075 = vld [vmem:[%s4 + $0x74] sm:$0xf]
        %v3076 = vld [vmem:[%s4 + $0x78] sm:$0xf]
        %v3077 = vld [vmem:[%s4 + $0x7c] sm:$0xf]
        %v3078 = vld [vmem:[%s4 + $0x80] sm:$0xf]
        %v3079 = vld [vmem:[%s4 + $0x84] sm:$0xf]
        %v3080 = vld [vmem:[%s4 + $0x88] sm:$0xf]
        %v3081 = vld [vmem:[%s4 + $0x8c] sm:$0xf]
        %vm3099 = vcmask 1046528
        %v3100 = vrot.slane %v3069, 1
        %v3101 = vrot.slane %v2631, 1
        %v3102 = vsel %vm3099, %v3100, %v3101
        %v3103 = vrot.slane %v2632, 1
        %v3104 = vsel %vm3099, %v3101, %v3103
        %v3105 = vrot.slane %v2633, 1
        %v3106 = vsel %vm3099, %v3103, %v3105
        %v3107 = vrot.slane %v2634, 1
        %v3108 = vsel %vm3099, %v3105, %v3107
        %v3109 = vrot.slane %v2635, 1
        %v3110 = vsel %vm3099, %v3107, %v3109
        %v3111 = vrot.slane %v2636, 1
        %v3112 = vsel %vm3099, %v3109, %v3111
        %v3113 = vrot.slane %v2637, 1
        %v3114 = vsel %vm3099, %v3111, %v3113
        %v3115 = vrot.slane %v2638, 1
        %v3116 = vsel %vm3099, %v3113, %v3115
        %v3117 = vrot.slane %v2639, 1
        %v3118 = vsel %vm3099, %v3115, %v3117
        %v3119 = vrot.slane %v2640, 1
        %v3120 = vsel %vm3099, %v3117, %v3119
        %v3121 = vrot.slane %v2641, 1
        %v3122 = vsel %vm3099, %v3119, %v3121
        %v3123 = vrot.slane %v2642, 1
        %v3124 = vsel %vm3099, %v3121, %v3123
        %v3125 = vrot.slane %v2643, 1
        %v3126 = vsel %vm3099, %v3123, %v3125
        %v3127 = vrot.slane %v2644, 1
        %v3128 = vsel %vm3099, %v3125, %v3127
        %v3129 = vrot.slane %v2645, 1
        %v3130 = vsel %vm3099, %v3127, %v3129
        %v3131 = vrot.slane %v2646, 1
        %v3132 = vsel %vm3099, %v3129, %v3131
        %v3145 = vunpack.c.l.b16 %v3070
        %v3146 = vunpack.c.l.b16 %v3071
        %v3147 = vunpack.c.l.b16 %v3072
        %v3148 = vunpack.c.l.b16 %v3073
        %v3149 = vunpack.c.l.b16 %v3074
        %v3150 = vunpack.c.l.b16 %v3075
        %v3151 = vunpack.c.l.b16 %v3076
        %v3152 = vunpack.c.l.b16 %v3077
        %v3153 = vunpack.c.l.b16 %v3078
        %v3154 = vunpack.c.l.b16 %v3079
        %v3155 = vunpack.c.l.b16 %v3080
        %v3156 = vunpack.c.l.b16 %v3081
        %v3157 = vpack.c.b16 %v3146, %v3145
        %v3158 = vpack.c.b16 %v3148, %v3147
        %v3159 = vpack.c.b16 %v3150, %v3149
        %v3160 = vpack.c.b16 %v3152, %v3151
        %v3161 = vpack.c.b16 %v3154, %v3153
        %v3162 = vpack.c.b16 %v3156, %v3155
        %v3170 = vsel %vm2388, %v3102, 0
        %v3173 = vsel %vm2388, %v3104, 0
        %v3176 = vsel %vm2388, %v3106, 0
        %v3179 = vsel %vm2388, %v3108, 0
        %v3182 = vsel %vm2388, %v3110, 0
        %v3185 = vsel %vm2388, %v3112, 0
        %v3188 = vsel %vm2388, %v3114, 0
        %v3191 = vsel %vm2388, %v3116, 0
        %v3194 = vsel %vm2388, %v3118, 0
        %v3197 = vsel %vm2388, %v3120, 0
        %v3200 = vsel %vm2388, %v3122, 0
        %v3203 = vsel %vm2388, %v3124, 0
        %v3206 = vsel %vm2388, %v3126, 0
        %v3209 = vsel %vm2388, %v3128, 0
        %v3212 = vsel %vm2388, %v3130, 0
        %v3215 = vsel %vm2388, %v3132, 0
        %3217 = vmatprep.subr.bf16.mxu0 0
        %3218 = vmatpush1.bf16.msra.mxu0 %v3157
        %3219 = vmatprep.subr.bf16.mxu0 0
        %3220 = vmatpush1.bf16.msra.mxu0 %v3158
        %3221 = vmatprep.subr.bf16.mxu0 0
        %3222 = vmatpush1.bf16.msra.mxu0 %v3159
        %3223 = vmatprep.subr.bf16.mxu0 0
        %3224 = vmatpush1.bf16.msra.mxu0 %v3160
        %3225 = vmatprep.subr.bf16.mxu0 0
        %3226 = vmatpush1.bf16.msra.mxu0 %v3161
        %3227 = vmatprep.subr.bf16.mxu0 0
        %3228 = vmatpush1.bf16.msra.mxu0 %v3162
        %3229 = vmatprep.subr.bf16.mxu0 0
        %3230 = vmatpush1.bf16.msra.mxu0 0
        %3231 = vmatprep.subr.bf16.mxu0 0
        %3232 = vmatpush1.bf16.msra.mxu0 0
        %3233 = vmatprep.subr.bf16.mxu0 0
        %3234 = vmatpush1.bf16.msra.mxu0 0
        %3235 = vmatprep.subr.bf16.mxu0 0
        %3236 = vmatpush1.bf16.msra.mxu0 0
        %3237 = vmatprep.subr.bf16.mxu0 0
        %3238 = vmatpush1.bf16.msra.mxu0 0
        %3239 = vmatprep.subr.bf16.mxu0 0
        %3240 = vmatpush1.bf16.msra.mxu0 0
        %3241 = vmatprep.subr.bf16.mxu0 0
        %3242 = vmatpush1.bf16.msra.mxu0 0
        %3243 = vmatprep.subr.bf16.mxu0 0
        %3244 = vmatpush1.bf16.msra.mxu0 0
        %3245 = vmatprep.subr.bf16.mxu0 0
        %3246 = vmatpush1.bf16.msra.mxu0 0
        %3247 = vmatprep.subr.bf16.mxu0 0
        %3248 = vmatpush1.bf16.msra.mxu0 0
        %3249 = vmatprep.mubr.bf16.mxu0 0
        %3250 = vmatmul.mubr.bf16.gmra.mrb[0].mxu0 %v3170
        %v3251 = vpop.f32.mrb[0].mxu0
        %v3252 = vadd.f32 0.0, %v3251
        %v3253 = vpop.f32.mrb[0].mxu0
        %v3254 = vpop.f32.mrb[0].mxu0
        %v3255 = vadd.f32 0.0, %v3254
        %v3256 = vpop.f32.mrb[0].mxu0
        %3257 = vmatprep.mubr.bf16.mxu0 0
        %3258 = vmatmul.mubr.bf16.gmra.mrb[0].mxu0 %v3173
        %v3259 = vpop.f32.mrb[0].mxu0
        %v3260 = vadd.f32 0.0, %v3259
        %v3261 = vpop.f32.mrb[0].mxu0
        %v3262 = vpop.f32.mrb[0].mxu0
        %v3263 = vadd.f32 0.0, %v3262
        %v3264 = vpop.f32.mrb[0].mxu0
        %3265 = vmatprep.mubr.bf16.mxu0 0
        %3266 = vmatmul.mubr.bf16.gmra.mrb[0].mxu0 %v3176
        %v3267 = vpop.f32.mrb[0].mxu0
        %v3268 = vadd.f32 0.0, %v3267
        %v3269 = vpop.f32.mrb[0].mxu0
        %v3270 = vpop.f32.mrb[0].mxu0
        %v3271 = vadd.f32 0.0, %v3270
        %v3272 = vpop.f32.mrb[0].mxu0
        %3273 = vmatprep.mubr.bf16.mxu0 0
        %3274 = vmatmul.mubr.bf16.gmra.mrb[0].mxu0 %v3179
        %v3275 = vpop.f32.mrb[0].mxu0
        %v3276 = vadd.f32 0.0, %v3275
        %v3277 = vpop.f32.mrb[0].mxu0
        %v3278 = vpop.f32.mrb[0].mxu0
        %v3279 = vadd.f32 0.0, %v3278
        %v3280 = vpop.f32.mrb[0].mxu0
        %3281 = vmatprep.mubr.bf16.mxu0 0
        %3282 = vmatmul.mubr.bf16.gmra.mrb[0].mxu0 %v3182
        %v3283 = vpop.f32.mrb[0].mxu0
        %v3284 = vadd.f32 0.0, %v3283
        %v3285 = vpop.f32.mrb[0].mxu0
        %v3286 = vpop.f32.mrb[0].mxu0
        %v3287 = vadd.f32 0.0, %v3286
        %v3288 = vpop.f32.mrb[0].mxu0
        %3289 = vmatprep.mubr.bf16.mxu0 0
        %3290 = vmatmul.mubr.bf16.gmra.mrb[0].mxu0 %v3185
        %v3291 = vpop.f32.mrb[0].mxu0
        %v3292 = vadd.f32 0.0, %v3291
        %v3293 = vpop.f32.mrb[0].mxu0
        %v3294 = vpop.f32.mrb[0].mxu0
        %v3295 = vadd.f32 0.0, %v3294
        %v3296 = vpop.f32.mrb[0].mxu0
        %3297 = vmatprep.mubr.bf16.mxu0 0
        %3298 = vmatmul.mubr.bf16.gmra.mrb[0].mxu0 %v3188
        %v3299 = vpop.f32.mrb[0].mxu0
        %v3300 = vadd.f32 0.0, %v3299
        %v3301 = vpop.f32.mrb[0].mxu0
        %v3302 = vpop.f32.mrb[0].mxu0
        %v3303 = vadd.f32 0.0, %v3302
        %v3304 = vpop.f32.mrb[0].mxu0
        %3305 = vmatprep.mubr.bf16.mxu0 0
        %3306 = vmatmul.mubr.bf16.gmra.mrb[0].mxu0 %v3191
        %v3307 = vpop.f32.mrb[0].mxu0
        %v3308 = vadd.f32 0.0, %v3307
        %v3309 = vpop.f32.mrb[0].mxu0
        %v3310 = vpop.f32.mrb[0].mxu0
        %v3311 = vadd.f32 0.0, %v3310
        %v3312 = vpop.f32.mrb[0].mxu0
        %3313 = vmatprep.mubr.bf16.mxu0 0
        %3314 = vmatmul.mubr.bf16.gmra.mrb[0].mxu0 %v3194
        %v3315 = vpop.f32.mrb[0].mxu0
        %v3316 = vadd.f32 0.0, %v3315
        %v3317 = vpop.f32.mrb[0].mxu0
        %v3318 = vpop.f32.mrb[0].mxu0
        %v3319 = vadd.f32 0.0, %v3318
        %v3320 = vpop.f32.mrb[0].mxu0
        %3321 = vmatprep.mubr.bf16.mxu0 0
        %3322 = vmatmul.mubr.bf16.gmra.mrb[0].mxu0 %v3197
        %v3323 = vpop.f32.mrb[0].mxu0
        %v3324 = vadd.f32 0.0, %v3323
        %v3325 = vpop.f32.mrb[0].mxu0
        %v3326 = vpop.f32.mrb[0].mxu0
        %v3327 = vadd.f32 0.0, %v3326
        %v3328 = vpop.f32.mrb[0].mxu0
        %3329 = vmatprep.mubr.bf16.mxu0 0
        %3330 = vmatmul.mubr.bf16.gmra.mrb[0].mxu0 %v3200
        %v3331 = vpop.f32.mrb[0].mxu0
        %v3332 = vadd.f32 0.0, %v3331
        %v3333 = vpop.f32.mrb[0].mxu0
        %v3334 = vpop.f32.mrb[0].mxu0
        %v3335 = vadd.f32 0.0, %v3334
        %v3336 = vpop.f32.mrb[0].mxu0
        %3337 = vmatprep.mubr.bf16.mxu0 0
        %3338 = vmatmul.mubr.bf16.gmra.mrb[0].mxu0 %v3203
        %v3339 = vpop.f32.mrb[0].mxu0
        %v3340 = vadd.f32 0.0, %v3339
        %v3341 = vpop.f32.mrb[0].mxu0
        %v3342 = vpop.f32.mrb[0].mxu0
        %v3343 = vadd.f32 0.0, %v3342
        %v3344 = vpop.f32.mrb[0].mxu0
        %3345 = vmatprep.mubr.bf16.mxu0 0
        %3346 = vmatmul.mubr.bf16.gmra.mrb[0].mxu0 %v3206
        %v3347 = vpop.f32.mrb[0].mxu0
        %v3348 = vadd.f32 0.0, %v3347
        %v3349 = vpop.f32.mrb[0].mxu0
        %v3350 = vpop.f32.mrb[0].mxu0
        %v3351 = vadd.f32 0.0, %v3350
        %v3352 = vpop.f32.mrb[0].mxu0
        %3353 = vmatprep.mubr.bf16.mxu0 0
        %3354 = vmatmul.mubr.bf16.gmra.mrb[0].mxu0 %v3209
        %v3355 = vpop.f32.mrb[0].mxu0
        %v3356 = vadd.f32 0.0, %v3355
        %v3357 = vpop.f32.mrb[0].mxu0
        %v3358 = vpop.f32.mrb[0].mxu0
        %v3359 = vadd.f32 0.0, %v3358
        %v3360 = vpop.f32.mrb[0].mxu0
        %3361 = vmatprep.mubr.bf16.mxu0 0
        %3362 = vmatmul.mubr.bf16.gmra.mrb[0].mxu0 %v3212
        %v3363 = vpop.f32.mrb[0].mxu0
        %v3364 = vadd.f32 0.0, %v3363
        %v3365 = vpop.f32.mrb[0].mxu0
        %v3366 = vpop.f32.mrb[0].mxu0
        %v3367 = vadd.f32 0.0, %v3366
        %v3368 = vpop.f32.mrb[0].mxu0
        %3369 = vmatprep.mubr.bf16.mxu0 0
        %3370 = vmatmul.mubr.bf16.gmra.mrb[0].mxu0 %v3215
        %v3371 = vpop.f32.mrb[0].mxu0
        %v3372 = vadd.f32 0.0, %v3371
        %v3373 = vpop.f32.mrb[0].mxu0
        %v3374 = vpop.f32.mrb[0].mxu0
        %v3375 = vadd.f32 0.0, %v3374
        %v3376 = vpop.f32.mrb[0].mxu0
        %3377 = vdwg.mxu0
        %v3378 = vmul.f32 %v3252, %v1073
        %v3379 = vmul.f32 %v3255, %v1074
        %v3380 = vmul.f32 %v3260, %v1075
        %v3381 = vmul.f32 %v3263, %v1076
        %v3382 = vmul.f32 %v3268, %v1077
        %v3383 = vmul.f32 %v3271, %v1078
        %v3384 = vmul.f32 %v3276, %v1079
        %v3385 = vmul.f32 %v3279, %v1080
        %v3386 = vmul.f32 %v3284, %v1081
        %v3387 = vmul.f32 %v3287, %v1082
        %v3388 = vmul.f32 %v3292, %v1083
        %v3389 = vmul.f32 %v3295, %v1084
        %v3390 = vmul.f32 %v3300, %v1085
        %v3391 = vmul.f32 %v3303, %v1086
        %v3392 = vmul.f32 %v3308, %v1087
        %v3393 = vmul.f32 %v3311, %v1088
        %v3394 = vmul.f32 %v3316, %v1089
        %v3395 = vmul.f32 %v3319, %v1090
        %v3396 = vmul.f32 %v3324, %v1091
        %v3397 = vmul.f32 %v3327, %v1092
        %v3398 = vmul.f32 %v3332, %v1093
        %v3399 = vmul.f32 %v3335, %v1094
        %v3400 = vmul.f32 %v3340, %v1095
        %v3401 = vmul.f32 %v3343, %v1096
        %v3402 = vmul.f32 %v3348, %v1097
        %v3403 = vmul.f32 %v3351, %v1098
        %v3404 = vmul.f32 %v3356, %v1099
        %v3405 = vmul.f32 %v3359, %v1100
        %v3406 = vmul.f32 %v3364, %v1101
        %v3407 = vmul.f32 %v3367, %v1102
        %v3408 = vmul.f32 %v3372, %v1103
        %v3409 = vmul.f32 %v3375, %v1104
        %v3410 = vadd.f32 %v3037, %v3378
        %v3411 = vadd.f32 %v3038, %v3379
        %v3412 = vadd.f32 %v3039, %v3380
        %v3413 = vadd.f32 %v3040, %v3381
        %v3414 = vadd.f32 %v3041, %v3382
        %v3415 = vadd.f32 %v3042, %v3383
        %v3416 = vadd.f32 %v3043, %v3384
        %v3417 = vadd.f32 %v3044, %v3385
        %v3418 = vadd.f32 %v3045, %v3386
        %v3419 = vadd.f32 %v3046, %v3387
        %v3420 = vadd.f32 %v3047, %v3388
        %v3421 = vadd.f32 %v3048, %v3389
        %v3422 = vadd.f32 %v3049, %v3390
        %v3423 = vadd.f32 %v3050, %v3391
        %v3424 = vadd.f32 %v3051, %v3392
        %v3425 = vadd.f32 %v3052, %v3393
        %v3426 = vadd.f32 %v3053, %v3394
        %v3427 = vadd.f32 %v3054, %v3395
        %v3428 = vadd.f32 %v3055, %v3396
        %v3429 = vadd.f32 %v3056, %v3397
        %v3430 = vadd.f32 %v3057, %v3398
        %v3431 = vadd.f32 %v3058, %v3399
        %v3432 = vadd.f32 %v3059, %v3400
        %v3433 = vadd.f32 %v3060, %v3401
        %v3434 = vadd.f32 %v3061, %v3402
        %v3435 = vadd.f32 %v3062, %v3403
        %v3436 = vadd.f32 %v3063, %v3404
        %v3437 = vadd.f32 %v3064, %v3405
        %v3438 = vadd.f32 %v3065, %v3406
        %v3439 = vadd.f32 %v3066, %v3407
        %v3440 = vadd.f32 %v3067, %v3408
        %v3441 = vadd.f32 %v3068, %v3409
        %v3442 = vld [vmem:[%s5] sm:$0x1]
        %v3444 = vlaneseq
        %v3445 = vshrl.u32 %v3444, 7
        %v3446 = vsub.s32 0, %v3445
        %v3447 = vrot.slane %v3442, %v3446
        %v3449 = vadd.f32 %v3410, %v3447
        %v3450 = vadd.f32 %v3411, %v3447
        %v3451 = vadd.f32 %v3412, %v3447
        %v3452 = vadd.f32 %v3413, %v3447
        %v3453 = vadd.f32 %v3414, %v3447
        %v3454 = vadd.f32 %v3415, %v3447
        %v3455 = vadd.f32 %v3416, %v3447
        %v3456 = vadd.f32 %v3417, %v3447
        %v3457 = vadd.f32 %v3418, %v3447
        %v3458 = vadd.f32 %v3419, %v3447
        %v3459 = vadd.f32 %v3420, %v3447
        %v3460 = vadd.f32 %v3421, %v3447
        %v3461 = vadd.f32 %v3422, %v3447
        %v3462 = vadd.f32 %v3423, %v3447
        %v3463 = vadd.f32 %v3424, %v3447
        %v3464 = vadd.f32 %v3425, %v3447
        %v3465 = vadd.f32 %v3426, %v3447
        %v3466 = vadd.f32 %v3427, %v3447
        %v3467 = vadd.f32 %v3428, %v3447
        %v3468 = vadd.f32 %v3429, %v3447
        %v3469 = vadd.f32 %v3430, %v3447
        %v3470 = vadd.f32 %v3431, %v3447
        %v3471 = vadd.f32 %v3432, %v3447
        %v3472 = vadd.f32 %v3433, %v3447
        %v3473 = vadd.f32 %v3434, %v3447
        %v3474 = vadd.f32 %v3435, %v3447
        %v3475 = vadd.f32 %v3436, %v3447
        %v3476 = vadd.f32 %v3437, %v3447
        %v3477 = vadd.f32 %v3438, %v3447
        %v3478 = vadd.f32 %v3439, %v3447
        %v3479 = vadd.f32 %v3440, %v3447
        %v3480 = vadd.f32 %v3441, %v3447
        %v3481 = vld [vmem:[%s452] sm:$0x1]
        %v3483 = vlaneseq
        %v3484 = vshrl.u32 %v3483, 7
        %v3485 = vsub.s32 0, %v3484
        %v3486 = vrot.slane %v3481, %v3485
        %v3488 = vadd.f32 %v3449, %v3486
        %v3489 = vadd.f32 %v3450, %v3486
        %v3490 = vadd.f32 %v3451, %v3486
        %v3491 = vadd.f32 %v3452, %v3486
        %v3492 = vadd.f32 %v3453, %v3486
        %v3493 = vadd.f32 %v3454, %v3486
        %v3494 = vadd.f32 %v3455, %v3486
        %v3495 = vadd.f32 %v3456, %v3486
        %v3496 = vadd.f32 %v3457, %v3486
        %v3497 = vadd.f32 %v3458, %v3486
        %v3498 = vadd.f32 %v3459, %v3486
        %v3499 = vadd.f32 %v3460, %v3486
        %v3500 = vadd.f32 %v3461, %v3486
        %v3501 = vadd.f32 %v3462, %v3486
        %v3502 = vadd.f32 %v3463, %v3486
        %v3503 = vadd.f32 %v3464, %v3486
        %v3504 = vadd.f32 %v3465, %v3486
        %v3505 = vadd.f32 %v3466, %v3486
        %v3506 = vadd.f32 %v3467, %v3486
        %v3507 = vadd.f32 %v3468, %v3486
        %v3508 = vadd.f32 %v3469, %v3486
        %v3509 = vadd.f32 %v3470, %v3486
        %v3510 = vadd.f32 %v3471, %v3486
        %v3511 = vadd.f32 %v3472, %v3486
        %v3512 = vadd.f32 %v3473, %v3486
        %v3513 = vadd.f32 %v3474, %v3486
        %v3514 = vadd.f32 %v3475, %v3486
        %v3515 = vadd.f32 %v3476, %v3486
        %v3516 = vadd.f32 %v3477, %v3486
        %v3517 = vadd.f32 %v3478, %v3486
        %v3518 = vadd.f32 %v3479, %v3486
        %v3519 = vadd.f32 %v3480, %v3486
        %v3520 = vld [vmem:[%s6] sm:$0x1]
        %v3521 = vld [vmem:[%s7] sm:$0x1]
        %v3522 = vld [vmem:[%s10] sm:$0xff]
        %v3523 = vld [vmem:[%s10 + $0x8] sm:$0xff]
        %v3524 = vld [vmem:[%s10 + $0x10] sm:$0xff]
        %v3525 = vld [vmem:[%s10 + $0x18] sm:$0xff]
        %v3526 = vld [vmem:[%s10 + $0x20] sm:$0xff]
        %v3527 = vld [vmem:[%s10 + $0x28] sm:$0xff]
        %v3528 = vld [vmem:[%s10 + $0x30] sm:$0xff]
        %v3529 = vld [vmem:[%s10 + $0x38] sm:$0xff]
        %v3530 = vsel %vm459, %v3488, 0.0
        %v3531 = vsel %vm459, %v3489, 0.0
        %v3532 = vadd.f32 %v3530, %v3531
        %v3533 = vsel %vm459, %v3490, 0.0
        %v3534 = vadd.f32 %v3532, %v3533
        %v3535 = vsel %vm459, %v3491, 0.0
        %v3536 = vadd.f32 %v3534, %v3535
        %v3537 = vsel %vm459, %v3492, 0.0
        %v3538 = vadd.f32 %v3536, %v3537
        %v3539 = vsel %vm459, %v3493, 0.0
        %v3540 = vadd.f32 %v3538, %v3539
        %v3541 = vsel %vm459, %v3494, 0.0
        %v3542 = vadd.f32 %v3540, %v3541
        %v3543 = vsel %vm459, %v3495, 0.0
        %v3544 = vadd.f32 %v3542, %v3543
        %v3545 = vsel %vm459, %v3496, 0.0
        %v3546 = vadd.f32 %v3544, %v3545
        %v3547 = vsel %vm459, %v3497, 0.0
        %v3548 = vadd.f32 %v3546, %v3547
        %v3549 = vsel %vm459, %v3498, 0.0
        %v3550 = vadd.f32 %v3548, %v3549
        %v3551 = vsel %vm459, %v3499, 0.0
        %v3552 = vadd.f32 %v3550, %v3551
        %v3553 = vsel %vm459, %v3500, 0.0
        %v3554 = vadd.f32 %v3552, %v3553
        %v3555 = vsel %vm459, %v3501, 0.0
        %v3556 = vadd.f32 %v3554, %v3555
        %v3557 = vsel %vm459, %v3502, 0.0
        %v3558 = vadd.f32 %v3556, %v3557
        %v3559 = vsel %vm459, %v3503, 0.0
        %v3560 = vadd.f32 %v3558, %v3559
        %v3561 = vsel %vm459, %v3504, 0.0
        %v3562 = vadd.f32 %v3560, %v3561
        %v3563 = vsel %vm459, %v3505, 0.0
        %v3564 = vadd.f32 %v3562, %v3563
        %v3565 = vsel %vm459, %v3506, 0.0
        %v3566 = vadd.f32 %v3564, %v3565
        %v3567 = vsel %vm459, %v3507, 0.0
        %v3568 = vadd.f32 %v3566, %v3567
        %v3569 = vsel %vm459, %v3508, 0.0
        %v3570 = vadd.f32 %v3568, %v3569
        %v3571 = vsel %vm459, %v3509, 0.0
        %v3572 = vadd.f32 %v3570, %v3571
        %v3573 = vsel %vm459, %v3510, 0.0
        %v3574 = vadd.f32 %v3572, %v3573
        %v3575 = vsel %vm459, %v3511, 0.0
        %v3576 = vadd.f32 %v3574, %v3575
        %v3577 = vsel %vm459, %v3512, 0.0
        %v3578 = vadd.f32 %v3576, %v3577
        %v3579 = vsel %vm459, %v3513, 0.0
        %v3580 = vadd.f32 %v3578, %v3579
        %v3581 = vsel %vm459, %v3514, 0.0
        %v3582 = vadd.f32 %v3580, %v3581
        %v3583 = vsel %vm459, %v3515, 0.0
        %v3584 = vadd.f32 %v3582, %v3583
        %v3585 = vsel %vm459, %v3516, 0.0
        %v3586 = vadd.f32 %v3584, %v3585
        %v3587 = vsel %vm459, %v3517, 0.0
        %v3588 = vadd.f32 %v3586, %v3587
        %v3589 = vsel %vm459, %v3518, 0.0
        %v3590 = vadd.f32 %v3588, %v3589
        %v3591 = vsel %vm459, %v3519, 0.0
        %v3592 = vadd.f32 %v3590, %v3591
        %v3593 = vrot.slane %v3592, 4
        %v3594 = vadd.f32 %v3592, %v3593
        %v3595 = vrot.slane %v3594, 2
        %v3596 = vadd.f32 %v3594, %v3595
        %v3597 = vrot.slane %v3596, 1
        %v3598 = vadd.f32 %v3596, %v3597
        %v3600 = vsel %vm459, %v3598, 0
        %3602 = vmatprep.subr.mxu0 0.0
        %3603 = vmatpush1.msra.mxu0 %v3522
        %3604 = vmatprep.subr.mxu0 0.0
        %3605 = vmatpush1.msra.mxu0 %v3523
        %3606 = vmatprep.subr.mxu0 0.0
        %3607 = vmatpush1.msra.mxu0 %v3524
        %3608 = vmatprep.subr.mxu0 0.0
        %3609 = vmatpush1.msra.mxu0 %v3525
        %3610 = vmatprep.subr.mxu0 0.0
        %3611 = vmatpush1.msra.mxu0 %v3526
        %3612 = vmatprep.subr.mxu0 0.0
        %3613 = vmatpush1.msra.mxu0 %v3527
        %3614 = vmatprep.subr.mxu0 0.0
        %3615 = vmatpush1.msra.mxu0 %v3528
        %3616 = vmatprep.subr.mxu0 0.0
        %3617 = vmatpush1.msra.mxu0 %v3529
        %3618 = vmatprep.subr.mxu0 0.0
        %3619 = vmatpush1.msra.mxu0 0.0
        %3620 = vmatprep.subr.mxu0 0.0
        %3621 = vmatpush1.msra.mxu0 0.0
        %3622 = vmatprep.subr.mxu0 0.0
        %3623 = vmatpush1.msra.mxu0 0.0
        %3624 = vmatprep.subr.mxu0 0.0
        %3625 = vmatpush1.msra.mxu0 0.0
        %3626 = vmatprep.subr.mxu0 0.0
        %3627 = vmatpush1.msra.mxu0 0.0
        %3628 = vmatprep.subr.mxu0 0.0
        %3629 = vmatpush1.msra.mxu0 0.0
        %3630 = vmatprep.subr.mxu0 0.0
        %3631 = vmatpush1.msra.mxu0 0.0
        %3632 = vmatprep.subr.mxu0 0.0
        %3633 = vmatpush1.msra.mxu0 0.0
        %3634 = vmatprep.subr.mxu0 0.0
        %3635 = vmatpush1.msra.mxu0 0.0
        %3636 = vmatprep.subr.mxu0 0.0
        %3637 = vmatpush1.msra.mxu0 0.0
        %3638 = vmatprep.subr.mxu0 0.0
        %3639 = vmatpush1.msra.mxu0 0.0
        %3640 = vmatprep.subr.mxu0 0.0
        %3641 = vmatpush1.msra.mxu0 0.0
        %3642 = vmatprep.subr.mxu0 0.0
        %3643 = vmatpush1.msra.mxu0 0.0
        %3644 = vmatprep.subr.mxu0 0.0
        %3645 = vmatpush1.msra.mxu0 0.0
        %3646 = vmatprep.subr.mxu0 0.0
        %3647 = vmatpush1.msra.mxu0 0.0
        %3648 = vmatprep.subr.mxu0 0.0
        %3649 = vmatpush1.msra.mxu0 0.0
        %3650 = vmatprep.subr.mxu0 0.0
        %3651 = vmatpush1.msra.mxu0 0.0
        %3652 = vmatprep.subr.mxu0 0.0
        %3653 = vmatpush1.msra.mxu0 0.0
        %3654 = vmatprep.subr.mxu0 0.0
        %3655 = vmatpush1.msra.mxu0 0.0
        %3656 = vmatprep.subr.mxu0 0.0
        %3657 = vmatpush1.msra.mxu0 0.0
        %3658 = vmatprep.subr.mxu0 0.0
        %3659 = vmatpush1.msra.mxu0 0.0
        %3660 = vmatprep.subr.mxu0 0.0
        %3661 = vmatpush1.msra.mxu0 0.0
        %3662 = vmatprep.subr.mxu0 0.0
        %3663 = vmatpush1.msra.mxu0 0.0
        %3664 = vmatprep.subr.mxu0 0.0
        %3665 = vmatpush1.msra.mxu0 0.0
        %3666 = vmatprep.mubr.f32.mxu0 0.0
        %3667 = vmatmul.mubr.f32.gmra.mrb[0].mxu0 %v3600
        %v3668 = vpop.f32.mrb[0].mxu0
        %v3669 = vadd.f32 0.0, %v3668
        %v3670 = vpop.f32.mrb[0].mxu0
        %3671 = vdwg.mxu0
        %v3672 = vlaneseq
        %v3673 = vshrl.u32 %v3672, 7
        %v3674 = vsub.s32 0, %v3673
        %v3675 = vrot.slane %v3669, %v3674
        %v3676 = vsub.f32 %v3488, %v3675
        %v3677 = vsub.f32 %v3489, %v3675
        %v3678 = vsub.f32 %v3490, %v3675
        %v3679 = vsub.f32 %v3491, %v3675
        %v3680 = vsub.f32 %v3492, %v3675
        %v3681 = vsub.f32 %v3493, %v3675
        %v3682 = vsub.f32 %v3494, %v3675
        %v3683 = vsub.f32 %v3495, %v3675
        %v3684 = vsub.f32 %v3496, %v3675
        %v3685 = vsub.f32 %v3497, %v3675
        %v3686 = vsub.f32 %v3498, %v3675
        %v3687 = vsub.f32 %v3499, %v3675
        %v3688 = vsub.f32 %v3500, %v3675
        %v3689 = vsub.f32 %v3501, %v3675
        %v3690 = vsub.f32 %v3502, %v3675
        %v3691 = vsub.f32 %v3503, %v3675
        %v3692 = vsub.f32 %v3504, %v3675
        %v3693 = vsub.f32 %v3505, %v3675
        %v3694 = vsub.f32 %v3506, %v3675
        %v3695 = vsub.f32 %v3507, %v3675
        %v3696 = vsub.f32 %v3508, %v3675
        %v3697 = vsub.f32 %v3509, %v3675
        %v3698 = vsub.f32 %v3510, %v3675
        %v3699 = vsub.f32 %v3511, %v3675
        %v3700 = vsub.f32 %v3512, %v3675
        %v3701 = vsub.f32 %v3513, %v3675
        %v3702 = vsub.f32 %v3514, %v3675
        %v3703 = vsub.f32 %v3515, %v3675
        %v3704 = vsub.f32 %v3516, %v3675
        %v3705 = vsub.f32 %v3517, %v3675
        %v3706 = vsub.f32 %v3518, %v3675
        %v3707 = vsub.f32 %v3519, %v3675
        %v3708 = vmul.f32 %v3676, %v3676
        %v3709 = vmul.f32 %v3677, %v3677
        %v3710 = vmul.f32 %v3678, %v3678
        %v3711 = vmul.f32 %v3679, %v3679
        %v3712 = vmul.f32 %v3680, %v3680
        %v3713 = vmul.f32 %v3681, %v3681
        %v3714 = vmul.f32 %v3682, %v3682
        %v3715 = vmul.f32 %v3683, %v3683
        %v3716 = vmul.f32 %v3684, %v3684
        %v3717 = vmul.f32 %v3685, %v3685
        %v3718 = vmul.f32 %v3686, %v3686
        %v3719 = vmul.f32 %v3687, %v3687
        %v3720 = vmul.f32 %v3688, %v3688
        %v3721 = vmul.f32 %v3689, %v3689
        %v3722 = vmul.f32 %v3690, %v3690
        %v3723 = vmul.f32 %v3691, %v3691
        %v3724 = vmul.f32 %v3692, %v3692
        %v3725 = vmul.f32 %v3693, %v3693
        %v3726 = vmul.f32 %v3694, %v3694
        %v3727 = vmul.f32 %v3695, %v3695
        %v3728 = vmul.f32 %v3696, %v3696
        %v3729 = vmul.f32 %v3697, %v3697
        %v3730 = vmul.f32 %v3698, %v3698
        %v3731 = vmul.f32 %v3699, %v3699
        %v3732 = vmul.f32 %v3700, %v3700
        %v3733 = vmul.f32 %v3701, %v3701
        %v3734 = vmul.f32 %v3702, %v3702
        %v3735 = vmul.f32 %v3703, %v3703
        %v3736 = vmul.f32 %v3704, %v3704
        %v3737 = vmul.f32 %v3705, %v3705
        %v3738 = vmul.f32 %v3706, %v3706
        %v3739 = vmul.f32 %v3707, %v3707
        %v3740 = vsel %vm459, %v3708, 0.0
        %v3741 = vsel %vm459, %v3709, 0.0
        %v3742 = vadd.f32 %v3740, %v3741
        %v3743 = vsel %vm459, %v3710, 0.0
        %v3744 = vadd.f32 %v3742, %v3743
        %v3745 = vsel %vm459, %v3711, 0.0
        %v3746 = vadd.f32 %v3744, %v3745
        %v3747 = vsel %vm459, %v3712, 0.0
        %v3748 = vadd.f32 %v3746, %v3747
        %v3749 = vsel %vm459, %v3713, 0.0
        %v3750 = vadd.f32 %v3748, %v3749
        %v3751 = vsel %vm459, %v3714, 0.0
        %v3752 = vadd.f32 %v3750, %v3751
        %v3753 = vsel %vm459, %v3715, 0.0
        %v3754 = vadd.f32 %v3752, %v3753
        %v3755 = vsel %vm459, %v3716, 0.0
        %v3756 = vadd.f32 %v3754, %v3755
        %v3757 = vsel %vm459, %v3717, 0.0
        %v3758 = vadd.f32 %v3756, %v3757
        %v3759 = vsel %vm459, %v3718, 0.0
        %v3760 = vadd.f32 %v3758, %v3759
        %v3761 = vsel %vm459, %v3719, 0.0
        %v3762 = vadd.f32 %v3760, %v3761
        %v3763 = vsel %vm459, %v3720, 0.0
        %v3764 = vadd.f32 %v3762, %v3763
        %v3765 = vsel %vm459, %v3721, 0.0
        %v3766 = vadd.f32 %v3764, %v3765
        %v3767 = vsel %vm459, %v3722, 0.0
        %v3768 = vadd.f32 %v3766, %v3767
        %v3769 = vsel %vm459, %v3723, 0.0
        %v3770 = vadd.f32 %v3768, %v3769
        %v3771 = vsel %vm459, %v3724, 0.0
        %v3772 = vadd.f32 %v3770, %v3771
        %v3773 = vsel %vm459, %v3725, 0.0
        %v3774 = vadd.f32 %v3772, %v3773
        %v3775 = vsel %vm459, %v3726, 0.0
        %v3776 = vadd.f32 %v3774, %v3775
        %v3777 = vsel %vm459, %v3727, 0.0
        %v3778 = vadd.f32 %v3776, %v3777
        %v3779 = vsel %vm459, %v3728, 0.0
        %v3780 = vadd.f32 %v3778, %v3779
        %v3781 = vsel %vm459, %v3729, 0.0
        %v3782 = vadd.f32 %v3780, %v3781
        %v3783 = vsel %vm459, %v3730, 0.0
        %v3784 = vadd.f32 %v3782, %v3783
        %v3785 = vsel %vm459, %v3731, 0.0
        %v3786 = vadd.f32 %v3784, %v3785
        %v3787 = vsel %vm459, %v3732, 0.0
        %v3788 = vadd.f32 %v3786, %v3787
        %v3789 = vsel %vm459, %v3733, 0.0
        %v3790 = vadd.f32 %v3788, %v3789
        %v3791 = vsel %vm459, %v3734, 0.0
        %v3792 = vadd.f32 %v3790, %v3791
        %v3793 = vsel %vm459, %v3735, 0.0
        %v3794 = vadd.f32 %v3792, %v3793
        %v3795 = vsel %vm459, %v3736, 0.0
        %v3796 = vadd.f32 %v3794, %v3795
        %v3797 = vsel %vm459, %v3737, 0.0
        %v3798 = vadd.f32 %v3796, %v3797
        %v3799 = vsel %vm459, %v3738, 0.0
        %v3800 = vadd.f32 %v3798, %v3799
        %v3801 = vsel %vm459, %v3739, 0.0
        %v3802 = vadd.f32 %v3800, %v3801
        %v3803 = vrot.slane %v3802, 4
        %v3804 = vadd.f32 %v3802, %v3803
        %v3805 = vrot.slane %v3804, 2
        %v3806 = vadd.f32 %v3804, %v3805
        %v3807 = vrot.slane %v3806, 1
        %v3808 = vadd.f32 %v3806, %v3807
        %v3810 = vsel %vm459, %v3808, 0
        %3812 = vmatprep.subr.mxu0 0.0
        %3813 = vmatpush1.msra.mxu0 %v3522
        %3814 = vmatprep.subr.mxu0 0.0
        %3815 = vmatpush1.msra.mxu0 %v3523
        %3816 = vmatprep.subr.mxu0 0.0
        %3817 = vmatpush1.msra.mxu0 %v3524
        %3818 = vmatprep.subr.mxu0 0.0
        %3819 = vmatpush1.msra.mxu0 %v3525
        %3820 = vmatprep.subr.mxu0 0.0
        %3821 = vmatpush1.msra.mxu0 %v3526
        %3822 = vmatprep.subr.mxu0 0.0
        %3823 = vmatpush1.msra.mxu0 %v3527
        %3824 = vmatprep.subr.mxu0 0.0
        %3825 = vmatpush1.msra.mxu0 %v3528
        %3826 = vmatprep.subr.mxu0 0.0
        %3827 = vmatpush1.msra.mxu0 %v3529
        %3828 = vmatprep.subr.mxu0 0.0
        %3829 = vmatpush1.msra.mxu0 0.0
        %3830 = vmatprep.subr.mxu0 0.0
        %3831 = vmatpush1.msra.mxu0 0.0
        %3832 = vmatprep.subr.mxu0 0.0
        %3833 = vmatpush1.msra.mxu0 0.0
        %3834 = vmatprep.subr.mxu0 0.0
        %3835 = vmatpush1.msra.mxu0 0.0
        %3836 = vmatprep.subr.mxu0 0.0
        %3837 = vmatpush1.msra.mxu0 0.0
        %3838 = vmatprep.subr.mxu0 0.0
        %3839 = vmatpush1.msra.mxu0 0.0
        %3840 = vmatprep.subr.mxu0 0.0
        %3841 = vmatpush1.msra.mxu0 0.0
        %3842 = vmatprep.subr.mxu0 0.0
        %3843 = vmatpush1.msra.mxu0 0.0
        %3844 = vmatprep.subr.mxu0 0.0
        %3845 = vmatpush1.msra.mxu0 0.0
        %3846 = vmatprep.subr.mxu0 0.0
        %3847 = vmatpush1.msra.mxu0 0.0
        %3848 = vmatprep.subr.mxu0 0.0
        %3849 = vmatpush1.msra.mxu0 0.0
        %3850 = vmatprep.subr.mxu0 0.0
        %3851 = vmatpush1.msra.mxu0 0.0
        %3852 = vmatprep.subr.mxu0 0.0
        %3853 = vmatpush1.msra.mxu0 0.0
        %3854 = vmatprep.subr.mxu0 0.0
        %3855 = vmatpush1.msra.mxu0 0.0
        %3856 = vmatprep.subr.mxu0 0.0
        %3857 = vmatpush1.msra.mxu0 0.0
        %3858 = vmatprep.subr.mxu0 0.0
        %3859 = vmatpush1.msra.mxu0 0.0
        %3860 = vmatprep.subr.mxu0 0.0
        %3861 = vmatpush1.msra.mxu0 0.0
        %3862 = vmatprep.subr.mxu0 0.0
        %3863 = vmatpush1.msra.mxu0 0.0
        %3864 = vmatprep.subr.mxu0 0.0
        %3865 = vmatpush1.msra.mxu0 0.0
        %3866 = vmatprep.subr.mxu0 0.0
        %3867 = vmatpush1.msra.mxu0 0.0
        %3868 = vmatprep.subr.mxu0 0.0
        %3869 = vmatpush1.msra.mxu0 0.0
        %3870 = vmatprep.subr.mxu0 0.0
        %3871 = vmatpush1.msra.mxu0 0.0
        %3872 = vmatprep.subr.mxu0 0.0
        %3873 = vmatpush1.msra.mxu0 0.0
        %3874 = vmatprep.subr.mxu0 0.0
        %3875 = vmatpush1.msra.mxu0 0.0
        %3876 = vmatprep.mubr.f32.mxu0 0.0
        %3877 = vmatmul.mubr.f32.gmra.mrb[0].mxu0 %v3810
        %v3878 = vpop.f32.mrb[0].mxu0
        %v3879 = vadd.f32 1e-05, %v3878
        %v3880 = vpop.f32.mrb[0].mxu0
        %3881 = vdwg.mxu0
        %v3882 = vrsqrt.pop %v3879
        %v3883 = vlaneseq
        %v3884 = vshrl.u32 %v3883, 7
        %v3885 = vsub.s32 0, %v3884
        %v3886 = vrot.slane %v3882, %v3885
        %v3887 = vmul.f32 %v3676, %v3886
        %v3888 = vmul.f32 %v3677, %v3886
        %v3889 = vmul.f32 %v3678, %v3886
        %v3890 = vmul.f32 %v3679, %v3886
        %v3891 = vmul.f32 %v3680, %v3886
        %v3892 = vmul.f32 %v3681, %v3886
        %v3893 = vmul.f32 %v3682, %v3886
        %v3894 = vmul.f32 %v3683, %v3886
        %v3895 = vmul.f32 %v3684, %v3886
        %v3896 = vmul.f32 %v3685, %v3886
        %v3897 = vmul.f32 %v3686, %v3886
        %v3898 = vmul.f32 %v3687, %v3886
        %v3899 = vmul.f32 %v3688, %v3886
        %v3900 = vmul.f32 %v3689, %v3886
        %v3901 = vmul.f32 %v3690, %v3886
        %v3902 = vmul.f32 %v3691, %v3886
        %v3903 = vmul.f32 %v3692, %v3886
        %v3904 = vmul.f32 %v3693, %v3886
        %v3905 = vmul.f32 %v3694, %v3886
        %v3906 = vmul.f32 %v3695, %v3886
        %v3907 = vmul.f32 %v3696, %v3886
        %v3908 = vmul.f32 %v3697, %v3886
        %v3909 = vmul.f32 %v3698, %v3886
        %v3910 = vmul.f32 %v3699, %v3886
        %v3911 = vmul.f32 %v3700, %v3886
        %v3912 = vmul.f32 %v3701, %v3886
        %v3913 = vmul.f32 %v3702, %v3886
        %v3914 = vmul.f32 %v3703, %v3886
        %v3915 = vmul.f32 %v3704, %v3886
        %v3916 = vmul.f32 %v3705, %v3886
        %v3917 = vmul.f32 %v3706, %v3886
        %v3918 = vmul.f32 %v3707, %v3886
        %v3920 = vlaneseq
        %v3921 = vshrl.u32 %v3920, 7
        %v3922 = vsub.s32 0, %v3921
        %v3923 = vrot.slane %v3520, %v3922
        %v3925 = vmul.f32 %v3887, %v3923
        %v3926 = vmul.f32 %v3888, %v3923
        %v3927 = vmul.f32 %v3889, %v3923
        %v3928 = vmul.f32 %v3890, %v3923
        %v3929 = vmul.f32 %v3891, %v3923
        %v3930 = vmul.f32 %v3892, %v3923
        %v3931 = vmul.f32 %v3893, %v3923
        %v3932 = vmul.f32 %v3894, %v3923
        %v3933 = vmul.f32 %v3895, %v3923
        %v3934 = vmul.f32 %v3896, %v3923
        %v3935 = vmul.f32 %v3897, %v3923
        %v3936 = vmul.f32 %v3898, %v3923
        %v3937 = vmul.f32 %v3899, %v3923
        %v3938 = vmul.f32 %v3900, %v3923
        %v3939 = vmul.f32 %v3901, %v3923
        %v3940 = vmul.f32 %v3902, %v3923
        %v3941 = vmul.f32 %v3903, %v3923
        %v3942 = vmul.f32 %v3904, %v3923
        %v3943 = vmul.f32 %v3905, %v3923
        %v3944 = vmul.f32 %v3906, %v3923
        %v3945 = vmul.f32 %v3907, %v3923
        %v3946 = vmul.f32 %v3908, %v3923
        %v3947 = vmul.f32 %v3909, %v3923
        %v3948 = vmul.f32 %v3910, %v3923
        %v3949 = vmul.f32 %v3911, %v3923
        %v3950 = vmul.f32 %v3912, %v3923
        %v3951 = vmul.f32 %v3913, %v3923
        %v3952 = vmul.f32 %v3914, %v3923
        %v3953 = vmul.f32 %v3915, %v3923
        %v3954 = vmul.f32 %v3916, %v3923
        %v3955 = vmul.f32 %v3917, %v3923
        %v3956 = vmul.f32 %v3918, %v3923
        %v3958 = vlaneseq
        %v3959 = vshrl.u32 %v3958, 7
        %v3960 = vsub.s32 0, %v3959
        %v3961 = vrot.slane %v3521, %v3960
        %v3963 = vadd.f32 %v3925, %v3961
        %v3964 = vadd.f32 %v3926, %v3961
        %v3965 = vadd.f32 %v3927, %v3961
        %v3966 = vadd.f32 %v3928, %v3961
        %v3967 = vadd.f32 %v3929, %v3961
        %v3968 = vadd.f32 %v3930, %v3961
        %v3969 = vadd.f32 %v3931, %v3961
        %v3970 = vadd.f32 %v3932, %v3961
        %v3971 = vadd.f32 %v3933, %v3961
        %v3972 = vadd.f32 %v3934, %v3961
        %v3973 = vadd.f32 %v3935, %v3961
        %v3974 = vadd.f32 %v3936, %v3961
        %v3975 = vadd.f32 %v3937, %v3961
        %v3976 = vadd.f32 %v3938, %v3961
        %v3977 = vadd.f32 %v3939, %v3961
        %v3978 = vadd.f32 %v3940, %v3961
        %v3979 = vadd.f32 %v3941, %v3961
        %v3980 = vadd.f32 %v3942, %v3961
        %v3981 = vadd.f32 %v3943, %v3961
        %v3982 = vadd.f32 %v3944, %v3961
        %v3983 = vadd.f32 %v3945, %v3961
        %v3984 = vadd.f32 %v3946, %v3961
        %v3985 = vadd.f32 %v3947, %v3961
        %v3986 = vadd.f32 %v3948, %v3961
        %v3987 = vadd.f32 %v3949, %v3961
        %v3988 = vadd.f32 %v3950, %v3961
        %v3989 = vadd.f32 %v3951, %v3961
        %v3990 = vadd.f32 %v3952, %v3961
        %v3991 = vadd.f32 %v3953, %v3961
        %v3992 = vadd.f32 %v3954, %v3961
        %v3993 = vadd.f32 %v3955, %v3961
        %v3994 = vadd.f32 %v3956, %v3961
        %v3995 = vxor.u32 %v3963, 2147483648
        %v3996 = vxor.u32 %v3964, 2147483648
        %v3997 = vxor.u32 %v3965, 2147483648
        %v3998 = vxor.u32 %v3966, 2147483648
        %v3999 = vxor.u32 %v3967, 2147483648
        %v4000 = vxor.u32 %v3968, 2147483648
        %v4001 = vxor.u32 %v3969, 2147483648
        %v4002 = vxor.u32 %v3970, 2147483648
        %v4003 = vxor.u32 %v3971, 2147483648
        %v4004 = vxor.u32 %v3972, 2147483648
        %v4005 = vxor.u32 %v3973, 2147483648
        %v4006 = vxor.u32 %v3974, 2147483648
        %v4007 = vxor.u32 %v3975, 2147483648
        %v4008 = vxor.u32 %v3976, 2147483648
        %v4009 = vxor.u32 %v3977, 2147483648
        %v4010 = vxor.u32 %v3978, 2147483648
        %v4011 = vxor.u32 %v3979, 2147483648
        %v4012 = vxor.u32 %v3980, 2147483648
        %v4013 = vxor.u32 %v3981, 2147483648
        %v4014 = vxor.u32 %v3982, 2147483648
        %v4015 = vxor.u32 %v3983, 2147483648
        %v4016 = vxor.u32 %v3984, 2147483648
        %v4017 = vxor.u32 %v3985, 2147483648
        %v4018 = vxor.u32 %v3986, 2147483648
        %v4019 = vxor.u32 %v3987, 2147483648
        %v4020 = vxor.u32 %v3988, 2147483648
        %v4021 = vxor.u32 %v3989, 2147483648
        %v4022 = vxor.u32 %v3990, 2147483648
        %v4023 = vxor.u32 %v3991, 2147483648
        %v4024 = vxor.u32 %v3992, 2147483648
        %v4025 = vxor.u32 %v3993, 2147483648
        %v4026 = vxor.u32 %v3994, 2147483648
        %v4027 = vmul.f32 %v3995, 1.442695
        %v4028 = vpow.pop %v4027
        %v4029 = vmul.f32 %v3996, 1.442695
        %v4030 = vpow.pop %v4029
        %v4031 = vmul.f32 %v3997, 1.442695
        %v4032 = vpow.pop %v4031
        %v4033 = vmul.f32 %v3998, 1.442695
        %v4034 = vpow.pop %v4033
        %v4035 = vmul.f32 %v3999, 1.442695
        %v4036 = vpow.pop %v4035
        %v4037 = vmul.f32 %v4000, 1.442695
        %v4038 = vpow.pop %v4037
        %v4039 = vmul.f32 %v4001, 1.442695
        %v4040 = vpow.pop %v4039
        %v4041 = vmul.f32 %v4002, 1.442695
        %v4042 = vpow.pop %v4041
        %v4043 = vmul.f32 %v4003, 1.442695
        %v4044 = vpow.pop %v4043
        %v4045 = vmul.f32 %v4004, 1.442695
        %v4046 = vpow.pop %v4045
        %v4047 = vmul.f32 %v4005, 1.442695
        %v4048 = vpow.pop %v4047
        %v4049 = vmul.f32 %v4006, 1.442695
        %v4050 = vpow.pop %v4049
        %v4051 = vmul.f32 %v4007, 1.442695
        %v4052 = vpow.pop %v4051
        %v4053 = vmul.f32 %v4008, 1.442695
        %v4054 = vpow.pop %v4053
        %v4055 = vmul.f32 %v4009, 1.442695
        %v4056 = vpow.pop %v4055
        %v4057 = vmul.f32 %v4010, 1.442695
        %v4058 = vpow.pop %v4057
        %v4059 = vmul.f32 %v4011, 1.442695
        %v4060 = vpow.pop %v4059
        %v4061 = vmul.f32 %v4012, 1.442695
        %v4062 = vpow.pop %v4061
        %v4063 = vmul.f32 %v4013, 1.442695
        %v4064 = vpow.pop %v4063
        %v4065 = vmul.f32 %v4014, 1.442695
        %v4066 = vpow.pop %v4065
        %v4067 = vmul.f32 %v4015, 1.442695
        %v4068 = vpow.pop %v4067
        %v4069 = vmul.f32 %v4016, 1.442695
        %v4070 = vpow.pop %v4069
        %v4071 = vmul.f32 %v4017, 1.442695
        %v4072 = vpow.pop %v4071
        %v4073 = vmul.f32 %v4018, 1.442695
        %v4074 = vpow.pop %v4073
        %v4075 = vmul.f32 %v4019, 1.442695
        %v4076 = vpow.pop %v4075
        %v4077 = vmul.f32 %v4020, 1.442695
        %v4078 = vpow.pop %v4077
        %v4079 = vmul.f32 %v4021, 1.442695
        %v4080 = vpow.pop %v4079
        %v4081 = vmul.f32 %v4022, 1.442695
        %v4082 = vpow.pop %v4081
        %v4083 = vmul.f32 %v4023, 1.442695
        %v4084 = vpow.pop %v4083
        %v4085 = vmul.f32 %v4024, 1.442695
        %v4086 = vpow.pop %v4085
        %v4087 = vmul.f32 %v4025, 1.442695
        %v4088 = vpow.pop %v4087
        %v4089 = vmul.f32 %v4026, 1.442695
        %v4090 = vpow.pop %v4089
        %v4091 = vadd.f32 %v4028, 1.0
        %v4092 = vadd.f32 %v4030, 1.0
        %v4093 = vadd.f32 %v4032, 1.0
        %v4094 = vadd.f32 %v4034, 1.0
        %v4095 = vadd.f32 %v4036, 1.0
        %v4096 = vadd.f32 %v4038, 1.0
        %v4097 = vadd.f32 %v4040, 1.0
        %v4098 = vadd.f32 %v4042, 1.0
        %v4099 = vadd.f32 %v4044, 1.0
        %v4100 = vadd.f32 %v4046, 1.0
        %v4101 = vadd.f32 %v4048, 1.0
        %v4102 = vadd.f32 %v4050, 1.0
        %v4103 = vadd.f32 %v4052, 1.0
        %v4104 = vadd.f32 %v4054, 1.0
        %v4105 = vadd.f32 %v4056, 1.0
        %v4106 = vadd.f32 %v4058, 1.0
        %v4107 = vadd.f32 %v4060, 1.0
        %v4108 = vadd.f32 %v4062, 1.0
        %v4109 = vadd.f32 %v4064, 1.0
        %v4110 = vadd.f32 %v4066, 1.0
        %v4111 = vadd.f32 %v4068, 1.0
        %v4112 = vadd.f32 %v4070, 1.0
        %v4113 = vadd.f32 %v4072, 1.0
        %v4114 = vadd.f32 %v4074, 1.0
        %v4115 = vadd.f32 %v4076, 1.0
        %v4116 = vadd.f32 %v4078, 1.0
        %v4117 = vadd.f32 %v4080, 1.0
        %v4118 = vadd.f32 %v4082, 1.0
        %v4119 = vadd.f32 %v4084, 1.0
        %v4120 = vadd.f32 %v4086, 1.0
        %v4121 = vadd.f32 %v4088, 1.0
        %v4122 = vadd.f32 %v4090, 1.0
        %v4123 = vrcp.pop %v4091
        %v4124 = vmul.f32 1.0, %v4123
        %v4125 = vrcp.pop %v4092
        %v4126 = vmul.f32 1.0, %v4125
        %v4127 = vrcp.pop %v4093
        %v4128 = vmul.f32 1.0, %v4127
        %v4129 = vrcp.pop %v4094
        %v4130 = vmul.f32 1.0, %v4129
        %v4131 = vrcp.pop %v4095
        %v4132 = vmul.f32 1.0, %v4131
        %v4133 = vrcp.pop %v4096
        %v4134 = vmul.f32 1.0, %v4133
        %v4135 = vrcp.pop %v4097
        %v4136 = vmul.f32 1.0, %v4135
        %v4137 = vrcp.pop %v4098
        %v4138 = vmul.f32 1.0, %v4137
        %v4139 = vrcp.pop %v4099
        %v4140 = vmul.f32 1.0, %v4139
        %v4141 = vrcp.pop %v4100
        %v4142 = vmul.f32 1.0, %v4141
        %v4143 = vrcp.pop %v4101
        %v4144 = vmul.f32 1.0, %v4143
        %v4145 = vrcp.pop %v4102
        %v4146 = vmul.f32 1.0, %v4145
        %v4147 = vrcp.pop %v4103
        %v4148 = vmul.f32 1.0, %v4147
        %v4149 = vrcp.pop %v4104
        %v4150 = vmul.f32 1.0, %v4149
        %v4151 = vrcp.pop %v4105
        %v4152 = vmul.f32 1.0, %v4151
        %v4153 = vrcp.pop %v4106
        %v4154 = vmul.f32 1.0, %v4153
        %v4155 = vrcp.pop %v4107
        %v4156 = vmul.f32 1.0, %v4155
        %v4157 = vrcp.pop %v4108
        %v4158 = vmul.f32 1.0, %v4157
        %v4159 = vrcp.pop %v4109
        %v4160 = vmul.f32 1.0, %v4159
        %v4161 = vrcp.pop %v4110
        %v4162 = vmul.f32 1.0, %v4161
        %v4163 = vrcp.pop %v4111
        %v4164 = vmul.f32 1.0, %v4163
        %v4165 = vrcp.pop %v4112
        %v4166 = vmul.f32 1.0, %v4165
        %v4167 = vrcp.pop %v4113
        %v4168 = vmul.f32 1.0, %v4167
        %v4169 = vrcp.pop %v4114
        %v4170 = vmul.f32 1.0, %v4169
        %v4171 = vrcp.pop %v4115
        %v4172 = vmul.f32 1.0, %v4171
        %v4173 = vrcp.pop %v4116
        %v4174 = vmul.f32 1.0, %v4173
        %v4175 = vrcp.pop %v4117
        %v4176 = vmul.f32 1.0, %v4175
        %v4177 = vrcp.pop %v4118
        %v4178 = vmul.f32 1.0, %v4177
        %v4179 = vrcp.pop %v4119
        %v4180 = vmul.f32 1.0, %v4179
        %v4181 = vrcp.pop %v4120
        %v4182 = vmul.f32 1.0, %v4181
        %v4183 = vrcp.pop %v4121
        %v4184 = vmul.f32 1.0, %v4183
        %v4185 = vrcp.pop %v4122
        %v4186 = vmul.f32 1.0, %v4185
        %v4187 = vmul.f32 %v3963, %v4124
        %v4188 = vmul.f32 %v3964, %v4126
        %v4189 = vmul.f32 %v3965, %v4128
        %v4190 = vmul.f32 %v3966, %v4130
        %v4191 = vmul.f32 %v3967, %v4132
        %v4192 = vmul.f32 %v3968, %v4134
        %v4193 = vmul.f32 %v3969, %v4136
        %v4194 = vmul.f32 %v3970, %v4138
        %v4195 = vmul.f32 %v3971, %v4140
        %v4196 = vmul.f32 %v3972, %v4142
        %v4197 = vmul.f32 %v3973, %v4144
        %v4198 = vmul.f32 %v3974, %v4146
        %v4199 = vmul.f32 %v3975, %v4148
        %v4200 = vmul.f32 %v3976, %v4150
        %v4201 = vmul.f32 %v3977, %v4152
        %v4202 = vmul.f32 %v3978, %v4154
        %v4203 = vmul.f32 %v3979, %v4156
        %v4204 = vmul.f32 %v3980, %v4158
        %v4205 = vmul.f32 %v3981, %v4160
        %v4206 = vmul.f32 %v3982, %v4162
        %v4207 = vmul.f32 %v3983, %v4164
        %v4208 = vmul.f32 %v3984, %v4166
        %v4209 = vmul.f32 %v3985, %v4168
        %v4210 = vmul.f32 %v3986, %v4170
        %v4211 = vmul.f32 %v3987, %v4172
        %v4212 = vmul.f32 %v3988, %v4174
        %v4213 = vmul.f32 %v3989, %v4176
        %v4214 = vmul.f32 %v3990, %v4178
        %v4215 = vmul.f32 %v3991, %v4180
        %v4216 = vmul.f32 %v3992, %v4182
        %v4217 = vmul.f32 %v3993, %v4184
        %v4218 = vmul.f32 %v3994, %v4186
        %v4219 = vpack.c.bf16 %v4188, %v4187
        %v4220 = vpack.c.bf16 %v4190, %v4189
        %v4221 = vpack.c.bf16 %v4192, %v4191
        %v4222 = vpack.c.bf16 %v4194, %v4193
        %v4223 = vpack.c.bf16 %v4196, %v4195
        %v4224 = vpack.c.bf16 %v4198, %v4197
        %v4225 = vpack.c.bf16 %v4200, %v4199
        %v4226 = vpack.c.bf16 %v4202, %v4201
        %v4227 = vpack.c.bf16 %v4204, %v4203
        %v4228 = vpack.c.bf16 %v4206, %v4205
        %v4229 = vpack.c.bf16 %v4208, %v4207
        %v4230 = vpack.c.bf16 %v4210, %v4209
        %v4231 = vpack.c.bf16 %v4212, %v4211
        %v4232 = vpack.c.bf16 %v4214, %v4213
        %v4233 = vpack.c.bf16 %v4216, %v4215
        %v4234 = vpack.c.bf16 %v4218, %v4217
        %4235 = vst.msk [vmem:[#allocation3 + $0x10] sm:$0xff] %vm459, %v4219
        %4236 = vst.msk [vmem:[#allocation3 + $0x18] sm:$0xff] %vm459, %v4220
        %4237 = vst.msk [vmem:[#allocation3 + $0x20] sm:$0xff] %vm459, %v4221
        %4238 = vst.msk [vmem:[#allocation3 + $0x28] sm:$0xff] %vm459, %v4222
        %4239 = vst.msk [vmem:[#allocation3 + $0x30] sm:$0xff] %vm459, %v4223
        %4240 = vst.msk [vmem:[#allocation3 + $0x38] sm:$0xff] %vm459, %v4224
        %4241 = vst.msk [vmem:[#allocation3 + $0x40] sm:$0xff] %vm459, %v4225
        %4242 = vst.msk [vmem:[#allocation3 + $0x48] sm:$0xff] %vm459, %v4226
        %4243 = vst.msk [vmem:[#allocation3 + $0x50] sm:$0xff] %vm459, %v4227
        %4244 = vst.msk [vmem:[#allocation3 + $0x58] sm:$0xff] %vm459, %v4228
        %4245 = vst.msk [vmem:[#allocation3 + $0x60] sm:$0xff] %vm459, %v4229
        %4246 = vst.msk [vmem:[#allocation3 + $0x68] sm:$0xff] %vm459, %v4230
        %4247 = vst.msk [vmem:[#allocation3 + $0x70] sm:$0xff] %vm459, %v4231
        %4248 = vst.msk [vmem:[#allocation3 + $0x78] sm:$0xff] %vm459, %v4232
        %4249 = vst.msk [vmem:[#allocation3 + $0x80] sm:$0xff] %vm459, %v4233
        %4250 = vst.msk [vmem:[#allocation3 + $0x88] sm:$0xff] %vm459, %v4234
        %v4251 = vld [vmem:[#allocation3] sm:$0x80]
        %v4252 = vld [vmem:[#allocation3 + $0x8] sm:$0xff]
        %v4253 = vld [vmem:[#allocation3 + $0x10] sm:$0xff]
        %v4254 = vld [vmem:[#allocation3 + $0x18] sm:$0xff]
        %v4255 = vld [vmem:[#allocation3 + $0x20] sm:$0xff]
        %v4256 = vld [vmem:[#allocation3 + $0x28] sm:$0xff]
        %v4257 = vld [vmem:[#allocation3 + $0x30] sm:$0xff]
        %v4258 = vld [vmem:[#allocation3 + $0x38] sm:$0xff]
        %v4259 = vld [vmem:[#allocation3 + $0x40] sm:$0xff]
        %v4260 = vld [vmem:[#allocation3 + $0x48] sm:$0xff]
        %v4261 = vld [vmem:[#allocation3 + $0x50] sm:$0xff]
        %v4262 = vld [vmem:[#allocation3 + $0x58] sm:$0xff]
        %v4263 = vld [vmem:[#allocation3 + $0x60] sm:$0xff]
        %v4264 = vld [vmem:[#allocation3 + $0x68] sm:$0xff]
        %v4265 = vld [vmem:[#allocation3 + $0x70] sm:$0xff]
        %v4266 = vld [vmem:[#allocation3 + $0x78] sm:$0xff]
        %v4267 = vld [vmem:[#allocation3 + $0x80] sm:$0xff]
        %v4268 = vld [vmem:[#allocation3 + $0x88] sm:$0xff]
        %v4270 = vshrl.u32 %v4251, 16
        %v4272 = vrot.slane %v4270, 7
        %v4274 = vshrl.u32 %v4252, 16
        %v4276 = vrot.slane %v4274, 7
        %v4277 = vshll.u32 %v4252, 16
        %v4279 = vor.u32 %v4276, %v4277
        %v4280 = vsel %vm1695, %v4272, %v4279
        %v4282 = vshrl.u32 %v4253, 16
        %v4284 = vrot.slane %v4282, 7
        %v4285 = vshll.u32 %v4253, 16
        %v4287 = vor.u32 %v4284, %v4285
        %v4288 = vsel %vm1695, %v4276, %v4287
        %v4290 = vshrl.u32 %v4254, 16
        %v4292 = vrot.slane %v4290, 7
        %v4293 = vshll.u32 %v4254, 16
        %v4295 = vor.u32 %v4292, %v4293
        %v4296 = vsel %vm1695, %v4284, %v4295
        %v4298 = vshrl.u32 %v4255, 16
        %v4300 = vrot.slane %v4298, 7
        %v4301 = vshll.u32 %v4255, 16
        %v4303 = vor.u32 %v4300, %v4301
        %v4304 = vsel %vm1695, %v4292, %v4303
        %v4306 = vshrl.u32 %v4256, 16
        %v4308 = vrot.slane %v4306, 7
        %v4309 = vshll.u32 %v4256, 16
        %v4311 = vor.u32 %v4308, %v4309
        %v4312 = vsel %vm1695, %v4300, %v4311
        %v4314 = vshrl.u32 %v4257, 16
        %v4316 = vrot.slane %v4314, 7
        %v4317 = vshll.u32 %v4257, 16
        %v4319 = vor.u32 %v4316, %v4317
        %v4320 = vsel %vm1695, %v4308, %v4319
        %v4322 = vshrl.u32 %v4258, 16
        %v4324 = vrot.slane %v4322, 7
        %v4325 = vshll.u32 %v4258, 16
        %v4327 = vor.u32 %v4324, %v4325
        %v4328 = vsel %vm1695, %v4316, %v4327
        %v4330 = vshrl.u32 %v4259, 16
        %v4332 = vrot.slane %v4330, 7
        %v4333 = vshll.u32 %v4259, 16
        %v4335 = vor.u32 %v4332, %v4333
        %v4336 = vsel %vm1695, %v4324, %v4335
        %v4338 = vshrl.u32 %v4260, 16
        %v4340 = vrot.slane %v4338, 7
        %v4341 = vshll.u32 %v4260, 16
        %v4343 = vor.u32 %v4340, %v4341
        %v4344 = vsel %vm1695, %v4332, %v4343
        %v4346 = vshrl.u32 %v4261, 16
        %v4348 = vrot.slane %v4346, 7
        %v4349 = vshll.u32 %v4261, 16
        %v4351 = vor.u32 %v4348, %v4349
        %v4352 = vsel %vm1695, %v4340, %v4351
        %v4354 = vshrl.u32 %v4262, 16
        %v4356 = vrot.slane %v4354, 7
        %v4357 = vshll.u32 %v4262, 16
        %v4359 = vor.u32 %v4356, %v4357
        %v4360 = vsel %vm1695, %v4348, %v4359
        %v4362 = vshrl.u32 %v4263, 16
        %v4364 = vrot.slane %v4362, 7
        %v4365 = vshll.u32 %v4263, 16
        %v4367 = vor.u32 %v4364, %v4365
        %v4368 = vsel %vm1695, %v4356, %v4367
        %v4370 = vshrl.u32 %v4264, 16
        %v4372 = vrot.slane %v4370, 7
        %v4373 = vshll.u32 %v4264, 16
        %v4375 = vor.u32 %v4372, %v4373
        %v4376 = vsel %vm1695, %v4364, %v4375
        %v4378 = vshrl.u32 %v4265, 16
        %v4380 = vrot.slane %v4378, 7
        %v4381 = vshll.u32 %v4265, 16
        %v4383 = vor.u32 %v4380, %v4381
        %v4384 = vsel %vm1695, %v4372, %v4383
        %v4386 = vshrl.u32 %v4266, 16
        %v4388 = vrot.slane %v4386, 7
        %v4389 = vshll.u32 %v4266, 16
        %v4391 = vor.u32 %v4388, %v4389
        %v4392 = vsel %vm1695, %v4380, %v4391
        %v4394 = vshrl.u32 %v4267, 16
        %v4396 = vrot.slane %v4394, 7
        %v4397 = vshll.u32 %v4267, 16
        %v4399 = vor.u32 %v4396, %v4397
        %v4400 = vsel %vm1695, %v4388, %v4399
        %v4402 = vshrl.u32 %v4268, 16
        %v4404 = vrot.slane %v4402, 7
        %v4405 = vshll.u32 %v4268, 16
        %v4407 = vor.u32 %v4404, %v4405
        %v4408 = vsel %vm1695, %v4396, %v4407
        %4426 = vst.msk [vmem:[#allocation5] sm:$0xff] %vm459, %v4280
        %4427 = vst.msk [vmem:[#allocation5 + $0x10] sm:$0xff] %vm459, %v4288
        %4428 = vst.msk [vmem:[#allocation5 + $0x20] sm:$0xff] %vm459, %v4296
        %4429 = vst.msk [vmem:[#allocation5 + $0x30] sm:$0xff] %vm459, %v4304
        %4430 = vst.msk [vmem:[#allocation5 + $0x40] sm:$0xff] %vm459, %v4312
        %4431 = vst.msk [vmem:[#allocation5 + $0x50] sm:$0xff] %vm459, %v4320
        %4432 = vst.msk [vmem:[#allocation5 + $0x60] sm:$0xff] %vm459, %v4328
        %4433 = vst.msk [vmem:[#allocation5 + $0x70] sm:$0xff] %vm459, %v4336
        %4434 = vst.msk [vmem:[#allocation5 + $0x80] sm:$0xff] %vm459, %v4344
        %4435 = vst.msk [vmem:[#allocation5 + $0x90] sm:$0xff] %vm459, %v4352
        %4436 = vst.msk [vmem:[#allocation5 + $0xa0] sm:$0xff] %vm459, %v4360
        %4437 = vst.msk [vmem:[#allocation5 + $0xb0] sm:$0xff] %vm459, %v4368
        %4438 = vst.msk [vmem:[#allocation5 + $0xc0] sm:$0xff] %vm459, %v4376
        %4439 = vst.msk [vmem:[#allocation5 + $0xd0] sm:$0xff] %vm459, %v4384
        %4440 = vst.msk [vmem:[#allocation5 + $0xe0] sm:$0xff] %vm459, %v4392
        %4441 = vst.msk [vmem:[#allocation5 + $0xf0] sm:$0xff] %vm459, %v4400
        %4442 = vst.msk [vmem:[#allocation5 + $0x100] sm:$0xff] %vm459, %v4408
        %v4443 = vld [vmem:[#allocation3 + $0x8] sm:$0x80]
        %v4444 = vld [vmem:[#allocation3 + $0x10] sm:$0xff]
        %v4445 = vld [vmem:[#allocation3 + $0x18] sm:$0xff]
        %v4446 = vld [vmem:[#allocation3 + $0x20] sm:$0xff]
        %v4447 = vld [vmem:[#allocation3 + $0x28] sm:$0xff]
        %v4448 = vld [vmem:[#allocation3 + $0x30] sm:$0xff]
        %v4449 = vld [vmem:[#allocation3 + $0x38] sm:$0xff]
        %v4450 = vld [vmem:[#allocation3 + $0x40] sm:$0xff]
        %v4451 = vld [vmem:[#allocation3 + $0x48] sm:$0xff]
        %v4452 = vld [vmem:[#allocation3 + $0x50] sm:$0xff]
        %v4453 = vld [vmem:[#allocation3 + $0x58] sm:$0xff]
        %v4454 = vld [vmem:[#allocation3 + $0x60] sm:$0xff]
        %v4455 = vld [vmem:[#allocation3 + $0x68] sm:$0xff]
        %v4456 = vld [vmem:[#allocation3 + $0x70] sm:$0xff]
        %v4457 = vld [vmem:[#allocation3 + $0x78] sm:$0xff]
        %v4458 = vld [vmem:[#allocation3 + $0x80] sm:$0xff]
        %v4459 = vld [vmem:[#allocation3 + $0x88] sm:$0xff]
        %v4460 = vld [vmem:[#allocation3 + $0x90] sm:$0xff]
        %v4462 = vshrl.u32 %v4443, 16
        %v4464 = vrot.slane %v4462, 7
        %v4466 = vshrl.u32 %v4444, 16
        %v4468 = vrot.slane %v4466, 7
        %v4469 = vshll.u32 %v4444, 16
        %v4471 = vor.u32 %v4468, %v4469
        %v4472 = vsel %vm1695, %v4464, %v4471
        %v4474 = vshrl.u32 %v4445, 16
        %v4476 = vrot.slane %v4474, 7
        %v4477 = vshll.u32 %v4445, 16
        %v4479 = vor.u32 %v4476, %v4477
        %v4480 = vsel %vm1695, %v4468, %v4479
        %v4482 = vshrl.u32 %v4446, 16
        %v4484 = vrot.slane %v4482, 7
        %v4485 = vshll.u32 %v4446, 16
        %v4487 = vor.u32 %v4484, %v4485
        %v4488 = vsel %vm1695, %v4476, %v4487
        %v4490 = vshrl.u32 %v4447, 16
        %v4492 = vrot.slane %v4490, 7
        %v4493 = vshll.u32 %v4447, 16
        %v4495 = vor.u32 %v4492, %v4493
        %v4496 = vsel %vm1695, %v4484, %v4495
        %v4498 = vshrl.u32 %v4448, 16
        %v4500 = vrot.slane %v4498, 7
        %v4501 = vshll.u32 %v4448, 16
        %v4503 = vor.u32 %v4500, %v4501
        %v4504 = vsel %vm1695, %v4492, %v4503
        %v4506 = vshrl.u32 %v4449, 16
        %v4508 = vrot.slane %v4506, 7
        %v4509 = vshll.u32 %v4449, 16
        %v4511 = vor.u32 %v4508, %v4509
        %v4512 = vsel %vm1695, %v4500, %v4511
        %v4514 = vshrl.u32 %v4450, 16
        %v4516 = vrot.slane %v4514, 7
        %v4517 = vshll.u32 %v4450, 16
        %v4519 = vor.u32 %v4516, %v4517
        %v4520 = vsel %vm1695, %v4508, %v4519
        %v4522 = vshrl.u32 %v4451, 16
        %v4524 = vrot.slane %v4522, 7
        %v4525 = vshll.u32 %v4451, 16
        %v4527 = vor.u32 %v4524, %v4525
        %v4528 = vsel %vm1695, %v4516, %v4527
        %v4530 = vshrl.u32 %v4452, 16
        %v4532 = vrot.slane %v4530, 7
        %v4533 = vshll.u32 %v4452, 16
        %v4535 = vor.u32 %v4532, %v4533
        %v4536 = vsel %vm1695, %v4524, %v4535
        %v4538 = vshrl.u32 %v4453, 16
        %v4540 = vrot.slane %v4538, 7
        %v4541 = vshll.u32 %v4453, 16
        %v4543 = vor.u32 %v4540, %v4541
        %v4544 = vsel %vm1695, %v4532, %v4543
        %v4546 = vshrl.u32 %v4454, 16
        %v4548 = vrot.slane %v4546, 7
        %v4549 = vshll.u32 %v4454, 16
        %v4551 = vor.u32 %v4548, %v4549
        %v4552 = vsel %vm1695, %v4540, %v4551
        %v4554 = vshrl.u32 %v4455, 16
        %v4556 = vrot.slane %v4554, 7
        %v4557 = vshll.u32 %v4455, 16
        %v4559 = vor.u32 %v4556, %v4557
        %v4560 = vsel %vm1695, %v4548, %v4559
        %v4562 = vshrl.u32 %v4456, 16
        %v4564 = vrot.slane %v4562, 7
        %v4565 = vshll.u32 %v4456, 16
        %v4567 = vor.u32 %v4564, %v4565
        %v4568 = vsel %vm1695, %v4556, %v4567
        %v4570 = vshrl.u32 %v4457, 16
        %v4572 = vrot.slane %v4570, 7
        %v4573 = vshll.u32 %v4457, 16
        %v4575 = vor.u32 %v4572, %v4573
        %v4576 = vsel %vm1695, %v4564, %v4575
        %v4578 = vshrl.u32 %v4458, 16
        %v4580 = vrot.slane %v4578, 7
        %v4581 = vshll.u32 %v4458, 16
        %v4583 = vor.u32 %v4580, %v4581
        %v4584 = vsel %vm1695, %v4572, %v4583
        %v4586 = vshrl.u32 %v4459, 16
        %v4588 = vrot.slane %v4586, 7
        %v4589 = vshll.u32 %v4459, 16
        %v4591 = vor.u32 %v4588, %v4589
        %v4592 = vsel %vm1695, %v4580, %v4591
        %v4594 = vshrl.u32 %v4460, 16
        %v4596 = vrot.slane %v4594, 7
        %v4597 = vshll.u32 %v4460, 16
        %v4599 = vor.u32 %v4596, %v4597
        %v4600 = vsel %vm1695, %v4588, %v4599
        %4601 = vrot.lane.b32.xlu0 %v4472, 64
        %v4602 = vpop.permute.xlu0 %4601
        %4603 = vrot.lane.b32.xlu0 %v4480, 64
        %v4604 = vpop.permute.xlu0 %4603
        %4605 = vrot.lane.b32.xlu0 %v4488, 64
        %v4606 = vpop.permute.xlu0 %4605
        %4607 = vrot.lane.b32.xlu0 %v4496, 64
        %v4608 = vpop.permute.xlu0 %4607
        %4609 = vrot.lane.b32.xlu0 %v4504, 64
        %v4610 = vpop.permute.xlu0 %4609
        %4611 = vrot.lane.b32.xlu0 %v4512, 64
        %v4612 = vpop.permute.xlu0 %4611
        %4613 = vrot.lane.b32.xlu0 %v4520, 64
        %v4614 = vpop.permute.xlu0 %4613
        %4615 = vrot.lane.b32.xlu0 %v4528, 64
        %v4616 = vpop.permute.xlu0 %4615
        %4617 = vrot.lane.b32.xlu0 %v4536, 64
        %v4618 = vpop.permute.xlu0 %4617
        %4619 = vrot.lane.b32.xlu0 %v4544, 64
        %v4620 = vpop.permute.xlu0 %4619
        %4621 = vrot.lane.b32.xlu0 %v4552, 64
        %v4622 = vpop.permute.xlu0 %4621
        %4623 = vrot.lane.b32.xlu0 %v4560, 64
        %v4624 = vpop.permute.xlu0 %4623
        %4625 = vrot.lane.b32.xlu0 %v4568, 64
        %v4626 = vpop.permute.xlu0 %4625
        %4627 = vrot.lane.b32.xlu0 %v4576, 64
        %v4628 = vpop.permute.xlu0 %4627
        %4629 = vrot.lane.b32.xlu0 %v4584, 64
        %v4630 = vpop.permute.xlu0 %4629
        %4631 = vrot.lane.b32.xlu0 %v4592, 64
        %v4632 = vpop.permute.xlu0 %4631
        %4633 = vrot.lane.b32.xlu0 %v4600, 64
        %v4634 = vpop.permute.xlu0 %4633
        %vm4652 = vcmask 1048064
        %4653 = vst.msk [vmem:[#allocation5] sm:$0xff] %vm4652, %v4602
        %4654 = vst.msk [vmem:[#allocation5 + $0x10] sm:$0xff] %vm4652, %v4604
        %4655 = vst.msk [vmem:[#allocation5 + $0x20] sm:$0xff] %vm4652, %v4606
        %4656 = vst.msk [vmem:[#allocation5 + $0x30] sm:$0xff] %vm4652, %v4608
        %4657 = vst.msk [vmem:[#allocation5 + $0x40] sm:$0xff] %vm4652, %v4610
        %4658 = vst.msk [vmem:[#allocation5 + $0x50] sm:$0xff] %vm4652, %v4612
        %4659 = vst.msk [vmem:[#allocation5 + $0x60] sm:$0xff] %vm4652, %v4614
        %4660 = vst.msk [vmem:[#allocation5 + $0x70] sm:$0xff] %vm4652, %v4616
        %4661 = vst.msk [vmem:[#allocation5 + $0x80] sm:$0xff] %vm4652, %v4618
        %4662 = vst.msk [vmem:[#allocation5 + $0x90] sm:$0xff] %vm4652, %v4620
        %4663 = vst.msk [vmem:[#allocation5 + $0xa0] sm:$0xff] %vm4652, %v4622
        %4664 = vst.msk [vmem:[#allocation5 + $0xb0] sm:$0xff] %vm4652, %v4624
        %4665 = vst.msk [vmem:[#allocation5 + $0xc0] sm:$0xff] %vm4652, %v4626
        %4666 = vst.msk [vmem:[#allocation5 + $0xd0] sm:$0xff] %vm4652, %v4628
        %4667 = vst.msk [vmem:[#allocation5 + $0xe0] sm:$0xff] %vm4652, %v4630
        %4668 = vst.msk [vmem:[#allocation5 + $0xf0] sm:$0xff] %vm4652, %v4632
        %4669 = vst.msk [vmem:[#allocation5 + $0x100] sm:$0xff] %vm4652, %v4634
        %v4670 = vld [vmem:[#allocation3 + $0x10] sm:$0x80]
        %v4671 = vld [vmem:[#allocation3 + $0x18] sm:$0xff]
        %v4672 = vld [vmem:[#allocation3 + $0x20] sm:$0xff]
        %v4673 = vld [vmem:[#allocation3 + $0x28] sm:$0xff]
        %v4674 = vld [vmem:[#allocation3 + $0x30] sm:$0xff]
        %v4675 = vld [vmem:[#allocation3 + $0x38] sm:$0xff]
        %v4676 = vld [vmem:[#allocation3 + $0x40] sm:$0xff]
        %v4677 = vld [vmem:[#allocation3 + $0x48] sm:$0xff]
        %v4678 = vld [vmem:[#allocation3 + $0x50] sm:$0xff]
        %v4679 = vld [vmem:[#allocation3 + $0x58] sm:$0xff]
        %v4680 = vld [vmem:[#allocation3 + $0x60] sm:$0xff]
        %v4681 = vld [vmem:[#allocation3 + $0x68] sm:$0xff]
        %v4682 = vld [vmem:[#allocation3 + $0x70] sm:$0xff]
        %v4683 = vld [vmem:[#allocation3 + $0x78] sm:$0xff]
        %v4684 = vld [vmem:[#allocation3 + $0x80] sm:$0xff]
        %v4685 = vld [vmem:[#allocation3 + $0x88] sm:$0xff]
        %v4686 = vld [vmem:[#allocation3 + $0x90] sm:$0xff]
        %v4687 = vld [vmem:[#allocation3 + $0x98] sm:$0xff]
        %v4689 = vshrl.u32 %v4670, 16
        %v4691 = vrot.slane %v4689, 7
        %v4693 = vshrl.u32 %v4671, 16
        %v4695 = vrot.slane %v4693, 7
        %v4696 = vshll.u32 %v4671, 16
        %v4698 = vor.u32 %v4695, %v4696
        %v4699 = vsel %vm1695, %v4691, %v4698
        %v4701 = vshrl.u32 %v4672, 16
        %v4703 = vrot.slane %v4701, 7
        %v4704 = vshll.u32 %v4672, 16
        %v4706 = vor.u32 %v4703, %v4704
        %v4707 = vsel %vm1695, %v4695, %v4706
        %v4709 = vshrl.u32 %v4673, 16
        %v4711 = vrot.slane %v4709, 7
        %v4712 = vshll.u32 %v4673, 16
        %v4714 = vor.u32 %v4711, %v4712
        %v4715 = vsel %vm1695, %v4703, %v4714
        %v4717 = vshrl.u32 %v4674, 16
        %v4719 = vrot.slane %v4717, 7
        %v4720 = vshll.u32 %v4674, 16
        %v4722 = vor.u32 %v4719, %v4720
        %v4723 = vsel %vm1695, %v4711, %v4722
        %v4725 = vshrl.u32 %v4675, 16
        %v4727 = vrot.slane %v4725, 7
        %v4728 = vshll.u32 %v4675, 16
        %v4730 = vor.u32 %v4727, %v4728
        %v4731 = vsel %vm1695, %v4719, %v4730
        %v4733 = vshrl.u32 %v4676, 16
        %v4735 = vrot.slane %v4733, 7
        %v4736 = vshll.u32 %v4676, 16
        %v4738 = vor.u32 %v4735, %v4736
        %v4739 = vsel %vm1695, %v4727, %v4738
        %v4741 = vshrl.u32 %v4677, 16
        %v4743 = vrot.slane %v4741, 7
        %v4744 = vshll.u32 %v4677, 16
        %v4746 = vor.u32 %v4743, %v4744
        %v4747 = vsel %vm1695, %v4735, %v4746
        %v4749 = vshrl.u32 %v4678, 16
        %v4751 = vrot.slane %v4749, 7
        %v4752 = vshll.u32 %v4678, 16
        %v4754 = vor.u32 %v4751, %v4752
        %v4755 = vsel %vm1695, %v4743, %v4754
        %v4757 = vshrl.u32 %v4679, 16
        %v4759 = vrot.slane %v4757, 7
        %v4760 = vshll.u32 %v4679, 16
        %v4762 = vor.u32 %v4759, %v4760
        %v4763 = vsel %vm1695, %v4751, %v4762
        %v4765 = vshrl.u32 %v4680, 16
        %v4767 = vrot.slane %v4765, 7
        %v4768 = vshll.u32 %v4680, 16
        %v4770 = vor.u32 %v4767, %v4768
        %v4771 = vsel %vm1695, %v4759, %v4770
        %v4773 = vshrl.u32 %v4681, 16
        %v4775 = vrot.slane %v4773, 7
        %v4776 = vshll.u32 %v4681, 16
        %v4778 = vor.u32 %v4775, %v4776
        %v4779 = vsel %vm1695, %v4767, %v4778
        %v4781 = vshrl.u32 %v4682, 16
        %v4783 = vrot.slane %v4781, 7
        %v4784 = vshll.u32 %v4682, 16
        %v4786 = vor.u32 %v4783, %v4784
        %v4787 = vsel %vm1695, %v4775, %v4786
        %v4789 = vshrl.u32 %v4683, 16
        %v4791 = vrot.slane %v4789, 7
        %v4792 = vshll.u32 %v4683, 16
        %v4794 = vor.u32 %v4791, %v4792
        %v4795 = vsel %vm1695, %v4783, %v4794
        %v4797 = vshrl.u32 %v4684, 16
        %v4799 = vrot.slane %v4797, 7
        %v4800 = vshll.u32 %v4684, 16
        %v4802 = vor.u32 %v4799, %v4800
        %v4803 = vsel %vm1695, %v4791, %v4802
        %v4805 = vshrl.u32 %v4685, 16
        %v4807 = vrot.slane %v4805, 7
        %v4808 = vshll.u32 %v4685, 16
        %v4810 = vor.u32 %v4807, %v4808
        %v4811 = vsel %vm1695, %v4799, %v4810
        %v4813 = vshrl.u32 %v4686, 16
        %v4815 = vrot.slane %v4813, 7
        %v4816 = vshll.u32 %v4686, 16
        %v4818 = vor.u32 %v4815, %v4816
        %v4819 = vsel %vm1695, %v4807, %v4818
        %v4821 = vshrl.u32 %v4687, 16
        %v4823 = vrot.slane %v4821, 7
        %v4824 = vshll.u32 %v4687, 16
        %v4826 = vor.u32 %v4823, %v4824
        %v4827 = vsel %vm1695, %v4815, %v4826
        %4845 = vst.msk [vmem:[#allocation5 + $0x8] sm:$0xff] %vm459, %v4699
        %4846 = vst.msk [vmem:[#allocation5 + $0x18] sm:$0xff] %vm459, %v4707
        %4847 = vst.msk [vmem:[#allocation5 + $0x28] sm:$0xff] %vm459, %v4715
        %4848 = vst.msk [vmem:[#allocation5 + $0x38] sm:$0xff] %vm459, %v4723
        %4849 = vst.msk [vmem:[#allocation5 + $0x48] sm:$0xff] %vm459, %v4731
        %4850 = vst.msk [vmem:[#allocation5 + $0x58] sm:$0xff] %vm459, %v4739
        %4851 = vst.msk [vmem:[#allocation5 + $0x68] sm:$0xff] %vm459, %v4747
        %4852 = vst.msk [vmem:[#allocation5 + $0x78] sm:$0xff] %vm459, %v4755
        %4853 = vst.msk [vmem:[#allocation5 + $0x88] sm:$0xff] %vm459, %v4763
        %4854 = vst.msk [vmem:[#allocation5 + $0x98] sm:$0xff] %vm459, %v4771
        %4855 = vst.msk [vmem:[#allocation5 + $0xa8] sm:$0xff] %vm459, %v4779
        %4856 = vst.msk [vmem:[#allocation5 + $0xb8] sm:$0xff] %vm459, %v4787
        %4857 = vst.msk [vmem:[#allocation5 + $0xc8] sm:$0xff] %vm459, %v4795
        %4858 = vst.msk [vmem:[#allocation5 + $0xd8] sm:$0xff] %vm459, %v4803
        %4859 = vst.msk [vmem:[#allocation5 + $0xe8] sm:$0xff] %vm459, %v4811
        %4860 = vst.msk [vmem:[#allocation5 + $0xf8] sm:$0xff] %vm459, %v4819
        %4861 = vst.msk [vmem:[#allocation5 + $0x108] sm:$0xff] %vm459, %v4827
        %v4862 = vld [vmem:[#allocation5] sm:$0xff]
        %v4863 = vld [vmem:[#allocation5 + $0x8] sm:$0xff]
        %v4864 = vld [vmem:[#allocation5 + $0x10] sm:$0xff]
        %v4865 = vld [vmem:[#allocation5 + $0x18] sm:$0xff]
        %v4866 = vld [vmem:[#allocation5 + $0x20] sm:$0xff]
        %v4867 = vld [vmem:[#allocation5 + $0x28] sm:$0xff]
        %v4868 = vld [vmem:[#allocation5 + $0x30] sm:$0xff]
        %v4869 = vld [vmem:[#allocation5 + $0x38] sm:$0xff]
        %v4870 = vld [vmem:[#allocation5 + $0x40] sm:$0xff]
        %v4871 = vld [vmem:[#allocation5 + $0x48] sm:$0xff]
        %v4872 = vld [vmem:[#allocation5 + $0x50] sm:$0xff]
        %v4873 = vld [vmem:[#allocation5 + $0x58] sm:$0xff]
        %v4874 = vld [vmem:[#allocation5 + $0x60] sm:$0xff]
        %v4875 = vld [vmem:[#allocation5 + $0x68] sm:$0xff]
        %v4876 = vld [vmem:[#allocation5 + $0x70] sm:$0xff]
        %v4877 = vld [vmem:[#allocation5 + $0x78] sm:$0xff]
        %v4878 = vld [vmem:[#allocation5 + $0x80] sm:$0xff]
        %v4879 = vld [vmem:[#allocation5 + $0x88] sm:$0xff]
        %v4880 = vld [vmem:[#allocation5 + $0x90] sm:$0xff]
        %v4881 = vld [vmem:[#allocation5 + $0x98] sm:$0xff]
        %v4882 = vld [vmem:[#allocation5 + $0xa0] sm:$0xff]
        %v4883 = vld [vmem:[#allocation5 + $0xa8] sm:$0xff]
        %v4884 = vld [vmem:[#allocation5 + $0xb0] sm:$0xff]
        %v4885 = vld [vmem:[#allocation5 + $0xb8] sm:$0xff]
        %v4886 = vld [vmem:[#allocation5 + $0xc0] sm:$0xff]
        %v4887 = vld [vmem:[#allocation5 + $0xc8] sm:$0xff]
        %v4888 = vld [vmem:[#allocation5 + $0xd0] sm:$0xff]
        %v4889 = vld [vmem:[#allocation5 + $0xd8] sm:$0xff]
        %v4890 = vld [vmem:[#allocation5 + $0xe0] sm:$0xff]
        %v4891 = vld [vmem:[#allocation5 + $0xe8] sm:$0xff]
        %v4892 = vld [vmem:[#allocation5 + $0xf0] sm:$0xff]
        %v4893 = vld [vmem:[#allocation5 + $0xf8] sm:$0xff]
        %v4894 = vld [vmem:[%s8] sm:$0xf]
        %v4895 = vld [vmem:[%s8 + $0x4] sm:$0xf]
        %v4896 = vld [vmem:[%s8 + $0x8] sm:$0xf]
        %v4897 = vld [vmem:[%s8 + $0xc] sm:$0xf]
        %v4898 = vld [vmem:[%s8 + $0x10] sm:$0xf]
        %v4899 = vld [vmem:[%s8 + $0x14] sm:$0xf]
        %v4900 = vld [vmem:[%s8 + $0x18] sm:$0xf]
        %v4901 = vld [vmem:[%s8 + $0x1c] sm:$0xf]
        %v4902 = vld [vmem:[%s8 + $0x20] sm:$0xf]
        %v4903 = vld [vmem:[%s8 + $0x24] sm:$0xf]
        %v4904 = vld [vmem:[%s8 + $0x28] sm:$0xf]
        %v4905 = vld [vmem:[%s8 + $0x2c] sm:$0xf]
        %v4906 = vld [vmem:[%s8 + $0x30] sm:$0xf]
        %v4907 = vld [vmem:[%s8 + $0x34] sm:$0xf]
        %v4908 = vld [vmem:[%s8 + $0x38] sm:$0xf]
        %v4909 = vld [vmem:[%s8 + $0x3c] sm:$0xf]
        %v4910 = vld [vmem:[%s8 + $0x40] sm:$0xf]
        %v4911 = vld [vmem:[%s8 + $0x44] sm:$0xf]
        %v4912 = vld [vmem:[%s8 + $0x48] sm:$0xf]
        %v4913 = vld [vmem:[%s8 + $0x4c] sm:$0xf]
        %v4914 = vld [vmem:[%s8 + $0x50] sm:$0xf]
        %v4915 = vld [vmem:[%s8 + $0x54] sm:$0xf]
        %v4916 = vld [vmem:[%s8 + $0x58] sm:$0xf]
        %v4917 = vld [vmem:[%s8 + $0x5c] sm:$0xf]
        %v4942 = vunpack.c.l.b16 %v4894
        %v4943 = vunpack.c.l.b16 %v4895
        %v4944 = vunpack.c.l.b16 %v4896
        %v4945 = vunpack.c.l.b16 %v4897
        %v4946 = vunpack.c.l.b16 %v4898
        %v4947 = vunpack.c.l.b16 %v4899
        %v4948 = vunpack.c.l.b16 %v4900
        %v4949 = vunpack.c.l.b16 %v4901
        %v4950 = vunpack.c.l.b16 %v4902
        %v4951 = vunpack.c.l.b16 %v4903
        %v4952 = vunpack.c.l.b16 %v4904
        %v4953 = vunpack.c.l.b16 %v4905
        %v4954 = vunpack.c.l.b16 %v4906
        %v4955 = vunpack.c.l.b16 %v4907
        %v4956 = vunpack.c.l.b16 %v4908
        %v4957 = vunpack.c.l.b16 %v4909
        %v4958 = vunpack.c.l.b16 %v4910
        %v4959 = vunpack.c.l.b16 %v4911
        %v4960 = vunpack.c.l.b16 %v4912
        %v4961 = vunpack.c.l.b16 %v4913
        %v4962 = vunpack.c.l.b16 %v4914
        %v4963 = vunpack.c.l.b16 %v4915
        %v4964 = vunpack.c.l.b16 %v4916
        %v4965 = vunpack.c.l.b16 %v4917
        %v4966 = vpack.c.b16 %v4943, %v4942
        %v4967 = vpack.c.b16 %v4945, %v4944
        %v4968 = vpack.c.b16 %v4947, %v4946
        %v4969 = vpack.c.b16 %v4949, %v4948
        %v4970 = vpack.c.b16 %v4951, %v4950
        %v4971 = vpack.c.b16 %v4953, %v4952
        %v4972 = vpack.c.b16 %v4955, %v4954
        %v4973 = vpack.c.b16 %v4957, %v4956
        %v4974 = vpack.c.b16 %v4959, %v4958
        %v4975 = vpack.c.b16 %v4961, %v4960
        %v4976 = vpack.c.b16 %v4963, %v4962
        %v4977 = vpack.c.b16 %v4965, %v4964
        %v4991 = vsel %vm459, %v4863, 0
        %v4994 = vsel %vm459, %v4865, 0
        %v4997 = vsel %vm459, %v4867, 0
        %v5000 = vsel %vm459, %v4869, 0
        %v5003 = vsel %vm459, %v4871, 0
        %v5006 = vsel %vm459, %v4873, 0
        %v5009 = vsel %vm459, %v4875, 0
        %v5012 = vsel %vm459, %v4877, 0
        %v5015 = vsel %vm459, %v4879, 0
        %v5018 = vsel %vm459, %v4881, 0
        %v5021 = vsel %vm459, %v4883, 0
        %v5024 = vsel %vm459, %v4885, 0
        %v5027 = vsel %vm459, %v4887, 0
        %v5030 = vsel %vm459, %v4889, 0
        %v5033 = vsel %vm459, %v4891, 0
        %v5036 = vsel %vm459, %v4893, 0
        %5038 = vmatprep.subr.bf16.mxu0 0
        %5039 = vmatpush1.bf16.msra.mxu0 %v4966
        %5040 = vmatprep.subr.bf16.mxu0 0
        %5041 = vmatpush1.bf16.msra.mxu0 %v4967
        %5042 = vmatprep.subr.bf16.mxu0 0
        %5043 = vmatpush1.bf16.msra.mxu0 %v4968
        %5044 = vmatprep.subr.bf16.mxu0 0
        %5045 = vmatpush1.bf16.msra.mxu0 %v4969
        %5046 = vmatprep.subr.bf16.mxu0 0
        %5047 = vmatpush1.bf16.msra.mxu0 %v4970
        %5048 = vmatprep.subr.bf16.mxu0 0
        %5049 = vmatpush1.bf16.msra.mxu0 %v4971
        %5050 = vmatprep.subr.bf16.mxu0 0
        %5051 = vmatpush1.bf16.msra.mxu0 %v4972
        %5052 = vmatprep.subr.bf16.mxu0 0
        %5053 = vmatpush1.bf16.msra.mxu0 %v4973
        %5054 = vmatprep.subr.bf16.mxu0 0
        %5055 = vmatpush1.bf16.msra.mxu0 %v4974
        %5056 = vmatprep.subr.bf16.mxu0 0
        %5057 = vmatpush1.bf16.msra.mxu0 %v4975
        %5058 = vmatprep.subr.bf16.mxu0 0
        %5059 = vmatpush1.bf16.msra.mxu0 %v4976
        %5060 = vmatprep.subr.bf16.mxu0 0
        %5061 = vmatpush1.bf16.msra.mxu0 %v4977
        %5062 = vmatprep.subr.bf16.mxu0 0
        %5063 = vmatpush1.bf16.msra.mxu0 0
        %5064 = vmatprep.subr.bf16.mxu0 0
        %5065 = vmatpush1.bf16.msra.mxu0 0
        %5066 = vmatprep.subr.bf16.mxu0 0
        %5067 = vmatpush1.bf16.msra.mxu0 0
        %5068 = vmatprep.subr.bf16.mxu0 0
        %5069 = vmatpush1.bf16.msra.mxu0 0
        %5070 = vmatprep.mubr.bf16.mxu0 %v4991
        %5071 = vmatmul.mubr.bf16.gmra.mrb[0].mxu0 %v4862
        %v5072 = vpop.f32.mrb[0].mxu0
        %v5073 = vadd.f32 0.0, %v5072
        %v5074 = vpop.f32.mrb[0].mxu0
        %v5075 = vpop.f32.mrb[0].mxu0
        %v5076 = vadd.f32 0.0, %v5075
        %v5077 = vpop.f32.mrb[0].mxu0
        %5078 = vmatprep.mubr.bf16.mxu0 %v4994
        %5079 = vmatmul.mubr.bf16.gmra.mrb[0].mxu0 %v4864
        %v5080 = vpop.f32.mrb[0].mxu0
        %v5081 = vadd.f32 0.0, %v5080
        %v5082 = vpop.f32.mrb[0].mxu0
        %v5083 = vpop.f32.mrb[0].mxu0
        %v5084 = vadd.f32 0.0, %v5083
        %v5085 = vpop.f32.mrb[0].mxu0
        %5086 = vmatprep.mubr.bf16.mxu0 %v4997
        %5087 = vmatmul.mubr.bf16.gmra.mrb[0].mxu0 %v4866
        %v5088 = vpop.f32.mrb[0].mxu0
        %v5089 = vadd.f32 0.0, %v5088
        %v5090 = vpop.f32.mrb[0].mxu0
        %v5091 = vpop.f32.mrb[0].mxu0
        %v5092 = vadd.f32 0.0, %v5091
        %v5093 = vpop.f32.mrb[0].mxu0
        %5094 = vmatprep.mubr.bf16.mxu0 %v5000
        %5095 = vmatmul.mubr.bf16.gmra.mrb[0].mxu0 %v4868
        %v5096 = vpop.f32.mrb[0].mxu0
        %v5097 = vadd.f32 0.0, %v5096
        %v5098 = vpop.f32.mrb[0].mxu0
        %v5099 = vpop.f32.mrb[0].mxu0
        %v5100 = vadd.f32 0.0, %v5099
        %v5101 = vpop.f32.mrb[0].mxu0
        %5102 = vmatprep.mubr.bf16.mxu0 %v5003
        %5103 = vmatmul.mubr.bf16.gmra.mrb[0].mxu0 %v4870
        %v5104 = vpop.f32.mrb[0].mxu0
        %v5105 = vadd.f32 0.0, %v5104
        %v5106 = vpop.f32.mrb[0].mxu0
        %v5107 = vpop.f32.mrb[0].mxu0
        %v5108 = vadd.f32 0.0, %v5107
        %v5109 = vpop.f32.mrb[0].mxu0
        %5110 = vmatprep.mubr.bf16.mxu0 %v5006
        %5111 = vmatmul.mubr.bf16.gmra.mrb[0].mxu0 %v4872
        %v5112 = vpop.f32.mrb[0].mxu0
        %v5113 = vadd.f32 0.0, %v5112
        %v5114 = vpop.f32.mrb[0].mxu0
        %v5115 = vpop.f32.mrb[0].mxu0
        %v5116 = vadd.f32 0.0, %v5115
        %v5117 = vpop.f32.mrb[0].mxu0
        %5118 = vmatprep.mubr.bf16.mxu0 %v5009
        %5119 = vmatmul.mubr.bf16.gmra.mrb[0].mxu0 %v4874
        %v5120 = vpop.f32.mrb[0].mxu0
        %v5121 = vadd.f32 0.0, %v5120
        %v5122 = vpop.f32.mrb[0].mxu0
        %v5123 = vpop.f32.mrb[0].mxu0
        %v5124 = vadd.f32 0.0, %v5123
        %v5125 = vpop.f32.mrb[0].mxu0
        %5126 = vmatprep.mubr.bf16.mxu0 %v5012
        %5127 = vmatmul.mubr.bf16.gmra.mrb[0].mxu0 %v4876
        %v5128 = vpop.f32.mrb[0].mxu0
        %v5129 = vadd.f32 0.0, %v5128
        %v5130 = vpop.f32.mrb[0].mxu0
        %v5131 = vpop.f32.mrb[0].mxu0
        %v5132 = vadd.f32 0.0, %v5131
        %v5133 = vpop.f32.mrb[0].mxu0
        %5134 = vmatprep.mubr.bf16.mxu0 %v5015
        %5135 = vmatmul.mubr.bf16.gmra.mrb[0].mxu0 %v4878
        %v5136 = vpop.f32.mrb[0].mxu0
        %v5137 = vadd.f32 0.0, %v5136
        %v5138 = vpop.f32.mrb[0].mxu0
        %v5139 = vpop.f32.mrb[0].mxu0
        %v5140 = vadd.f32 0.0, %v5139
        %v5141 = vpop.f32.mrb[0].mxu0
        %5142 = vmatprep.mubr.bf16.mxu0 %v5018
        %5143 = vmatmul.mubr.bf16.gmra.mrb[0].mxu0 %v4880
        %v5144 = vpop.f32.mrb[0].mxu0
        %v5145 = vadd.f32 0.0, %v5144
        %v5146 = vpop.f32.mrb[0].mxu0
        %v5147 = vpop.f32.mrb[0].mxu0
        %v5148 = vadd.f32 0.0, %v5147
        %v5149 = vpop.f32.mrb[0].mxu0
        %5150 = vmatprep.mubr.bf16.mxu0 %v5021
        %5151 = vmatmul.mubr.bf16.gmra.mrb[0].mxu0 %v4882
        %v5152 = vpop.f32.mrb[0].mxu0
        %v5153 = vadd.f32 0.0, %v5152
        %v5154 = vpop.f32.mrb[0].mxu0
        %v5155 = vpop.f32.mrb[0].mxu0
        %v5156 = vadd.f32 0.0, %v5155
        %v5157 = vpop.f32.mrb[0].mxu0
        %5158 = vmatprep.mubr.bf16.mxu0 %v5024
        %5159 = vmatmul.mubr.bf16.gmra.mrb[0].mxu0 %v4884
        %v5160 = vpop.f32.mrb[0].mxu0
        %v5161 = vadd.f32 0.0, %v5160
        %v5162 = vpop.f32.mrb[0].mxu0
        %v5163 = vpop.f32.mrb[0].mxu0
        %v5164 = vadd.f32 0.0, %v5163
        %v5165 = vpop.f32.mrb[0].mxu0
        %5166 = vmatprep.mubr.bf16.mxu0 %v5027
        %5167 = vmatmul.mubr.bf16.gmra.mrb[0].mxu0 %v4886
        %v5168 = vpop.f32.mrb[0].mxu0
        %v5169 = vadd.f32 0.0, %v5168
        %v5170 = vpop.f32.mrb[0].mxu0
        %v5171 = vpop.f32.mrb[0].mxu0
        %v5172 = vadd.f32 0.0, %v5171
        %v5173 = vpop.f32.mrb[0].mxu0
        %5174 = vmatprep.mubr.bf16.mxu0 %v5030
        %5175 = vmatmul.mubr.bf16.gmra.mrb[0].mxu0 %v4888
        %v5176 = vpop.f32.mrb[0].mxu0
        %v5177 = vadd.f32 0.0, %v5176
        %v5178 = vpop.f32.mrb[0].mxu0
        %v5179 = vpop.f32.mrb[0].mxu0
        %v5180 = vadd.f32 0.0, %v5179
        %v5181 = vpop.f32.mrb[0].mxu0
        %5182 = vmatprep.mubr.bf16.mxu0 %v5033
        %5183 = vmatmul.mubr.bf16.gmra.mrb[0].mxu0 %v4890
        %v5184 = vpop.f32.mrb[0].mxu0
        %v5185 = vadd.f32 0.0, %v5184
        %v5186 = vpop.f32.mrb[0].mxu0
        %v5187 = vpop.f32.mrb[0].mxu0
        %v5188 = vadd.f32 0.0, %v5187
        %v5189 = vpop.f32.mrb[0].mxu0
        %5190 = vmatprep.mubr.bf16.mxu0 %v5036
        %5191 = vmatmul.mubr.bf16.gmra.mrb[0].mxu0 %v4892
        %v5192 = vpop.f32.mrb[0].mxu0
        %v5193 = vadd.f32 0.0, %v5192
        %v5194 = vpop.f32.mrb[0].mxu0
        %v5195 = vpop.f32.mrb[0].mxu0
        %v5196 = vadd.f32 0.0, %v5195
        %v5197 = vpop.f32.mrb[0].mxu0
        %5198 = vdwg.mxu0
        %v5199 = vmul.f32 %v5073, %v977
        %v5200 = vmul.f32 %v5076, %v978
        %v5201 = vmul.f32 %v5081, %v979
        %v5202 = vmul.f32 %v5084, %v980
        %v5203 = vmul.f32 %v5089, %v981
        %v5204 = vmul.f32 %v5092, %v982
        %v5205 = vmul.f32 %v5097, %v983
        %v5206 = vmul.f32 %v5100, %v984
        %v5207 = vmul.f32 %v5105, %v985
        %v5208 = vmul.f32 %v5108, %v986
        %v5209 = vmul.f32 %v5113, %v987
        %v5210 = vmul.f32 %v5116, %v988
        %v5211 = vmul.f32 %v5121, %v989
        %v5212 = vmul.f32 %v5124, %v990
        %v5213 = vmul.f32 %v5129, %v991
        %v5214 = vmul.f32 %v5132, %v992
        %v5215 = vmul.f32 %v5137, %v993
        %v5216 = vmul.f32 %v5140, %v994
        %v5217 = vmul.f32 %v5145, %v995
        %v5218 = vmul.f32 %v5148, %v996
        %v5219 = vmul.f32 %v5153, %v997
        %v5220 = vmul.f32 %v5156, %v998
        %v5221 = vmul.f32 %v5161, %v999
        %v5222 = vmul.f32 %v5164, %v1000
        %v5223 = vmul.f32 %v5169, %v1001
        %v5224 = vmul.f32 %v5172, %v1002
        %v5225 = vmul.f32 %v5177, %v1003
        %v5226 = vmul.f32 %v5180, %v1004
        %v5227 = vmul.f32 %v5185, %v1005
        %v5228 = vmul.f32 %v5188, %v1006
        %v5229 = vmul.f32 %v5193, %v1007
        %v5230 = vmul.f32 %v5196, %v1008
        %v5231 = vld [vmem:[#allocation5] sm:$0xff]
        %v5232 = vld [vmem:[#allocation5 + $0x8] sm:$0xff]
        %v5233 = vld [vmem:[#allocation5 + $0x10] sm:$0xff]
        %v5234 = vld [vmem:[#allocation5 + $0x18] sm:$0xff]
        %v5235 = vld [vmem:[#allocation5 + $0x20] sm:$0xff]
        %v5236 = vld [vmem:[#allocation5 + $0x28] sm:$0xff]
        %v5237 = vld [vmem:[#allocation5 + $0x30] sm:$0xff]
        %v5238 = vld [vmem:[#allocation5 + $0x38] sm:$0xff]
        %v5239 = vld [vmem:[#allocation5 + $0x40] sm:$0xff]
        %v5240 = vld [vmem:[#allocation5 + $0x48] sm:$0xff]
        %v5241 = vld [vmem:[#allocation5 + $0x50] sm:$0xff]
        %v5242 = vld [vmem:[#allocation5 + $0x58] sm:$0xff]
        %v5243 = vld [vmem:[#allocation5 + $0x60] sm:$0xff]
        %v5244 = vld [vmem:[#allocation5 + $0x68] sm:$0xff]
        %v5245 = vld [vmem:[#allocation5 + $0x70] sm:$0xff]
        %v5246 = vld [vmem:[#allocation5 + $0x78] sm:$0xff]
        %v5247 = vld [vmem:[#allocation5 + $0x80] sm:$0xff]
        %v5248 = vld [vmem:[#allocation5 + $0x88] sm:$0xff]
        %v5249 = vld [vmem:[#allocation5 + $0x90] sm:$0xff]
        %v5250 = vld [vmem:[#allocation5 + $0x98] sm:$0xff]
        %v5251 = vld [vmem:[#allocation5 + $0xa0] sm:$0xff]
        %v5252 = vld [vmem:[#allocation5 + $0xa8] sm:$0xff]
        %v5253 = vld [vmem:[#allocation5 + $0xb0] sm:$0xff]
        %v5254 = vld [vmem:[#allocation5 + $0xb8] sm:$0xff]
        %v5255 = vld [vmem:[#allocation5 + $0xc0] sm:$0xff]
        %v5256 = vld [vmem:[#allocation5 + $0xc8] sm:$0xff]
        %v5257 = vld [vmem:[#allocation5 + $0xd0] sm:$0xff]
        %v5258 = vld [vmem:[#allocation5 + $0xd8] sm:$0xff]
        %v5259 = vld [vmem:[#allocation5 + $0xe0] sm:$0xff]
        %v5260 = vld [vmem:[#allocation5 + $0xe8] sm:$0xff]
        %v5261 = vld [vmem:[#allocation5 + $0xf0] sm:$0xff]
        %v5262 = vld [vmem:[#allocation5 + $0xf8] sm:$0xff]
        %v5263 = vld [vmem:[#allocation5 + $0x100] sm:$0x1]
        %v5264 = vld [vmem:[#allocation5 + $0x108] sm:$0x1]
        %v5265 = vld [vmem:[%s8 + $0x60] sm:$0xf]
        %v5266 = vld [vmem:[%s8 + $0x64] sm:$0xf]
        %v5267 = vld [vmem:[%s8 + $0x68] sm:$0xf]
        %v5268 = vld [vmem:[%s8 + $0x6c] sm:$0xf]
        %v5269 = vld [vmem:[%s8 + $0x70] sm:$0xf]
        %v5270 = vld [vmem:[%s8 + $0x74] sm:$0xf]
        %v5271 = vld [vmem:[%s8 + $0x78] sm:$0xf]
        %v5272 = vld [vmem:[%s8 + $0x7c] sm:$0xf]
        %v5273 = vld [vmem:[%s8 + $0x80] sm:$0xf]
        %v5274 = vld [vmem:[%s8 + $0x84] sm:$0xf]
        %v5275 = vld [vmem:[%s8 + $0x88] sm:$0xf]
        %v5276 = vld [vmem:[%s8 + $0x8c] sm:$0xf]
        %v5277 = vld [vmem:[%s8 + $0x90] sm:$0xf]
        %v5278 = vld [vmem:[%s8 + $0x94] sm:$0xf]
        %v5279 = vld [vmem:[%s8 + $0x98] sm:$0xf]
        %v5280 = vld [vmem:[%s8 + $0x9c] sm:$0xf]
        %v5281 = vld [vmem:[%s8 + $0xa0] sm:$0xf]
        %v5282 = vld [vmem:[%s8 + $0xa4] sm:$0xf]
        %v5283 = vld [vmem:[%s8 + $0xa8] sm:$0xf]
        %v5284 = vld [vmem:[%s8 + $0xac] sm:$0xf]
        %v5285 = vld [vmem:[%s8 + $0xb0] sm:$0xf]
        %v5286 = vld [vmem:[%s8 + $0xb4] sm:$0xf]
        %v5287 = vld [vmem:[%s8 + $0xb8] sm:$0xf]
        %v5288 = vld [vmem:[%s8 + $0xbc] sm:$0xf]
        %v5290 = vshrl.u32 %v5231, 16
        %v5292 = vshll.u32 %v5231, 16
        %v5294 = vrot.slane %v5292, 1
        %v5295 = vor.u32 %v5290, %v5294
        %v5297 = vshll.u32 %v5233, 16
        %v5299 = vrot.slane %v5297, 1
        %v5300 = vsel %vm2659, %v5295, %v5299
        %v5302 = vshrl.u32 %v5232, 16
        %v5304 = vshll.u32 %v5232, 16
        %v5306 = vrot.slane %v5304, 1
        %v5307 = vor.u32 %v5302, %v5306
        %v5309 = vshll.u32 %v5234, 16
        %v5311 = vrot.slane %v5309, 1
        %v5312 = vsel %vm2659, %v5307, %v5311
        %v5313 = vshrl.u32 %v5233, 16
        %v5315 = vor.u32 %v5313, %v5299
        %v5317 = vshll.u32 %v5235, 16
        %v5319 = vrot.slane %v5317, 1
        %v5320 = vsel %vm2659, %v5315, %v5319
        %v5321 = vshrl.u32 %v5234, 16
        %v5323 = vor.u32 %v5321, %v5311
        %v5325 = vshll.u32 %v5236, 16
        %v5327 = vrot.slane %v5325, 1
        %v5328 = vsel %vm2659, %v5323, %v5327
        %v5329 = vshrl.u32 %v5235, 16
        %v5331 = vor.u32 %v5329, %v5319
        %v5333 = vshll.u32 %v5237, 16
        %v5335 = vrot.slane %v5333, 1
        %v5336 = vsel %vm2659, %v5331, %v5335
        %v5337 = vshrl.u32 %v5236, 16
        %v5339 = vor.u32 %v5337, %v5327
        %v5341 = vshll.u32 %v5238, 16
        %v5343 = vrot.slane %v5341, 1
        %v5344 = vsel %vm2659, %v5339, %v5343
        %v5345 = vshrl.u32 %v5237, 16
        %v5347 = vor.u32 %v5345, %v5335
        %v5349 = vshll.u32 %v5239, 16
        %v5351 = vrot.slane %v5349, 1
        %v5352 = vsel %vm2659, %v5347, %v5351
        %v5353 = vshrl.u32 %v5238, 16
        %v5355 = vor.u32 %v5353, %v5343
        %v5357 = vshll.u32 %v5240, 16
        %v5359 = vrot.slane %v5357, 1
        %v5360 = vsel %vm2659, %v5355, %v5359
        %v5361 = vshrl.u32 %v5239, 16
        %v5363 = vor.u32 %v5361, %v5351
        %v5365 = vshll.u32 %v5241, 16
        %v5367 = vrot.slane %v5365, 1
        %v5368 = vsel %vm2659, %v5363, %v5367
        %v5369 = vshrl.u32 %v5240, 16
        %v5371 = vor.u32 %v5369, %v5359
        %v5373 = vshll.u32 %v5242, 16
        %v5375 = vrot.slane %v5373, 1
        %v5376 = vsel %vm2659, %v5371, %v5375
        %v5377 = vshrl.u32 %v5241, 16
        %v5379 = vor.u32 %v5377, %v5367
        %v5381 = vshll.u32 %v5243, 16
        %v5383 = vrot.slane %v5381, 1
        %v5384 = vsel %vm2659, %v5379, %v5383
        %v5385 = vshrl.u32 %v5242, 16
        %v5387 = vor.u32 %v5385, %v5375
        %v5389 = vshll.u32 %v5244, 16
        %v5391 = vrot.slane %v5389, 1
        %v5392 = vsel %vm2659, %v5387, %v5391
        %v5393 = vshrl.u32 %v5243, 16
        %v5395 = vor.u32 %v5393, %v5383
        %v5397 = vshll.u32 %v5245, 16
        %v5399 = vrot.slane %v5397, 1
        %v5400 = vsel %vm2659, %v5395, %v5399
        %v5401 = vshrl.u32 %v5244, 16
        %v5403 = vor.u32 %v5401, %v5391
        %v5405 = vshll.u32 %v5246, 16
        %v5407 = vrot.slane %v5405, 1
        %v5408 = vsel %vm2659, %v5403, %v5407
        %v5409 = vshrl.u32 %v5245, 16
        %v5411 = vor.u32 %v5409, %v5399
        %v5413 = vshll.u32 %v5247, 16
        %v5415 = vrot.slane %v5413, 1
        %v5416 = vsel %vm2659, %v5411, %v5415
        %v5417 = vshrl.u32 %v5246, 16
        %v5419 = vor.u32 %v5417, %v5407
        %v5421 = vshll.u32 %v5248, 16
        %v5423 = vrot.slane %v5421, 1
        %v5424 = vsel %vm2659, %v5419, %v5423
        %v5425 = vshrl.u32 %v5247, 16
        %v5427 = vor.u32 %v5425, %v5415
        %v5429 = vshll.u32 %v5249, 16
        %v5431 = vrot.slane %v5429, 1
        %v5432 = vsel %vm2659, %v5427, %v5431
        %v5433 = vshrl.u32 %v5248, 16
        %v5435 = vor.u32 %v5433, %v5423
        %v5437 = vshll.u32 %v5250, 16
        %v5439 = vrot.slane %v5437, 1
        %v5440 = vsel %vm2659, %v5435, %v5439
        %v5441 = vshrl.u32 %v5249, 16
        %v5443 = vor.u32 %v5441, %v5431
        %v5445 = vshll.u32 %v5251, 16
        %v5447 = vrot.slane %v5445, 1
        %v5448 = vsel %vm2659, %v5443, %v5447
        %v5449 = vshrl.u32 %v5250, 16
        %v5451 = vor.u32 %v5449, %v5439
        %v5453 = vshll.u32 %v5252, 16
        %v5455 = vrot.slane %v5453, 1
        %v5456 = vsel %vm2659, %v5451, %v5455
        %v5457 = vshrl.u32 %v5251, 16
        %v5459 = vor.u32 %v5457, %v5447
        %v5461 = vshll.u32 %v5253, 16
        %v5463 = vrot.slane %v5461, 1
        %v5464 = vsel %vm2659, %v5459, %v5463
        %v5465 = vshrl.u32 %v5252, 16
        %v5467 = vor.u32 %v5465, %v5455
        %v5469 = vshll.u32 %v5254, 16
        %v5471 = vrot.slane %v5469, 1
        %v5472 = vsel %vm2659, %v5467, %v5471
        %v5473 = vshrl.u32 %v5253, 16
        %v5475 = vor.u32 %v5473, %v5463
        %v5477 = vshll.u32 %v5255, 16
        %v5479 = vrot.slane %v5477, 1
        %v5480 = vsel %vm2659, %v5475, %v5479
        %v5481 = vshrl.u32 %v5254, 16
        %v5483 = vor.u32 %v5481, %v5471
        %v5485 = vshll.u32 %v5256, 16
        %v5487 = vrot.slane %v5485, 1
        %v5488 = vsel %vm2659, %v5483, %v5487
        %v5489 = vshrl.u32 %v5255, 16
        %v5491 = vor.u32 %v5489, %v5479
        %v5493 = vshll.u32 %v5257, 16
        %v5495 = vrot.slane %v5493, 1
        %v5496 = vsel %vm2659, %v5491, %v5495
        %v5497 = vshrl.u32 %v5256, 16
        %v5499 = vor.u32 %v5497, %v5487
        %v5501 = vshll.u32 %v5258, 16
        %v5503 = vrot.slane %v5501, 1
        %v5504 = vsel %vm2659, %v5499, %v5503
        %v5505 = vshrl.u32 %v5257, 16
        %v5507 = vor.u32 %v5505, %v5495
        %v5509 = vshll.u32 %v5259, 16
        %v5511 = vrot.slane %v5509, 1
        %v5512 = vsel %vm2659, %v5507, %v5511
        %v5513 = vshrl.u32 %v5258, 16
        %v5515 = vor.u32 %v5513, %v5503
        %v5517 = vshll.u32 %v5260, 16
        %v5519 = vrot.slane %v5517, 1
        %v5520 = vsel %vm2659, %v5515, %v5519
        %v5521 = vshrl.u32 %v5259, 16
        %v5523 = vor.u32 %v5521, %v5511
        %v5525 = vshll.u32 %v5261, 16
        %v5527 = vrot.slane %v5525, 1
        %v5528 = vsel %vm2659, %v5523, %v5527
        %v5529 = vshrl.u32 %v5260, 16
        %v5531 = vor.u32 %v5529, %v5519
        %v5533 = vshll.u32 %v5262, 16
        %v5535 = vrot.slane %v5533, 1
        %v5536 = vsel %vm2659, %v5531, %v5535
        %v5537 = vshrl.u32 %v5261, 16
        %v5539 = vor.u32 %v5537, %v5527
        %v5541 = vshll.u32 %v5263, 16
        %v5543 = vrot.slane %v5541, 1
        %v5544 = vsel %vm2659, %v5539, %v5543
        %v5545 = vshrl.u32 %v5262, 16
        %v5547 = vor.u32 %v5545, %v5535
        %v5549 = vshll.u32 %v5264, 16
        %v5551 = vrot.slane %v5549, 1
        %v5552 = vsel %vm2659, %v5547, %v5551
        %v5593 = vunpack.c.l.b16 %v5265
        %v5594 = vunpack.c.l.b16 %v5266
        %v5595 = vunpack.c.l.b16 %v5267
        %v5596 = vunpack.c.l.b16 %v5268
        %v5597 = vunpack.c.l.b16 %v5269
        %v5598 = vunpack.c.l.b16 %v5270
        %v5599 = vunpack.c.l.b16 %v5271
        %v5600 = vunpack.c.l.b16 %v5272
        %v5601 = vunpack.c.l.b16 %v5273
        %v5602 = vunpack.c.l.b16 %v5274
        %v5603 = vunpack.c.l.b16 %v5275
        %v5604 = vunpack.c.l.b16 %v5276
        %v5605 = vunpack.c.l.b16 %v5277
        %v5606 = vunpack.c.l.b16 %v5278
        %v5607 = vunpack.c.l.b16 %v5279
        %v5608 = vunpack.c.l.b16 %v5280
        %v5609 = vunpack.c.l.b16 %v5281
        %v5610 = vunpack.c.l.b16 %v5282
        %v5611 = vunpack.c.l.b16 %v5283
        %v5612 = vunpack.c.l.b16 %v5284
        %v5613 = vunpack.c.l.b16 %v5285
        %v5614 = vunpack.c.l.b16 %v5286
        %v5615 = vunpack.c.l.b16 %v5287
        %v5616 = vunpack.c.l.b16 %v5288
        %v5617 = vpack.c.b16 %v5594, %v5593
        %v5618 = vpack.c.b16 %v5596, %v5595
        %v5619 = vpack.c.b16 %v5598, %v5597
        %v5620 = vpack.c.b16 %v5600, %v5599
        %v5621 = vpack.c.b16 %v5602, %v5601
        %v5622 = vpack.c.b16 %v5604, %v5603
        %v5623 = vpack.c.b16 %v5606, %v5605
        %v5624 = vpack.c.b16 %v5608, %v5607
        %v5625 = vpack.c.b16 %v5610, %v5609
        %v5626 = vpack.c.b16 %v5612, %v5611
        %v5627 = vpack.c.b16 %v5614, %v5613
        %v5628 = vpack.c.b16 %v5616, %v5615
        %v5642 = vsel %vm459, %v5312, 0
        %v5645 = vsel %vm459, %v5328, 0
        %v5648 = vsel %vm459, %v5344, 0
        %v5651 = vsel %vm459, %v5360, 0
        %v5654 = vsel %vm459, %v5376, 0
        %v5657 = vsel %vm459, %v5392, 0
        %v5660 = vsel %vm459, %v5408, 0
        %v5663 = vsel %vm459, %v5424, 0
        %v5666 = vsel %vm459, %v5440, 0
        %v5669 = vsel %vm459, %v5456, 0
        %v5672 = vsel %vm459, %v5472, 0
        %v5675 = vsel %vm459, %v5488, 0
        %v5678 = vsel %vm459, %v5504, 0
        %v5681 = vsel %vm459, %v5520, 0
        %v5684 = vsel %vm459, %v5536, 0
        %v5687 = vsel %vm459, %v5552, 0
        %5689 = vmatprep.subr.bf16.mxu0 0
        %5690 = vmatpush1.bf16.msra.mxu0 %v5617
        %5691 = vmatprep.subr.bf16.mxu0 0
        %5692 = vmatpush1.bf16.msra.mxu0 %v5618
        %5693 = vmatprep.subr.bf16.mxu0 0
        %5694 = vmatpush1.bf16.msra.mxu0 %v5619
        %5695 = vmatprep.subr.bf16.mxu0 0
        %5696 = vmatpush1.bf16.msra.mxu0 %v5620
        %5697 = vmatprep.subr.bf16.mxu0 0
        %5698 = vmatpush1.bf16.msra.mxu0 %v5621
        %5699 = vmatprep.subr.bf16.mxu0 0
        %5700 = vmatpush1.bf16.msra.mxu0 %v5622
        %5701 = vmatprep.subr.bf16.mxu0 0
        %5702 = vmatpush1.bf16.msra.mxu0 %v5623
        %5703 = vmatprep.subr.bf16.mxu0 0
        %5704 = vmatpush1.bf16.msra.mxu0 %v5624
        %5705 = vmatprep.subr.bf16.mxu0 0
        %5706 = vmatpush1.bf16.msra.mxu0 %v5625
        %5707 = vmatprep.subr.bf16.mxu0 0
        %5708 = vmatpush1.bf16.msra.mxu0 %v5626
        %5709 = vmatprep.subr.bf16.mxu0 0
        %5710 = vmatpush1.bf16.msra.mxu0 %v5627
        %5711 = vmatprep.subr.bf16.mxu0 0
        %5712 = vmatpush1.bf16.msra.mxu0 %v5628
        %5713 = vmatprep.subr.bf16.mxu0 0
        %5714 = vmatpush1.bf16.msra.mxu0 0
        %5715 = vmatprep.subr.bf16.mxu0 0
        %5716 = vmatpush1.bf16.msra.mxu0 0
        %5717 = vmatprep.subr.bf16.mxu0 0
        %5718 = vmatpush1.bf16.msra.mxu0 0
        %5719 = vmatprep.subr.bf16.mxu0 0
        %5720 = vmatpush1.bf16.msra.mxu0 0
        %5721 = vmatprep.mubr.bf16.mxu0 %v5642
        %5722 = vmatmul.mubr.bf16.gmra.mrb[0].mxu0 %v5300
        %v5723 = vpop.f32.mrb[0].mxu0
        %v5724 = vadd.f32 0.0, %v5723
        %v5725 = vpop.f32.mrb[0].mxu0
        %v5726 = vpop.f32.mrb[0].mxu0
        %v5727 = vadd.f32 0.0, %v5726
        %v5728 = vpop.f32.mrb[0].mxu0
        %5729 = vmatprep.mubr.bf16.mxu0 %v5645
        %5730 = vmatmul.mubr.bf16.gmra.mrb[0].mxu0 %v5320
        %v5731 = vpop.f32.mrb[0].mxu0
        %v5732 = vadd.f32 0.0, %v5731
        %v5733 = vpop.f32.mrb[0].mxu0
        %v5734 = vpop.f32.mrb[0].mxu0
        %v5735 = vadd.f32 0.0, %v5734
        %v5736 = vpop.f32.mrb[0].mxu0
        %5737 = vmatprep.mubr.bf16.mxu0 %v5648
        %5738 = vmatmul.mubr.bf16.gmra.mrb[0].mxu0 %v5336
        %v5739 = vpop.f32.mrb[0].mxu0
        %v5740 = vadd.f32 0.0, %v5739
        %v5741 = vpop.f32.mrb[0].mxu0
        %v5742 = vpop.f32.mrb[0].mxu0
        %v5743 = vadd.f32 0.0, %v5742
        %v5744 = vpop.f32.mrb[0].mxu0
        %5745 = vmatprep.mubr.bf16.mxu0 %v5651
        %5746 = vmatmul.mubr.bf16.gmra.mrb[0].mxu0 %v5352
        %v5747 = vpop.f32.mrb[0].mxu0
        %v5748 = vadd.f32 0.0, %v5747
        %v5749 = vpop.f32.mrb[0].mxu0
        %v5750 = vpop.f32.mrb[0].mxu0
        %v5751 = vadd.f32 0.0, %v5750
        %v5752 = vpop.f32.mrb[0].mxu0
        %5753 = vmatprep.mubr.bf16.mxu0 %v5654
        %5754 = vmatmul.mubr.bf16.gmra.mrb[0].mxu0 %v5368
        %v5755 = vpop.f32.mrb[0].mxu0
        %v5756 = vadd.f32 0.0, %v5755
        %v5757 = vpop.f32.mrb[0].mxu0
        %v5758 = vpop.f32.mrb[0].mxu0
        %v5759 = vadd.f32 0.0, %v5758
        %v5760 = vpop.f32.mrb[0].mxu0
        %5761 = vmatprep.mubr.bf16.mxu0 %v5657
        %5762 = vmatmul.mubr.bf16.gmra.mrb[0].mxu0 %v5384
        %v5763 = vpop.f32.mrb[0].mxu0
        %v5764 = vadd.f32 0.0, %v5763
        %v5765 = vpop.f32.mrb[0].mxu0
        %v5766 = vpop.f32.mrb[0].mxu0
        %v5767 = vadd.f32 0.0, %v5766
        %v5768 = vpop.f32.mrb[0].mxu0
        %5769 = vmatprep.mubr.bf16.mxu0 %v5660
        %5770 = vmatmul.mubr.bf16.gmra.mrb[0].mxu0 %v5400
        %v5771 = vpop.f32.mrb[0].mxu0
        %v5772 = vadd.f32 0.0, %v5771
        %v5773 = vpop.f32.mrb[0].mxu0
        %v5774 = vpop.f32.mrb[0].mxu0
        %v5775 = vadd.f32 0.0, %v5774
        %v5776 = vpop.f32.mrb[0].mxu0
        %5777 = vmatprep.mubr.bf16.mxu0 %v5663
        %5778 = vmatmul.mubr.bf16.gmra.mrb[0].mxu0 %v5416
        %v5779 = vpop.f32.mrb[0].mxu0
        %v5780 = vadd.f32 0.0, %v5779
        %v5781 = vpop.f32.mrb[0].mxu0
        %v5782 = vpop.f32.mrb[0].mxu0
        %v5783 = vadd.f32 0.0, %v5782
        %v5784 = vpop.f32.mrb[0].mxu0
        %5785 = vmatprep.mubr.bf16.mxu0 %v5666
        %5786 = vmatmul.mubr.bf16.gmra.mrb[0].mxu0 %v5432
        %v5787 = vpop.f32.mrb[0].mxu0
        %v5788 = vadd.f32 0.0, %v5787
        %v5789 = vpop.f32.mrb[0].mxu0
        %v5790 = vpop.f32.mrb[0].mxu0
        %v5791 = vadd.f32 0.0, %v5790
        %v5792 = vpop.f32.mrb[0].mxu0
        %5793 = vmatprep.mubr.bf16.mxu0 %v5669
        %5794 = vmatmul.mubr.bf16.gmra.mrb[0].mxu0 %v5448
        %v5795 = vpop.f32.mrb[0].mxu0
        %v5796 = vadd.f32 0.0, %v5795
        %v5797 = vpop.f32.mrb[0].mxu0
        %v5798 = vpop.f32.mrb[0].mxu0
        %v5799 = vadd.f32 0.0, %v5798
        %v5800 = vpop.f32.mrb[0].mxu0
        %5801 = vmatprep.mubr.bf16.mxu0 %v5672
        %5802 = vmatmul.mubr.bf16.gmra.mrb[0].mxu0 %v5464
        %v5803 = vpop.f32.mrb[0].mxu0
        %v5804 = vadd.f32 0.0, %v5803
        %v5805 = vpop.f32.mrb[0].mxu0
        %v5806 = vpop.f32.mrb[0].mxu0
        %v5807 = vadd.f32 0.0, %v5806
        %v5808 = vpop.f32.mrb[0].mxu0
        %5809 = vmatprep.mubr.bf16.mxu0 %v5675
        %5810 = vmatmul.mubr.bf16.gmra.mrb[0].mxu0 %v5480
        %v5811 = vpop.f32.mrb[0].mxu0
        %v5812 = vadd.f32 0.0, %v5811
        %v5813 = vpop.f32.mrb[0].mxu0
        %v5814 = vpop.f32.mrb[0].mxu0
        %v5815 = vadd.f32 0.0, %v5814
        %v5816 = vpop.f32.mrb[0].mxu0
        %5817 = vmatprep.mubr.bf16.mxu0 %v5678
        %5818 = vmatmul.mubr.bf16.gmra.mrb[0].mxu0 %v5496
        %v5819 = vpop.f32.mrb[0].mxu0
        %v5820 = vadd.f32 0.0, %v5819
        %v5821 = vpop.f32.mrb[0].mxu0
        %v5822 = vpop.f32.mrb[0].mxu0
        %v5823 = vadd.f32 0.0, %v5822
        %v5824 = vpop.f32.mrb[0].mxu0
        %5825 = vmatprep.mubr.bf16.mxu0 %v5681
        %5826 = vmatmul.mubr.bf16.gmra.mrb[0].mxu0 %v5512
        %v5827 = vpop.f32.mrb[0].mxu0
        %v5828 = vadd.f32 0.0, %v5827
        %v5829 = vpop.f32.mrb[0].mxu0
        %v5830 = vpop.f32.mrb[0].mxu0
        %v5831 = vadd.f32 0.0, %v5830
        %v5832 = vpop.f32.mrb[0].mxu0
        %5833 = vmatprep.mubr.bf16.mxu0 %v5684
        %5834 = vmatmul.mubr.bf16.gmra.mrb[0].mxu0 %v5528
        %v5835 = vpop.f32.mrb[0].mxu0
        %v5836 = vadd.f32 0.0, %v5835
        %v5837 = vpop.f32.mrb[0].mxu0
        %v5838 = vpop.f32.mrb[0].mxu0
        %v5839 = vadd.f32 0.0, %v5838
        %v5840 = vpop.f32.mrb[0].mxu0
        %5841 = vmatprep.mubr.bf16.mxu0 %v5687
        %5842 = vmatmul.mubr.bf16.gmra.mrb[0].mxu0 %v5544
        %v5843 = vpop.f32.mrb[0].mxu0
        %v5844 = vadd.f32 0.0, %v5843
        %v5845 = vpop.f32.mrb[0].mxu0
        %v5846 = vpop.f32.mrb[0].mxu0
        %v5847 = vadd.f32 0.0, %v5846
        %v5848 = vpop.f32.mrb[0].mxu0
        %5849 = vdwg.mxu0
        %v5850 = vadd.f32 %v5199, %v5724
        %v5851 = vadd.f32 %v5200, %v5727
        %v5852 = vadd.f32 %v5201, %v5732
        %v5853 = vadd.f32 %v5202, %v5735
        %v5854 = vadd.f32 %v5203, %v5740
        %v5855 = vadd.f32 %v5204, %v5743
        %v5856 = vadd.f32 %v5205, %v5748
        %v5857 = vadd.f32 %v5206, %v5751
        %v5858 = vadd.f32 %v5207, %v5756
        %v5859 = vadd.f32 %v5208, %v5759
        %v5860 = vadd.f32 %v5209, %v5764
        %v5861 = vadd.f32 %v5210, %v5767
        %v5862 = vadd.f32 %v5211, %v5772
        %v5863 = vadd.f32 %v5212, %v5775
        %v5864 = vadd.f32 %v5213, %v5780
        %v5865 = vadd.f32 %v5214, %v5783
        %v5866 = vadd.f32 %v5215, %v5788
        %v5867 = vadd.f32 %v5216, %v5791
        %v5868 = vadd.f32 %v5217, %v5796
        %v5869 = vadd.f32 %v5218, %v5799
        %v5870 = vadd.f32 %v5219, %v5804
        %v5871 = vadd.f32 %v5220, %v5807
        %v5872 = vadd.f32 %v5221, %v5812
        %v5873 = vadd.f32 %v5222, %v5815
        %v5874 = vadd.f32 %v5223, %v5820
        %v5875 = vadd.f32 %v5224, %v5823
        %v5876 = vadd.f32 %v5225, %v5828
        %v5877 = vadd.f32 %v5226, %v5831
        %v5878 = vadd.f32 %v5227, %v5836
        %v5879 = vadd.f32 %v5228, %v5839
        %v5880 = vadd.f32 %v5229, %v5844
        %v5881 = vadd.f32 %v5230, %v5847
        %v5882 = vld [vmem:[#allocation5] sm:$0xfe]
        %v5883 = vld [vmem:[#allocation5 + $0x8] sm:$0xfe]
        %v5884 = vld [vmem:[%s8 + $0xc0] sm:$0xf]
        %v5885 = vld [vmem:[%s8 + $0xc4] sm:$0xf]
        %v5886 = vld [vmem:[%s8 + $0xc8] sm:$0xf]
        %v5887 = vld [vmem:[%s8 + $0xcc] sm:$0xf]
        %v5888 = vld [vmem:[%s8 + $0xd0] sm:$0xf]
        %v5889 = vld [vmem:[%s8 + $0xd4] sm:$0xf]
        %v5890 = vld [vmem:[%s8 + $0xd8] sm:$0xf]
        %v5891 = vld [vmem:[%s8 + $0xdc] sm:$0xf]
        %v5892 = vld [vmem:[%s8 + $0xe0] sm:$0xf]
        %v5893 = vld [vmem:[%s8 + $0xe4] sm:$0xf]
        %v5894 = vld [vmem:[%s8 + $0xe8] sm:$0xf]
        %v5895 = vld [vmem:[%s8 + $0xec] sm:$0xf]
        %v5896 = vld [vmem:[%s8 + $0xf0] sm:$0xf]
        %v5897 = vld [vmem:[%s8 + $0xf4] sm:$0xf]
        %v5898 = vld [vmem:[%s8 + $0xf8] sm:$0xf]
        %v5899 = vld [vmem:[%s8 + $0xfc] sm:$0xf]
        %v5900 = vld [vmem:[%s8 + $0x100] sm:$0xf]
        %v5901 = vld [vmem:[%s8 + $0x104] sm:$0xf]
        %v5902 = vld [vmem:[%s8 + $0x108] sm:$0xf]
        %v5903 = vld [vmem:[%s8 + $0x10c] sm:$0xf]
        %v5904 = vld [vmem:[%s8 + $0x110] sm:$0xf]
        %v5905 = vld [vmem:[%s8 + $0x114] sm:$0xf]
        %v5906 = vld [vmem:[%s8 + $0x118] sm:$0xf]
        %v5907 = vld [vmem:[%s8 + $0x11c] sm:$0xf]
        %v5942 = vrot.slane %v5882, 1
        %v5943 = vrot.slane %v5233, 1
        %v5944 = vsel %vm3099, %v5942, %v5943
        %v5945 = vrot.slane %v5883, 1
        %v5946 = vrot.slane %v5234, 1
        %v5947 = vsel %vm3099, %v5945, %v5946
        %v5948 = vrot.slane %v5235, 1
        %v5949 = vsel %vm3099, %v5943, %v5948
        %v5950 = vrot.slane %v5236, 1
        %v5951 = vsel %vm3099, %v5946, %v5950
        %v5952 = vrot.slane %v5237, 1
        %v5953 = vsel %vm3099, %v5948, %v5952
        %v5954 = vrot.slane %v5238, 1
        %v5955 = vsel %vm3099, %v5950, %v5954
        %v5956 = vrot.slane %v5239, 1
        %v5957 = vsel %vm3099, %v5952, %v5956
        %v5958 = vrot.slane %v5240, 1
        %v5959 = vsel %vm3099, %v5954, %v5958
        %v5960 = vrot.slane %v5241, 1
        %v5961 = vsel %vm3099, %v5956, %v5960
        %v5962 = vrot.slane %v5242, 1
        %v5963 = vsel %vm3099, %v5958, %v5962
        %v5964 = vrot.slane %v5243, 1
        %v5965 = vsel %vm3099, %v5960, %v5964
        %v5966 = vrot.slane %v5244, 1
        %v5967 = vsel %vm3099, %v5962, %v5966
        %v5968 = vrot.slane %v5245, 1
        %v5969 = vsel %vm3099, %v5964, %v5968
        %v5970 = vrot.slane %v5246, 1
        %v5971 = vsel %vm3099, %v5966, %v5970
        %v5972 = vrot.slane %v5247, 1
        %v5973 = vsel %vm3099, %v5968, %v5972
        %v5974 = vrot.slane %v5248, 1
        %v5975 = vsel %vm3099, %v5970, %v5974
        %v5976 = vrot.slane %v5249, 1
        %v5977 = vsel %vm3099, %v5972, %v5976
        %v5978 = vrot.slane %v5250, 1
        %v5979 = vsel %vm3099, %v5974, %v5978
        %v5980 = vrot.slane %v5251, 1
        %v5981 = vsel %vm3099, %v5976, %v5980
        %v5982 = vrot.slane %v5252, 1
        %v5983 = vsel %vm3099, %v5978, %v5982
        %v5984 = vrot.slane %v5253, 1
        %v5985 = vsel %vm3099, %v5980, %v5984
        %v5986 = vrot.slane %v5254, 1
        %v5987 = vsel %vm3099, %v5982, %v5986
        %v5988 = vrot.slane %v5255, 1
        %v5989 = vsel %vm3099, %v5984, %v5988
        %v5990 = vrot.slane %v5256, 1
        %v5991 = vsel %vm3099, %v5986, %v5990
        %v5992 = vrot.slane %v5257, 1
        %v5993 = vsel %vm3099, %v5988, %v5992
        %v5994 = vrot.slane %v5258, 1
        %v5995 = vsel %vm3099, %v5990, %v5994
        %v5996 = vrot.slane %v5259, 1
        %v5997 = vsel %vm3099, %v5992, %v5996
        %v5998 = vrot.slane %v5260, 1
        %v5999 = vsel %vm3099, %v5994, %v5998
        %v6000 = vrot.slane %v5261, 1
        %v6001 = vsel %vm3099, %v5996, %v6000
        %v6002 = vrot.slane %v5262, 1
        %v6003 = vsel %vm3099, %v5998, %v6002
        %v6004 = vrot.slane %v5263, 1
        %v6005 = vsel %vm3099, %v6000, %v6004
        %v6006 = vrot.slane %v5264, 1
        %v6007 = vsel %vm3099, %v6002, %v6006
        %v6048 = vunpack.c.l.b16 %v5884
        %v6049 = vunpack.c.l.b16 %v5885
        %v6050 = vunpack.c.l.b16 %v5886
        %v6051 = vunpack.c.l.b16 %v5887
        %v6052 = vunpack.c.l.b16 %v5888
        %v6053 = vunpack.c.l.b16 %v5889
        %v6054 = vunpack.c.l.b16 %v5890
        %v6055 = vunpack.c.l.b16 %v5891
        %v6056 = vunpack.c.l.b16 %v5892
        %v6057 = vunpack.c.l.b16 %v5893
        %v6058 = vunpack.c.l.b16 %v5894
        %v6059 = vunpack.c.l.b16 %v5895
        %v6060 = vunpack.c.l.b16 %v5896
        %v6061 = vunpack.c.l.b16 %v5897
        %v6062 = vunpack.c.l.b16 %v5898
        %v6063 = vunpack.c.l.b16 %v5899
        %v6064 = vunpack.c.l.b16 %v5900
        %v6065 = vunpack.c.l.b16 %v5901
        %v6066 = vunpack.c.l.b16 %v5902
        %v6067 = vunpack.c.l.b16 %v5903
        %v6068 = vunpack.c.l.b16 %v5904
        %v6069 = vunpack.c.l.b16 %v5905
        %v6070 = vunpack.c.l.b16 %v5906
        %v6071 = vunpack.c.l.b16 %v5907
        %v6072 = vpack.c.b16 %v6049, %v6048
        %v6073 = vpack.c.b16 %v6051, %v6050
        %v6074 = vpack.c.b16 %v6053, %v6052
        %v6075 = vpack.c.b16 %v6055, %v6054
        %v6076 = vpack.c.b16 %v6057, %v6056
        %v6077 = vpack.c.b16 %v6059, %v6058
        %v6078 = vpack.c.b16 %v6061, %v6060
        %v6079 = vpack.c.b16 %v6063, %v6062
        %v6080 = vpack.c.b16 %v6065, %v6064
        %v6081 = vpack.c.b16 %v6067, %v6066
        %v6082 = vpack.c.b16 %v6069, %v6068
        %v6083 = vpack.c.b16 %v6071, %v6070
        %v6097 = vsel %vm459, %v5947, 0
        %v6100 = vsel %vm459, %v5951, 0
        %v6103 = vsel %vm459, %v5955, 0
        %v6106 = vsel %vm459, %v5959, 0
        %v6109 = vsel %vm459, %v5963, 0
        %v6112 = vsel %vm459, %v5967, 0
        %v6115 = vsel %vm459, %v5971, 0
        %v6118 = vsel %vm459, %v5975, 0
        %v6121 = vsel %vm459, %v5979, 0
        %v6124 = vsel %vm459, %v5983, 0
        %v6127 = vsel %vm459, %v5987, 0
        %v6130 = vsel %vm459, %v5991, 0
        %v6133 = vsel %vm459, %v5995, 0
        %v6136 = vsel %vm459, %v5999, 0
        %v6139 = vsel %vm459, %v6003, 0
        %v6142 = vsel %vm459, %v6007, 0
        %6144 = vmatprep.subr.bf16.mxu0 0
        %6145 = vmatpush1.bf16.msra.mxu0 %v6072
        %6146 = vmatprep.subr.bf16.mxu0 0
        %6147 = vmatpush1.bf16.msra.mxu0 %v6073
        %6148 = vmatprep.subr.bf16.mxu0 0
        %6149 = vmatpush1.bf16.msra.mxu0 %v6074
        %6150 = vmatprep.subr.bf16.mxu0 0
        %6151 = vmatpush1.bf16.msra.mxu0 %v6075
        %6152 = vmatprep.subr.bf16.mxu0 0
        %6153 = vmatpush1.bf16.msra.mxu0 %v6076
        %6154 = vmatprep.subr.bf16.mxu0 0
        %6155 = vmatpush1.bf16.msra.mxu0 %v6077
        %6156 = vmatprep.subr.bf16.mxu0 0
        %6157 = vmatpush1.bf16.msra.mxu0 %v6078
        %6158 = vmatprep.subr.bf16.mxu0 0
        %6159 = vmatpush1.bf16.msra.mxu0 %v6079
        %6160 = vmatprep.subr.bf16.mxu0 0
        %6161 = vmatpush1.bf16.msra.mxu0 %v6080
        %6162 = vmatprep.subr.bf16.mxu0 0
        %6163 = vmatpush1.bf16.msra.mxu0 %v6081
        %6164 = vmatprep.subr.bf16.mxu0 0
        %6165 = vmatpush1.bf16.msra.mxu0 %v6082
        %6166 = vmatprep.subr.bf16.mxu0 0
        %6167 = vmatpush1.bf16.msra.mxu0 %v6083
        %6168 = vmatprep.subr.bf16.mxu0 0
        %6169 = vmatpush1.bf16.msra.mxu0 0
        %6170 = vmatprep.subr.bf16.mxu0 0
        %6171 = vmatpush1.bf16.msra.mxu0 0
        %6172 = vmatprep.subr.bf16.mxu0 0
        %6173 = vmatpush1.bf16.msra.mxu0 0
        %6174 = vmatprep.subr.bf16.mxu0 0
        %6175 = vmatpush1.bf16.msra.mxu0 0
        %6176 = vmatprep.mubr.bf16.mxu0 %v6097
        %6177 = vmatmul.mubr.bf16.gmra.mrb[0].mxu0 %v5944
        %v6178 = vpop.f32.mrb[0].mxu0
        %v6179 = vadd.f32 0.0, %v6178
        %v6180 = vpop.f32.mrb[0].mxu0
        %v6181 = vpop.f32.mrb[0].mxu0
        %v6182 = vadd.f32 0.0, %v6181
        %v6183 = vpop.f32.mrb[0].mxu0
        %6184 = vmatprep.mubr.bf16.mxu0 %v6100
        %6185 = vmatmul.mubr.bf16.gmra.mrb[0].mxu0 %v5949
        %v6186 = vpop.f32.mrb[0].mxu0
        %v6187 = vadd.f32 0.0, %v6186
        %v6188 = vpop.f32.mrb[0].mxu0
        %v6189 = vpop.f32.mrb[0].mxu0
        %v6190 = vadd.f32 0.0, %v6189
        %v6191 = vpop.f32.mrb[0].mxu0
        %6192 = vmatprep.mubr.bf16.mxu0 %v6103
        %6193 = vmatmul.mubr.bf16.gmra.mrb[0].mxu0 %v5953
        %v6194 = vpop.f32.mrb[0].mxu0
        %v6195 = vadd.f32 0.0, %v6194
        %v6196 = vpop.f32.mrb[0].mxu0
        %v6197 = vpop.f32.mrb[0].mxu0
        %v6198 = vadd.f32 0.0, %v6197
        %v6199 = vpop.f32.mrb[0].mxu0
        %6200 = vmatprep.mubr.bf16.mxu0 %v6106
        %6201 = vmatmul.mubr.bf16.gmra.mrb[0].mxu0 %v5957
        %v6202 = vpop.f32.mrb[0].mxu0
        %v6203 = vadd.f32 0.0, %v6202
        %v6204 = vpop.f32.mrb[0].mxu0
        %v6205 = vpop.f32.mrb[0].mxu0
        %v6206 = vadd.f32 0.0, %v6205
        %v6207 = vpop.f32.mrb[0].mxu0
        %6208 = vmatprep.mubr.bf16.mxu0 %v6109
        %6209 = vmatmul.mubr.bf16.gmra.mrb[0].mxu0 %v5961
        %v6210 = vpop.f32.mrb[0].mxu0
        %v6211 = vadd.f32 0.0, %v6210
        %v6212 = vpop.f32.mrb[0].mxu0
        %v6213 = vpop.f32.mrb[0].mxu0
        %v6214 = vadd.f32 0.0, %v6213
        %v6215 = vpop.f32.mrb[0].mxu0
        %6216 = vmatprep.mubr.bf16.mxu0 %v6112
        %6217 = vmatmul.mubr.bf16.gmra.mrb[0].mxu0 %v5965
        %v6218 = vpop.f32.mrb[0].mxu0
        %v6219 = vadd.f32 0.0, %v6218
        %v6220 = vpop.f32.mrb[0].mxu0
        %v6221 = vpop.f32.mrb[0].mxu0
        %v6222 = vadd.f32 0.0, %v6221
        %v6223 = vpop.f32.mrb[0].mxu0
        %6224 = vmatprep.mubr.bf16.mxu0 %v6115
        %6225 = vmatmul.mubr.bf16.gmra.mrb[0].mxu0 %v5969
        %v6226 = vpop.f32.mrb[0].mxu0
        %v6227 = vadd.f32 0.0, %v6226
        %v6228 = vpop.f32.mrb[0].mxu0
        %v6229 = vpop.f32.mrb[0].mxu0
        %v6230 = vadd.f32 0.0, %v6229
        %v6231 = vpop.f32.mrb[0].mxu0
        %6232 = vmatprep.mubr.bf16.mxu0 %v6118
        %6233 = vmatmul.mubr.bf16.gmra.mrb[0].mxu0 %v5973
        %v6234 = vpop.f32.mrb[0].mxu0
        %v6235 = vadd.f32 0.0, %v6234
        %v6236 = vpop.f32.mrb[0].mxu0
        %v6237 = vpop.f32.mrb[0].mxu0
        %v6238 = vadd.f32 0.0, %v6237
        %v6239 = vpop.f32.mrb[0].mxu0
        %6240 = vmatprep.mubr.bf16.mxu0 %v6121
        %6241 = vmatmul.mubr.bf16.gmra.mrb[0].mxu0 %v5977
        %v6242 = vpop.f32.mrb[0].mxu0
        %v6243 = vadd.f32 0.0, %v6242
        %v6244 = vpop.f32.mrb[0].mxu0
        %v6245 = vpop.f32.mrb[0].mxu0
        %v6246 = vadd.f32 0.0, %v6245
        %v6247 = vpop.f32.mrb[0].mxu0
        %6248 = vmatprep.mubr.bf16.mxu0 %v6124
        %6249 = vmatmul.mubr.bf16.gmra.mrb[0].mxu0 %v5981
        %v6250 = vpop.f32.mrb[0].mxu0
        %v6251 = vadd.f32 0.0, %v6250
        %v6252 = vpop.f32.mrb[0].mxu0
        %v6253 = vpop.f32.mrb[0].mxu0
        %v6254 = vadd.f32 0.0, %v6253
        %v6255 = vpop.f32.mrb[0].mxu0
        %6256 = vmatprep.mubr.bf16.mxu0 %v6127
        %6257 = vmatmul.mubr.bf16.gmra.mrb[0].mxu0 %v5985
        %v6258 = vpop.f32.mrb[0].mxu0
        %v6259 = vadd.f32 0.0, %v6258
        %v6260 = vpop.f32.mrb[0].mxu0
        %v6261 = vpop.f32.mrb[0].mxu0
        %v6262 = vadd.f32 0.0, %v6261
        %v6263 = vpop.f32.mrb[0].mxu0
        %6264 = vmatprep.mubr.bf16.mxu0 %v6130
        %6265 = vmatmul.mubr.bf16.gmra.mrb[0].mxu0 %v5989
        %v6266 = vpop.f32.mrb[0].mxu0
        %v6267 = vadd.f32 0.0, %v6266
        %v6268 = vpop.f32.mrb[0].mxu0
        %v6269 = vpop.f32.mrb[0].mxu0
        %v6270 = vadd.f32 0.0, %v6269
        %v6271 = vpop.f32.mrb[0].mxu0
        %6272 = vmatprep.mubr.bf16.mxu0 %v6133
        %6273 = vmatmul.mubr.bf16.gmra.mrb[0].mxu0 %v5993
        %v6274 = vpop.f32.mrb[0].mxu0
        %v6275 = vadd.f32 0.0, %v6274
        %v6276 = vpop.f32.mrb[0].mxu0
        %v6277 = vpop.f32.mrb[0].mxu0
        %v6278 = vadd.f32 0.0, %v6277
        %v6279 = vpop.f32.mrb[0].mxu0
        %6280 = vmatprep.mubr.bf16.mxu0 %v6136
        %6281 = vmatmul.mubr.bf16.gmra.mrb[0].mxu0 %v5997
        %v6282 = vpop.f32.mrb[0].mxu0
        %v6283 = vadd.f32 0.0, %v6282
        %v6284 = vpop.f32.mrb[0].mxu0
        %v6285 = vpop.f32.mrb[0].mxu0
        %v6286 = vadd.f32 0.0, %v6285
        %v6287 = vpop.f32.mrb[0].mxu0
        %6288 = vmatprep.mubr.bf16.mxu0 %v6139
        %6289 = vmatmul.mubr.bf16.gmra.mrb[0].mxu0 %v6001
        %v6290 = vpop.f32.mrb[0].mxu0
        %v6291 = vadd.f32 0.0, %v6290
        %v6292 = vpop.f32.mrb[0].mxu0
        %v6293 = vpop.f32.mrb[0].mxu0
        %v6294 = vadd.f32 0.0, %v6293
        %v6295 = vpop.f32.mrb[0].mxu0
        %6296 = vmatprep.mubr.bf16.mxu0 %v6142
        %6297 = vmatmul.mubr.bf16.gmra.mrb[0].mxu0 %v6005
        %v6298 = vpop.f32.mrb[0].mxu0
        %v6299 = vadd.f32 0.0, %v6298
        %v6300 = vpop.f32.mrb[0].mxu0
        %v6301 = vpop.f32.mrb[0].mxu0
        %v6302 = vadd.f32 0.0, %v6301
        %v6303 = vpop.f32.mrb[0].mxu0
        %6304 = vdwg.mxu0
        %v6305 = vmul.f32 %v6179, %v1073
        %v6306 = vmul.f32 %v6182, %v1074
        %v6307 = vmul.f32 %v6187, %v1075
        %v6308 = vmul.f32 %v6190, %v1076
        %v6309 = vmul.f32 %v6195, %v1077
        %v6310 = vmul.f32 %v6198, %v1078
        %v6311 = vmul.f32 %v6203, %v1079
        %v6312 = vmul.f32 %v6206, %v1080
        %v6313 = vmul.f32 %v6211, %v1081
        %v6314 = vmul.f32 %v6214, %v1082
        %v6315 = vmul.f32 %v6219, %v1083
        %v6316 = vmul.f32 %v6222, %v1084
        %v6317 = vmul.f32 %v6227, %v1085
        %v6318 = vmul.f32 %v6230, %v1086
        %v6319 = vmul.f32 %v6235, %v1087
        %v6320 = vmul.f32 %v6238, %v1088
        %v6321 = vmul.f32 %v6243, %v1089
        %v6322 = vmul.f32 %v6246, %v1090
        %v6323 = vmul.f32 %v6251, %v1091
        %v6324 = vmul.f32 %v6254, %v1092
        %v6325 = vmul.f32 %v6259, %v1093
        %v6326 = vmul.f32 %v6262, %v1094
        %v6327 = vmul.f32 %v6267, %v1095
        %v6328 = vmul.f32 %v6270, %v1096
        %v6329 = vmul.f32 %v6275, %v1097
        %v6330 = vmul.f32 %v6278, %v1098
        %v6331 = vmul.f32 %v6283, %v1099
        %v6332 = vmul.f32 %v6286, %v1100
        %v6333 = vmul.f32 %v6291, %v1101
        %v6334 = vmul.f32 %v6294, %v1102
        %v6335 = vmul.f32 %v6299, %v1103
        %v6336 = vmul.f32 %v6302, %v1104
        %v6337 = vadd.f32 %v5850, %v6305
        %v6338 = vadd.f32 %v5851, %v6306
        %v6339 = vadd.f32 %v5852, %v6307
        %v6340 = vadd.f32 %v5853, %v6308
        %v6341 = vadd.f32 %v5854, %v6309
        %v6342 = vadd.f32 %v5855, %v6310
        %v6343 = vadd.f32 %v5856, %v6311
        %v6344 = vadd.f32 %v5857, %v6312
        %v6345 = vadd.f32 %v5858, %v6313
        %v6346 = vadd.f32 %v5859, %v6314
        %v6347 = vadd.f32 %v5860, %v6315
        %v6348 = vadd.f32 %v5861, %v6316
        %v6349 = vadd.f32 %v5862, %v6317
        %v6350 = vadd.f32 %v5863, %v6318
        %v6351 = vadd.f32 %v5864, %v6319
        %v6352 = vadd.f32 %v5865, %v6320
        %v6353 = vadd.f32 %v5866, %v6321
        %v6354 = vadd.f32 %v5867, %v6322
        %v6355 = vadd.f32 %v5868, %v6323
        %v6356 = vadd.f32 %v5869, %v6324
        %v6357 = vadd.f32 %v5870, %v6325
        %v6358 = vadd.f32 %v5871, %v6326
        %v6359 = vadd.f32 %v5872, %v6327
        %v6360 = vadd.f32 %v5873, %v6328
        %v6361 = vadd.f32 %v5874, %v6329
        %v6362 = vadd.f32 %v5875, %v6330
        %v6363 = vadd.f32 %v5876, %v6331
        %v6364 = vadd.f32 %v5877, %v6332
        %v6365 = vadd.f32 %v5878, %v6333
        %v6366 = vadd.f32 %v5879, %v6334
        %v6367 = vadd.f32 %v5880, %v6335
        %v6368 = vadd.f32 %v5881, %v6336
        %v6369 = vld [vmem:[%s9] sm:$0x1]
        %v6371 = vlaneseq
        %v6372 = vshrl.u32 %v6371, 7
        %v6373 = vsub.s32 0, %v6372
        %v6374 = vrot.slane %v6369, %v6373
        %v6376 = vadd.f32 %v6337, %v6374
        %v6377 = vadd.f32 %v6338, %v6374
        %v6378 = vadd.f32 %v6339, %v6374
        %v6379 = vadd.f32 %v6340, %v6374
        %v6380 = vadd.f32 %v6341, %v6374
        %v6381 = vadd.f32 %v6342, %v6374
        %v6382 = vadd.f32 %v6343, %v6374
        %v6383 = vadd.f32 %v6344, %v6374
        %v6384 = vadd.f32 %v6345, %v6374
        %v6385 = vadd.f32 %v6346, %v6374
        %v6386 = vadd.f32 %v6347, %v6374
        %v6387 = vadd.f32 %v6348, %v6374
        %v6388 = vadd.f32 %v6349, %v6374
        %v6389 = vadd.f32 %v6350, %v6374
        %v6390 = vadd.f32 %v6351, %v6374
        %v6391 = vadd.f32 %v6352, %v6374
        %v6392 = vadd.f32 %v6353, %v6374
        %v6393 = vadd.f32 %v6354, %v6374
        %v6394 = vadd.f32 %v6355, %v6374
        %v6395 = vadd.f32 %v6356, %v6374
        %v6396 = vadd.f32 %v6357, %v6374
        %v6397 = vadd.f32 %v6358, %v6374
        %v6398 = vadd.f32 %v6359, %v6374
        %v6399 = vadd.f32 %v6360, %v6374
        %v6400 = vadd.f32 %v6361, %v6374
        %v6401 = vadd.f32 %v6362, %v6374
        %v6402 = vadd.f32 %v6363, %v6374
        %v6403 = vadd.f32 %v6364, %v6374
        %v6404 = vadd.f32 %v6365, %v6374
        %v6405 = vadd.f32 %v6366, %v6374
        %v6406 = vadd.f32 %v6367, %v6374
        %v6407 = vadd.f32 %v6368, %v6374
        %v6408 = vpack.c.bf16 %v465, %v464
        %v6409 = vpack.c.bf16 %v467, %v466
        %v6410 = vpack.c.bf16 %v469, %v468
        %v6411 = vpack.c.bf16 %v471, %v470
        %v6412 = vpack.c.bf16 %v473, %v472
        %v6413 = vpack.c.bf16 %v475, %v474
        %v6414 = vpack.c.bf16 %v477, %v476
        %v6415 = vpack.c.bf16 %v479, %v478
        %v6416 = vpack.c.bf16 %v481, %v480
        %v6417 = vpack.c.bf16 %v483, %v482
        %v6418 = vpack.c.bf16 %v485, %v484
        %v6419 = vpack.c.bf16 %v487, %v486
        %v6420 = vpack.c.bf16 %v489, %v488
        %v6421 = vpack.c.bf16 %v491, %v490
        %v6422 = vpack.c.bf16 %v493, %v492
        %v6423 = vpack.c.bf16 %v495, %v494
        %v6424 = vld [vmem:[%s11] sm:$0xf]
        %v6425 = vld [vmem:[%s11 + $0x4] sm:$0xf]
        %v6426 = vld [vmem:[%s11 + $0x8] sm:$0xf]
        %v6427 = vld [vmem:[%s11 + $0xc] sm:$0xf]
        %v6428 = vld [vmem:[%s12] sm:$0x1]
        %v6430 = vlaneseq
        %v6431 = vshrl.u32 %v6430, 7
        %v6432 = vsub.s32 0, %v6431
        %v6433 = vrot.slane %v6428, %v6432
        %v6439 = vunpack.c.l.b16 %v6424
        %v6440 = vunpack.c.l.b16 %v6425
        %v6441 = vunpack.c.l.b16 %v6426
        %v6442 = vunpack.c.l.b16 %v6427
        %v6443 = vpack.c.b16 %v6440, %v6439
        %v6444 = vpack.c.b16 %v6442, %v6441
        %v6448 = vsel %vm454, %v6408, 0
        %v6451 = vsel %vm454, %v6409, 0
        %v6454 = vsel %vm454, %v6410, 0
        %v6457 = vsel %vm454, %v6411, 0
        %v6460 = vsel %vm454, %v6412, 0
        %v6463 = vsel %vm454, %v6413, 0
        %v6466 = vsel %vm454, %v6414, 0
        %v6469 = vsel %vm454, %v6415, 0
        %v6472 = vsel %vm454, %v6416, 0
        %v6475 = vsel %vm454, %v6417, 0
        %v6478 = vsel %vm454, %v6418, 0
        %v6481 = vsel %vm454, %v6419, 0
        %v6484 = vsel %vm454, %v6420, 0
        %v6487 = vsel %vm454, %v6421, 0
        %v6490 = vsel %vm454, %v6422, 0
        %v6493 = vsel %vm454, %v6423, 0
        %6495 = vmatprep.subr.bf16.mxu0 0
        %6496 = vmatpush1.bf16.msra.mxu0 %v6443
        %6497 = vmatprep.subr.bf16.mxu0 0
        %6498 = vmatpush1.bf16.msra.mxu0 %v6444
        %6499 = vmatprep.subr.bf16.mxu0 0
        %6500 = vmatpush1.bf16.msra.mxu0 0
        %6501 = vmatprep.subr.bf16.mxu0 0
        %6502 = vmatpush1.bf16.msra.mxu0 0
        %6503 = vmatprep.subr.bf16.mxu0 0
        %6504 = vmatpush1.bf16.msra.mxu0 0
        %6505 = vmatprep.subr.bf16.mxu0 0
        %6506 = vmatpush1.bf16.msra.mxu0 0
        %6507 = vmatprep.subr.bf16.mxu0 0
        %6508 = vmatpush1.bf16.msra.mxu0 0
        %6509 = vmatprep.subr.bf16.mxu0 0
        %6510 = vmatpush1.bf16.msra.mxu0 0
        %6511 = vmatprep.subr.bf16.mxu0 0
        %6512 = vmatpush1.bf16.msra.mxu0 0
        %6513 = vmatprep.subr.bf16.mxu0 0
        %6514 = vmatpush1.bf16.msra.mxu0 0
        %6515 = vmatprep.subr.bf16.mxu0 0
        %6516 = vmatpush1.bf16.msra.mxu0 0
        %6517 = vmatprep.subr.bf16.mxu0 0
        %6518 = vmatpush1.bf16.msra.mxu0 0
        %6519 = vmatprep.subr.bf16.mxu0 0
        %6520 = vmatpush1.bf16.msra.mxu0 0
        %6521 = vmatprep.subr.bf16.mxu0 0
        %6522 = vmatpush1.bf16.msra.mxu0 0
        %6523 = vmatprep.subr.bf16.mxu0 0
        %6524 = vmatpush1.bf16.msra.mxu0 0
        %6525 = vmatprep.subr.bf16.mxu0 0
        %6526 = vmatpush1.bf16.msra.mxu0 0
        %6527 = vmatprep.mubr.bf16.mxu0 0
        %6528 = vmatmul.mubr.bf16.gmra.mrb[0].mxu0 %v6448
        %v6529 = vpop.f32.mrb[0].mxu0
        %v6530 = vadd.f32 %v6433, %v6529
        %v6531 = vpop.f32.mrb[0].mxu0
        %v6532 = vpop.f32.mrb[0].mxu0
        %v6533 = vadd.f32 %v6433, %v6532
        %v6534 = vpop.f32.mrb[0].mxu0
        %6535 = vmatprep.mubr.bf16.mxu0 0
        %6536 = vmatmul.mubr.bf16.gmra.mrb[0].mxu0 %v6451
        %v6537 = vpop.f32.mrb[0].mxu0
        %v6538 = vadd.f32 %v6433, %v6537
        %v6539 = vpop.f32.mrb[0].mxu0
        %v6540 = vpop.f32.mrb[0].mxu0
        %v6541 = vadd.f32 %v6433, %v6540
        %v6542 = vpop.f32.mrb[0].mxu0
        %6543 = vmatprep.mubr.bf16.mxu0 0
        %6544 = vmatmul.mubr.bf16.gmra.mrb[0].mxu0 %v6454
        %v6545 = vpop.f32.mrb[0].mxu0
        %v6546 = vadd.f32 %v6433, %v6545
        %v6547 = vpop.f32.mrb[0].mxu0
        %v6548 = vpop.f32.mrb[0].mxu0
        %v6549 = vadd.f32 %v6433, %v6548
        %v6550 = vpop.f32.mrb[0].mxu0
        %6551 = vmatprep.mubr.bf16.mxu0 0
        %6552 = vmatmul.mubr.bf16.gmra.mrb[0].mxu0 %v6457
        %v6553 = vpop.f32.mrb[0].mxu0
        %v6554 = vadd.f32 %v6433, %v6553
        %v6555 = vpop.f32.mrb[0].mxu0
        %v6556 = vpop.f32.mrb[0].mxu0
        %v6557 = vadd.f32 %v6433, %v6556
        %v6558 = vpop.f32.mrb[0].mxu0
        %6559 = vmatprep.mubr.bf16.mxu0 0
        %6560 = vmatmul.mubr.bf16.gmra.mrb[0].mxu0 %v6460
        %v6561 = vpop.f32.mrb[0].mxu0
        %v6562 = vadd.f32 %v6433, %v6561
        %v6563 = vpop.f32.mrb[0].mxu0
        %v6564 = vpop.f32.mrb[0].mxu0
        %v6565 = vadd.f32 %v6433, %v6564
        %v6566 = vpop.f32.mrb[0].mxu0
        %6567 = vmatprep.mubr.bf16.mxu0 0
        %6568 = vmatmul.mubr.bf16.gmra.mrb[0].mxu0 %v6463
        %v6569 = vpop.f32.mrb[0].mxu0
        %v6570 = vadd.f32 %v6433, %v6569
        %v6571 = vpop.f32.mrb[0].mxu0
        %v6572 = vpop.f32.mrb[0].mxu0
        %v6573 = vadd.f32 %v6433, %v6572
        %v6574 = vpop.f32.mrb[0].mxu0
        %6575 = vmatprep.mubr.bf16.mxu0 0
        %6576 = vmatmul.mubr.bf16.gmra.mrb[0].mxu0 %v6466
        %v6577 = vpop.f32.mrb[0].mxu0
        %v6578 = vadd.f32 %v6433, %v6577
        %v6579 = vpop.f32.mrb[0].mxu0
        %v6580 = vpop.f32.mrb[0].mxu0
        %v6581 = vadd.f32 %v6433, %v6580
        %v6582 = vpop.f32.mrb[0].mxu0
        %6583 = vmatprep.mubr.bf16.mxu0 0
        %6584 = vmatmul.mubr.bf16.gmra.mrb[0].mxu0 %v6469
        %v6585 = vpop.f32.mrb[0].mxu0
        %v6586 = vadd.f32 %v6433, %v6585
        %v6587 = vpop.f32.mrb[0].mxu0
        %v6588 = vpop.f32.mrb[0].mxu0
        %v6589 = vadd.f32 %v6433, %v6588
        %v6590 = vpop.f32.mrb[0].mxu0
        %6591 = vmatprep.mubr.bf16.mxu0 0
        %6592 = vmatmul.mubr.bf16.gmra.mrb[0].mxu0 %v6472
        %v6593 = vpop.f32.mrb[0].mxu0
        %v6594 = vadd.f32 %v6433, %v6593
        %v6595 = vpop.f32.mrb[0].mxu0
        %v6596 = vpop.f32.mrb[0].mxu0
        %v6597 = vadd.f32 %v6433, %v6596
        %v6598 = vpop.f32.mrb[0].mxu0
        %6599 = vmatprep.mubr.bf16.mxu0 0
        %6600 = vmatmul.mubr.bf16.gmra.mrb[0].mxu0 %v6475
        %v6601 = vpop.f32.mrb[0].mxu0
        %v6602 = vadd.f32 %v6433, %v6601
        %v6603 = vpop.f32.mrb[0].mxu0
        %v6604 = vpop.f32.mrb[0].mxu0
        %v6605 = vadd.f32 %v6433, %v6604
        %v6606 = vpop.f32.mrb[0].mxu0
        %6607 = vmatprep.mubr.bf16.mxu0 0
        %6608 = vmatmul.mubr.bf16.gmra.mrb[0].mxu0 %v6478
        %v6609 = vpop.f32.mrb[0].mxu0
        %v6610 = vadd.f32 %v6433, %v6609
        %v6611 = vpop.f32.mrb[0].mxu0
        %v6612 = vpop.f32.mrb[0].mxu0
        %v6613 = vadd.f32 %v6433, %v6612
        %v6614 = vpop.f32.mrb[0].mxu0
        %6615 = vmatprep.mubr.bf16.mxu0 0
        %6616 = vmatmul.mubr.bf16.gmra.mrb[0].mxu0 %v6481
        %v6617 = vpop.f32.mrb[0].mxu0
        %v6618 = vadd.f32 %v6433, %v6617
        %v6619 = vpop.f32.mrb[0].mxu0
        %v6620 = vpop.f32.mrb[0].mxu0
        %v6621 = vadd.f32 %v6433, %v6620
        %v6622 = vpop.f32.mrb[0].mxu0
        %6623 = vmatprep.mubr.bf16.mxu0 0
        %6624 = vmatmul.mubr.bf16.gmra.mrb[0].mxu0 %v6484
        %v6625 = vpop.f32.mrb[0].mxu0
        %v6626 = vadd.f32 %v6433, %v6625
        %v6627 = vpop.f32.mrb[0].mxu0
        %v6628 = vpop.f32.mrb[0].mxu0
        %v6629 = vadd.f32 %v6433, %v6628
        %v6630 = vpop.f32.mrb[0].mxu0
        %6631 = vmatprep.mubr.bf16.mxu0 0
        %6632 = vmatmul.mubr.bf16.gmra.mrb[0].mxu0 %v6487
        %v6633 = vpop.f32.mrb[0].mxu0
        %v6634 = vadd.f32 %v6433, %v6633
        %v6635 = vpop.f32.mrb[0].mxu0
        %v6636 = vpop.f32.mrb[0].mxu0
        %v6637 = vadd.f32 %v6433, %v6636
        %v6638 = vpop.f32.mrb[0].mxu0
        %6639 = vmatprep.mubr.bf16.mxu0 0
        %6640 = vmatmul.mubr.bf16.gmra.mrb[0].mxu0 %v6490
        %v6641 = vpop.f32.mrb[0].mxu0
        %v6642 = vadd.f32 %v6433, %v6641
        %v6643 = vpop.f32.mrb[0].mxu0
        %v6644 = vpop.f32.mrb[0].mxu0
        %v6645 = vadd.f32 %v6433, %v6644
        %v6646 = vpop.f32.mrb[0].mxu0
        %6647 = vmatprep.mubr.bf16.mxu0 0
        %6648 = vmatmul.mubr.bf16.gmra.mrb[0].mxu0 %v6493
        %v6649 = vpop.f32.mrb[0].mxu0
        %v6650 = vadd.f32 %v6433, %v6649
        %v6651 = vpop.f32.mrb[0].mxu0
        %v6652 = vpop.f32.mrb[0].mxu0
        %v6653 = vadd.f32 %v6433, %v6652
        %v6654 = vpop.f32.mrb[0].mxu0
        %6655 = vdwg.mxu0
        %v6656 = vadd.f32 %v6530, %v6376
        %v6657 = vadd.f32 %v6533, %v6377
        %v6658 = vadd.f32 %v6538, %v6378
        %v6659 = vadd.f32 %v6541, %v6379
        %v6660 = vadd.f32 %v6546, %v6380
        %v6661 = vadd.f32 %v6549, %v6381
        %v6662 = vadd.f32 %v6554, %v6382
        %v6663 = vadd.f32 %v6557, %v6383
        %v6664 = vadd.f32 %v6562, %v6384
        %v6665 = vadd.f32 %v6565, %v6385
        %v6666 = vadd.f32 %v6570, %v6386
        %v6667 = vadd.f32 %v6573, %v6387
        %v6668 = vadd.f32 %v6578, %v6388
        %v6669 = vadd.f32 %v6581, %v6389
        %v6670 = vadd.f32 %v6586, %v6390
        %v6671 = vadd.f32 %v6589, %v6391
        %v6672 = vadd.f32 %v6594, %v6392
        %v6673 = vadd.f32 %v6597, %v6393
        %v6674 = vadd.f32 %v6602, %v6394
        %v6675 = vadd.f32 %v6605, %v6395
        %v6676 = vadd.f32 %v6610, %v6396
        %v6677 = vadd.f32 %v6613, %v6397
        %v6678 = vadd.f32 %v6618, %v6398
        %v6679 = vadd.f32 %v6621, %v6399
        %v6680 = vadd.f32 %v6626, %v6400
        %v6681 = vadd.f32 %v6629, %v6401
        %v6682 = vadd.f32 %v6634, %v6402
        %v6683 = vadd.f32 %v6637, %v6403
        %v6684 = vadd.f32 %v6642, %v6404
        %v6685 = vadd.f32 %v6645, %v6405
        %v6686 = vadd.f32 %v6650, %v6406
        %v6687 = vadd.f32 %v6653, %v6407
        %6688 = vst.msk [vmem:[%s444] sm:$0xff] %vm459, %v6656
        %6689 = vst.msk [vmem:[%s444 + $0x8] sm:$0xff] %vm459, %v6657
        %6690 = vst.msk [vmem:[%s444 + $0x10] sm:$0xff] %vm459, %v6658
        %6691 = vst.msk [vmem:[%s444 + $0x18] sm:$0xff] %vm459, %v6659
        %6692 = vst.msk [vmem:[%s444 + $0x20] sm:$0xff] %vm459, %v6660
        %6693 = vst.msk [vmem:[%s444 + $0x28] sm:$0xff] %vm459, %v6661
        %6694 = vst.msk [vmem:[%s444 + $0x30] sm:$0xff] %vm459, %v6662
        %6695 = vst.msk [vmem:[%s444 + $0x38] sm:$0xff] %vm459, %v6663
        %6696 = vst.msk [vmem:[%s444 + $0x40] sm:$0xff] %vm459, %v6664
        %6697 = vst.msk [vmem:[%s444 + $0x48] sm:$0xff] %vm459, %v6665
        %6698 = vst.msk [vmem:[%s444 + $0x50] sm:$0xff] %vm459, %v6666
        %6699 = vst.msk [vmem:[%s444 + $0x58] sm:$0xff] %vm459, %v6667
        %6700 = vst.msk [vmem:[%s444 + $0x60] sm:$0xff] %vm459, %v6668
        %6701 = vst.msk [vmem:[%s444 + $0x68] sm:$0xff] %vm459, %v6669
        %6702 = vst.msk [vmem:[%s444 + $0x70] sm:$0xff] %vm459, %v6670
        %6703 = vst.msk [vmem:[%s444 + $0x78] sm:$0xff] %vm459, %v6671
        %6704 = vst.msk [vmem:[%s444 + $0x80] sm:$0xff] %vm459, %v6672
        %6705 = vst.msk [vmem:[%s444 + $0x88] sm:$0xff] %vm459, %v6673
        %6706 = vst.msk [vmem:[%s444 + $0x90] sm:$0xff] %vm459, %v6674
        %6707 = vst.msk [vmem:[%s444 + $0x98] sm:$0xff] %vm459, %v6675
        %6708 = vst.msk [vmem:[%s444 + $0xa0] sm:$0xff] %vm459, %v6676
        %6709 = vst.msk [vmem:[%s444 + $0xa8] sm:$0xff] %vm459, %v6677
        %6710 = vst.msk [vmem:[%s444 + $0xb0] sm:$0xff] %vm459, %v6678
        %6711 = vst.msk [vmem:[%s444 + $0xb8] sm:$0xff] %vm459, %v6679
        %6712 = vst.msk [vmem:[%s444 + $0xc0] sm:$0xff] %vm459, %v6680
        %6713 = vst.msk [vmem:[%s444 + $0xc8] sm:$0xff] %vm459, %v6681
        %6714 = vst.msk [vmem:[%s444 + $0xd0] sm:$0xff] %vm459, %v6682
        %6715 = vst.msk [vmem:[%s444 + $0xd8] sm:$0xff] %vm459, %v6683
        %6716 = vst.msk [vmem:[%s444 + $0xe0] sm:$0xff] %vm459, %v6684
        %6717 = vst.msk [vmem:[%s444 + $0xe8] sm:$0xff] %vm459, %v6685
        %6718 = vst.msk [vmem:[%s444 + $0xf0] sm:$0xff] %vm459, %v6686
        %6719 = vst.msk [vmem:[%s444 + $0xf8] sm:$0xff] %vm459, %v6687
        %s6720 = sand.u32 %s318, 1
        %s6721 = scalar_lea.sflag [#allocation7], %s6720
        %s6722 = sand.u32 %s318, 1
        %s6723 = smul.addr %s6722, 256
        %s6724 = scalar_lea.vmem [#allocation6], %s6723
        // Predicated region
        $region73: #{res_block_forward.1} parent=71 // pred_check
          %p6725 = pneg %p328
        $region74: #{res_block_forward.1} parent=71 // pred_check_branch
          %6727 = sbr.rel (%p6725) target = $region76
        $region75: #{res_block_forward.1} parent=71 // pred_region
          %s6729 = ssub.s32 4096, 4096
          %6730 = vsyncadd %s6721, %s6729
          %s6731 = smul.addr %s27, 32
          %s6732 = smul.addr %s6731, 128
          %s6733 = scalar_lea.hbm %s13, %s6732
          %s6734 = sshll.u32 %s6724, 4
          %s6735 = int_to_ptr.vmem [resolvable:$true] %s6734
          %6740 = dma.vmem_to_hbm [thread:$0]  %s6735, 4096, %s6733, %s6721, 128, 128, 8
        $region76: #{res_block_forward.1} parent=71 // pred_fallthru
          _
      $region72: #{res_block_forward.1} parent=5 // pred_fallthru
        _
      %p6741 = scmp.le.s32.totalorder 2, %s22
      // Predicated region
      $region77: #{res_block_forward.1} parent=5 // pred_check
        %p6742 = pneg %p6741
      $region78: #{res_block_forward.1} parent=5 // pred_check_branch
        %6744 = sbr.rel (%p6742) target = $region80
      $region79: #{res_block_forward.1} parent=5 // pred_region
        %s6745 = ssub.s32 %s22, 2
        // Predicated region
        $region81: #{res_block_forward.1} parent=79 // pred_check
          %p6746 = pneg %p334
        $region82: #{res_block_forward.1} parent=79 // pred_check_branch
          %6748 = sbr.rel (%p6746) target = $region84
        $region83: #{res_block_forward.1} parent=79 // pred_region
          %s6749 = sand.u32 %s319, 1
          %s6750 = scalar_lea.sflag [#allocation7], %s6749
          %s6751 = sand.u32 %s319, 1
          %s6752 = smul.addr %s6751, 256
          %s6753 = scalar_lea.vmem [#allocation6], %s6752
          %6754 = dma.done %s6750, 4096
        $region84: #{res_block_forward.1} parent=79 // pred_fallthru
          _
      $region80: #{res_block_forward.1} parent=5 // pred_fallthru
        _
    $region6: #{res_block_forward.1} parent=1 // loop_footer
      %s26 = sadd.s32 1, %s22
    $region7: #{res_block_forward.1} parent=1 // loop_footer_branch
      %21 = sbr.rel target = $region3
    $region8: #{res_block_forward.1} parent=1 // loop_exit
      _
    %6755 = vsyncpa [#allocation7], 1
    %s6756 = scalar_lea.sflag [#allocation7], 1
    %6757 = vsyncpa %s6756, 1

</llo_original>
